<compile_context>
chip_gen: v5e
topology: v5e:2x2
jax: 0.10.0
libtpu: 0.0.40
codegen_flags: <defaults>
</compile_context>

<pallas_src>
import functools

import jax
import jax.numpy as jnp
from jax.experimental import pallas as pl
from jax.experimental.pallas import tpu as pltpu

EPS = 1e-5  # nn.BatchNorm2d default eps


# ---------------------------------------------------------------------------
# Kernels
# ---------------------------------------------------------------------------
def _conv3x3_kernel(shift_ref, xprev_ref, xcur_ref, xnext_ref, w_ref,
                    y_ref, stats_ref, *, th, bn_relu_prologue):
    """One (batch, row-tile) step of a 3x3 SAME conv with fused BN+ReLU prologue.

    Blocks:
      shift : (1, 1, Cin) f32  -- -mean of the previous layer (prologue); unused for layer 1
      xprev : (1, 1,  W, Cin)  -- image row r0-1 (clamped; masked at the top edge)
      xcur  : (1, th, W, Cin)  -- image rows r0 .. r0+th-1
      xnext : (1, 1,  W, Cin)  -- image row r0+th (clamped; masked at the bottom edge)
      w     : (3, 3*Cin, Cout) bf16, dh-major / dw-stacked along the contraction dim
    Outputs:
      y     : (1, th, W, Cout) bf16  pre-BN conv output tile
      stats : (1, 1, 2, Cout)  f32   per-tile [sum, sum of squares] over th*W pixels
    """
    i = pl.program_id(1)
    nrt = pl.num_programs(1)
    _, _, W, cout = y_ref.shape
    cin = xcur_ref.shape[-1]

    def prologue(v):
        v = v.astype(jnp.float32)
        if bn_relu_prologue:
            # h = relu(y_prev - mean_prev); rstd_prev is folded into the weights.
            v = jnp.maximum(v + shift_ref[...], 0.0)
        return v

    prev = prologue(xprev_ref[0])                              # (1, W, Cin)
    cur = prologue(xcur_ref[0])                                # (th, W, Cin)
    nxt = prologue(xnext_ref[0])                               # (1, W, Cin)

    # Conv zero-padding along H: only the two halo rows ever need masking.
    prev = jnp.where(i > 0, prev, jnp.zeros_like(prev))
    nxt = jnp.where(i < nrt - 1, nxt, jnp.zeros_like(nxt))

    hwin = jnp.concatenate([prev, cur, nxt], axis=0)           # (th+2, W, Cin) f32

    # W-neighbour taps via XLU roll + boundary masks (no unaligned-slice relayouts).
    widx = jax.lax.broadcasted_iota(jnp.int32, (1, W, 1), 1)
    xm1 = jnp.where(widx > 0, pltpu.roll(hwin, shift=1, axis=1), 0.0)          # col w-1
    xp1 = jnp.where(widx < W - 1, pltpu.roll(hwin, shift=W - 1, axis=1), 0.0)  # col w+1

    # K-stack the three dw taps along the lane axis -> per-dh patches of (th*W, 3*Cin).
    big = jnp.concatenate([xm1.astype(jnp.bfloat16),
                           hwin.astype(jnp.bfloat16),
                           xp1.astype(jnp.bfloat16)], axis=-1)  # (th+2, W, 3*Cin)

    # 3 accumulating MXU dots (f32 accumulator), one per dh.
    acc = jnp.zeros((th * W, cout), jnp.float32)
    for dh in range(3):
        patch = big[dh:dh + th].reshape(th * W, 3 * cin)
        acc = acc + jnp.dot(patch, w_ref[dh], preferred_element_type=jnp.float32)

    y_ref[0] = acc.reshape(th, W, cout).astype(y_ref.dtype)

    s1 = jnp.sum(acc, axis=0)
    s2 = jnp.sum(acc * acc, axis=0)
    stats_ref[0, 0] = jnp.concatenate([s1[None, :], s2[None, :]], axis=0)


def _bn_relu_pool_kernel(shift_ref, scale_ref, y_ref, o_ref):
    """Fused BN(training stats) + ReLU + 2x2 average pool epilogue.

    y block: (1, tho, 2, W/2, 2C) bf16 (free row-major view of y2; trailing dims dense)
    o block: (1, tho, W/2, C) f32
    shift = -mean2 tiled to 2C; scale = 0.25 * rstd2 (C).
    """
    y = y_ref[0].astype(jnp.float32)                      # (tho, 2, W2, 2C)
    h = jnp.maximum(y + shift_ref[...], 0.0)              # relu(y - mean2)
    s = h[:, 0] + h[:, 1]                                 # H-pair (leading-dim index, free)
    c = o_ref.shape[-1]
    o_ref[0] = (s[..., :c] + s[..., c:]) * scale_ref[...]  # W-pair + single 0.25*rstd2 mul


# ---------------------------------------------------------------------------
# pallas_call wrappers
# ---------------------------------------------------------------------------
def _vmem_capacity_bytes():
    try:
        info = pltpu.get_tpu_info()
        cap = getattr(info, "vmem_capacity_bytes", None)
        if cap:
            return int(cap)
    except Exception:
        pass
    return 64 * 1024 * 1024  # conservative default (v7x per-TC size)


def _largest_divisor_at_most(n, cap):
    cap = max(1, min(cap, n))
    for d in range(cap, 0, -1):
        if n % d == 0:
            return d
    return 1


def _pick_row_tile(H, W, cin, cout, N, vmem_cap):
    # ~1024-2048 matmul rows per tile, bounded by a generation-aware VMEM budget.
    row_target = max(1, 2048 // max(W, 1))
    tile_budget = max(2 << 20, min(24 << 20, vmem_cap // 5))   # ~24 MiB v5e/v6e, ~12 MiB v7x
    bytes_per_row = W * (22 * cin + 8 * cout)                  # f32 window+rolls, bf16 K-stack, y/acc
    row_vmem = max(1, tile_budget // max(bytes_per_row, 1))
    cap = min(row_target, row_vmem, H)
    if N == 1 and H >= 2:
        cap = min(cap, H // 2)   # keep >=2 parallel tiles so both v7x TensorCores get work
    return _largest_divisor_at_most(H, cap)


def _pick_pool_tile(H2, W, C, N, vmem_cap):
    budget = max(1 << 20, min(8 << 20, vmem_cap // 16))
    bytes_per_out_row = 2 * W * C * 2 * 2 + W * C * 4 + (W // 2) * C * 4 * 2
    rows = max(1, budget // max(bytes_per_out_row, 1))
    tho = _largest_divisor_at_most(H2, min(rows, H2))
    if N == 1 and H2 >= 2:
        tho = _largest_divisor_at_most(H2, max(1, min(tho, H2 // 2)))
    return tho


def _conv_pass(xin, w_taps, shift, *, th, bn_relu_prologue, vmem_cap):
    N, H, W, cin = xin.shape
    cout = w_taps.shape[-1]
    nrt = H // th

    kern = functools.partial(_conv3x3_kernel, th=th, bn_relu_prologue=bn_relu_prologue)

    flops = 2 * N * H * W * 9 * cin * cout
    bytes_accessed = (xin.size * 2 + N * H * W * cout * 2
                      + w_taps.size * 2 + N * nrt * 2 * cout * 4)
    vmem_limit = max(16 << 20, min(int(vmem_cap * 0.5), 100 << 20))

    y, stats = pl.pallas_call(
        kern,
        out_shape=(jax.ShapeDtypeStruct((N, H, W, cout), jnp.bfloat16),
                   jax.ShapeDtypeStruct((N, nrt, 2, cout), jnp.float32)),
        grid=(N, nrt),
        in_specs=[
            pl.BlockSpec((1, 1, cin), lambda b, i: (0, 0, 0)),              # -mean_prev (resident)
            pl.BlockSpec((1, 1, W, cin),                                    # halo row above
                         lambda b, i: (b, jnp.maximum(i * th - 1, 0), 0, 0)),
            pl.BlockSpec((1, th, W, cin), lambda b, i: (b, i, 0, 0)),       # body rows
            pl.BlockSpec((1, 1, W, cin),                                    # halo row below
                         lambda b, i: (b, jnp.minimum((i + 1) * th, H - 1), 0, 0)),
            pl.BlockSpec((3, 3 * cin, cout), lambda b, i: (0, 0, 0)),       # weights (resident)
        ],
        out_specs=(
            pl.BlockSpec((1, th, W, cout), lambda b, i: (b, i, 0, 0)),
            pl.BlockSpec((1, 1, 2, cout), lambda b, i: (b, i, 0, 0)),
        ),
        compiler_params=pltpu.CompilerParams(
            dimension_semantics=("parallel", "parallel"),
            vmem_limit_bytes=vmem_limit),
        cost_estimate=pl.CostEstimate(flops=flops, transcendentals=0,
                                      bytes_accessed=bytes_accessed),
    )(shift, xin, xin, xin, w_taps)
    return y, stats


def _bn_relu_pool(y, mean, rstd, *, vmem_cap):
    N, H, W, C = y.shape
    H2, W2 = H // 2, W // 2
    # Free row-major reshape: H -> (H2, 2) and trailing (W, C) -> (W2, 2C).
    # The DMA'd block keeps lane/sublane-dense trailing dims (W2, 2C).
    yv = y.reshape(N, H2, 2, W2, 2 * C)
    shift2 = jnp.concatenate([-mean, -mean], axis=0).reshape(1, 1, 2 * C)
    scale = (0.25 * rstd).reshape(1, 1, C)
    tho = _pick_pool_tile(H2, W, C, N, vmem_cap)

    return pl.pallas_call(
        _bn_relu_pool_kernel,
        out_shape=jax.ShapeDtypeStruct((N, H2, W2, C), jnp.float32),
        grid=(N, H2 // tho),
        in_specs=[
            pl.BlockSpec((1, 1, 2 * C), lambda b, i: (0, 0, 0)),
            pl.BlockSpec((1, 1, C), lambda b, i: (0, 0, 0)),
            pl.BlockSpec((1, tho, 2, W2, 2 * C), lambda b, i: (b, i, 0, 0, 0)),
        ],
        out_specs=pl.BlockSpec((1, tho, W2, C), lambda b, i: (b, i, 0, 0)),
        compiler_params=pltpu.CompilerParams(
            dimension_semantics=("parallel", "parallel")),
    )(shift2, scale, yv)


# ---------------------------------------------------------------------------
# JAX glue
# ---------------------------------------------------------------------------
def _weights_to_taps(w_oihw, rstd_in=None):
    # (Cout, Cin, 3, 3) -> (3, 3*Cin, Cout) bf16, dh-major, dw stacked along the
    # contraction dim (order dw*Cin + ci, matching the in-kernel lane concat).
    cout, cin = w_oihw.shape[0], w_oihw.shape[1]
    w = jnp.transpose(w_oihw, (2, 3, 1, 0))                    # (dh, dw, Cin, Cout)
    if rstd_in is not None:
        w = w * rstd_in.reshape(1, 1, cin, 1)                  # fold BN rstd of previous layer
    return w.reshape(3, 3 * cin, cout).astype(jnp.bfloat16)


def _bn_stats(stats, count):
    tot = jnp.sum(stats, axis=(0, 1))                          # (2, C)
    mean = tot[0] / count
    var = jnp.maximum(tot[1] / count - mean * mean, 0.0)       # biased variance (training BN)
    rstd = jax.lax.rsqrt(var + EPS)
    return mean, rstd


def conv_block_forward(x_nchw, w1, w2, *, row_tile=None):
    """Exact ConvBlock.forward (training-mode BatchNorm, gamma=1, beta=0).

    Conv bias is omitted on purpose: with training-mode BN (beta=0) a per-channel bias
    cancels exactly in the mean subtraction (and the module zero-inits it).
    """
    N, cin, H, W = x_nchw.shape
    cout = w1.shape[0]
    assert H % 2 == 0 and W % 2 == 0

    vmem_cap = _vmem_capacity_bytes()
    x = jnp.transpose(x_nchw, (0, 2, 3, 1)).astype(jnp.bfloat16)   # NHWC bf16 for the MXU

    th = row_tile if row_tile is not None else _pick_row_tile(
        H, W, max(cin, cout), cout, N, vmem_cap)
    assert H % th == 0

    # Layer 1: conv only; BN1+ReLU are deferred into layer 2's fused prologue.
    w1t = _weights_to_taps(w1)
    zeros_cin = jnp.zeros((1, 1, cin), jnp.float32)
    y1, s1 = _conv_pass(x, w1t, zeros_cin, th=th, bn_relu_prologue=False, vmem_cap=vmem_cap)
    mean1, rstd1 = _bn_stats(s1, N * H * W)

    # Layer 2: rstd1 folded into w2; fused prologue is relu(y1 - mean1).
    w2t = _weights_to_taps(w2, rstd_in=rstd1)
    y2, s2 = _conv_pass(y1, w2t, (-mean1).reshape(1, 1, cout),
                        th=th, bn_relu_prologue=True, vmem_cap=vmem_cap)
    mean2, rstd2 = _bn_stats(s2, N * H * W)

    # Epilogue: fused BN2 + ReLU + 2x2 average pool.
    out = _bn_relu_pool(y2, mean2, rstd2, vmem_cap=vmem_cap)
    return jnp.transpose(out, (0, 3, 1, 2))                        # back to NCHW


# ---------------------------------------------------------------------------
# Pure-JAX f32 reference (sanity check)
# ---------------------------------------------------------------------------
def _reference(x_nchw, w1, w2):
    def layer(x, w):
        y = jax.lax.conv_general_dilated(
            x, w, window_strides=(1, 1), padding="SAME",
            dimension_numbers=("NCHW", "OIHW", "NCHW"))
        mean = jnp.mean(y, axis=(0, 2, 3), keepdims=True)
        var = jnp.mean((y - mean) ** 2, axis=(0, 2, 3), keepdims=True)
        return jnp.maximum((y - mean) * jax.lax.rsqrt(var + EPS), 0.0)

    h = layer(layer(x_nchw, w1), w2)
    N, C, H, W = h.shape
    return jnp.mean(h.reshape(N, C, H // 2, 2, W // 2, 2), axis=(3, 5))


# ---------------------------------------------------------------------------
if __name__ == "__main__":
    key = jax.random.PRNGKey(0)
    k1, k2, kx = jax.random.split(key, 3)

    N, Cin, Cout, H, W = 2, 4, 8, 16, 16

    # Deterministic Kaiming-normal init (fan_in = Cin*3*3, gain = sqrt(2)); bias = 0 (dropped).
    w1 = jax.random.normal(k1, (Cout, Cin, 3, 3), jnp.float32) * jnp.sqrt(2.0 / (Cin * 9))
    w2 = jax.random.normal(k2, (Cout, Cout, 3, 3), jnp.float32) * jnp.sqrt(2.0 / (Cout * 9))
    x = jax.random.normal(kx, (N, Cin, H, W), jnp.float32)

    # row_tile=8 -> grid (N, 2): exercises the multi-row-tile + halo/masking path.
    fwd = jax.jit(functools.partial(conv_block_forward, row_tile=8))
    out = jax.block_until_ready(fwd(x, w1, w2))
    assert out.shape == (N, Cout, H // 2, W // 2), out.shape

    ref = _reference(x, w1, w2)
    err = float(jnp.max(jnp.abs(out - ref)))
    assert jnp.allclose(out, ref, atol=2e-2, rtol=2e-2), err

    print("KERNEL_OK")
</pallas_src>

<mosaic_0001>
module attributes {stable_mosaic.version = 11 : i64} {
  func.func @_conv3x3_kernel(%arg0: i32, %arg1: i32, %arg2: memref<1x1x4xf32, #tpu.memory_space<vmem>>, %arg3: memref<1x1x16x4xbf16, #tpu.memory_space<vmem>>, %arg4: memref<1x8x16x4xbf16, #tpu.memory_space<vmem>>, %arg5: memref<1x1x16x4xbf16, #tpu.memory_space<vmem>>, %arg6: memref<3x12x8xbf16, #tpu.memory_space<vmem>>, %arg7: memref<1x8x16x8xbf16, #tpu.memory_space<vmem>>, %arg8: memref<1x1x2x8xf32, #tpu.memory_space<vmem>>) attributes {dimension_semantics = [#tpu.dimension_semantics<parallel>, #tpu.dimension_semantics<parallel>], iteration_bounds = array<i64: 2, 2>, scalar_prefetch = 0 : i64, scratch_operands = 0 : i64, tpu.core_type = #tpu.core_type<tc>, window_params = [{pipeline_mode = #tpu.pipeline_mode<synchronous>, transform_indices = @transform_0, window_bounds = array<i64: 1, 1, 4>}, {transform_indices = @transform_1, window_bounds = array<i64: 1, 1, 16, 4>}, {transform_indices = @transform_2, window_bounds = array<i64: 1, 8, 16, 4>}, {transform_indices = @transform_3, window_bounds = array<i64: 1, 1, 16, 4>}, {pipeline_mode = #tpu.pipeline_mode<synchronous>, transform_indices = @transform_4, window_bounds = array<i64: 3, 12, 8>}, {transform_indices = @transform_5, window_bounds = array<i64: 1, 8, 16, 8>}, {transform_indices = @transform_6, window_bounds = array<i64: 1, 1, 2, 8>}]} {
    %c0 = arith.constant 0 : index
    %c0_0 = arith.constant 0 : index
    %c0_1 = arith.constant 0 : index
    %c0_2 = arith.constant 0 : index
    %0 = vector.load %arg3[%c0, %c0_0, %c0_1, %c0_2] : memref<1x1x16x4xbf16, #tpu.memory_space<vmem>>, vector<1x1x16x4xbf16>
    %1 = vector.shape_cast %0 : vector<1x1x16x4xbf16> to vector<1x16x4xbf16>
    %2 = arith.extf %1 : vector<1x16x4xbf16> to vector<1x16x4xf32>
    %c0_3 = arith.constant 0 : index
    %c0_4 = arith.constant 0 : index
    %c0_5 = arith.constant 0 : index
    %c0_6 = arith.constant 0 : index
    %3 = vector.load %arg4[%c0_3, %c0_4, %c0_5, %c0_6] : memref<1x8x16x4xbf16, #tpu.memory_space<vmem>>, vector<1x8x16x4xbf16>
    %4 = vector.shape_cast %3 : vector<1x8x16x4xbf16> to vector<8x16x4xbf16>
    %5 = arith.extf %4 : vector<8x16x4xbf16> to vector<8x16x4xf32>
    %c0_7 = arith.constant 0 : index
    %c0_8 = arith.constant 0 : index
    %c0_9 = arith.constant 0 : index
    %c0_10 = arith.constant 0 : index
    %6 = vector.load %arg5[%c0_7, %c0_8, %c0_9, %c0_10] : memref<1x1x16x4xbf16, #tpu.memory_space<vmem>>, vector<1x1x16x4xbf16>
    %7 = vector.shape_cast %6 : vector<1x1x16x4xbf16> to vector<1x16x4xbf16>
    %8 = arith.extf %7 : vector<1x16x4xbf16> to vector<1x16x4xf32>
    %c0_i32 = arith.constant 0 : i32
    %9 = arith.cmpi sgt, %arg1, %c0_i32 : i32
    %cst = arith.constant 0.000000e+00 : f32
    %10 = vector.broadcast %cst : f32 to vector<1x16x4xf32>
    %11 = arith.select %9, %2, %10 : vector<1x16x4xf32>
    %c1_i32 = arith.constant 1 : i32
    %12 = arith.cmpi slt, %arg1, %c1_i32 : i32
    %cst_11 = arith.constant 0.000000e+00 : f32
    %13 = vector.broadcast %cst_11 : f32 to vector<1x16x4xf32>
    %14 = arith.select %12, %8, %13 : vector<1x16x4xf32>
    %15 = tpu.concatenate %11, %5, %14 in 0 : vector<1x16x4xf32>, vector<8x16x4xf32>, vector<1x16x4xf32> -> vector<10x16x4xf32>
    %16 = tpu.iota {dimensions = array<i32: 1>} : vector<1x16x1xi32>
    %c0_i32_12 = arith.constant 0 : i32
    %17 = vector.broadcast %c0_i32_12 : i32 to vector<1x16x1xi32>
    %18 = arith.cmpi sgt, %16, %17 : vector<1x16x1xi32>
    %c1_i32_13 = arith.constant 1 : i32
    %19 = tpu.dynamic_rotate %15 by %c1_i32_13 dim 1 : vector<10x16x4xf32>, i32 -> vector<10x16x4xf32>
    %cst_14 = arith.constant 0.000000e+00 : f32
    %20 = vector.shape_cast %18 : vector<1x16x1xi1> to vector<1x16x1xi1>
    %21 = vector.broadcast %20 : vector<1x16x1xi1> to vector<10x16x4xi1>
    %22 = vector.broadcast %cst_14 : f32 to vector<10x16x4xf32>
    %23 = arith.select %21, %19, %22 : vector<10x16x4xi1>, vector<10x16x4xf32>
    %c15_i32 = arith.constant 15 : i32
    %24 = vector.broadcast %c15_i32 : i32 to vector<1x16x1xi32>
    %25 = arith.cmpi slt, %16, %24 : vector<1x16x1xi32>
    %c15_i32_15 = arith.constant 15 : i32
    %26 = tpu.dynamic_rotate %15 by %c15_i32_15 dim 1 : vector<10x16x4xf32>, i32 -> vector<10x16x4xf32>
    %cst_16 = arith.constant 0.000000e+00 : f32
    %27 = vector.shape_cast %25 : vector<1x16x1xi1> to vector<1x16x1xi1>
    %28 = vector.broadcast %27 : vector<1x16x1xi1> to vector<10x16x4xi1>
    %29 = vector.broadcast %cst_16 : f32 to vector<10x16x4xf32>
    %30 = arith.select %28, %26, %29 : vector<10x16x4xi1>, vector<10x16x4xf32>
    %31 = arith.truncf %23 : vector<10x16x4xf32> to vector<10x16x4xbf16>
    %32 = arith.truncf %15 : vector<10x16x4xf32> to vector<10x16x4xbf16>
    %33 = arith.truncf %30 : vector<10x16x4xf32> to vector<10x16x4xbf16>
    %34 = tpu.concatenate %31, %32, %33 in 2 : vector<10x16x4xbf16>, vector<10x16x4xbf16>, vector<10x16x4xbf16> -> vector<10x16x12xbf16>
    %cst_17 = arith.constant 0.000000e+00 : f32
    %35 = vector.broadcast %cst_17 : f32 to vector<128x8xf32>
    %36 = vector.extract_strided_slice %34 {offsets = [0, 0, 0], sizes = [8, 16, 12], strides = [1, 1, 1]} : vector<10x16x12xbf16> to vector<8x16x12xbf16>
    %37 = vector.shape_cast %36 : vector<8x16x12xbf16> to vector<128x12xbf16>
    %c0_18 = arith.constant 0 : index
    %c0_19 = arith.constant 0 : index
    %c0_20 = arith.constant 0 : index
    %38 = vector.load %arg6[%c0_18, %c0_19, %c0_20] : memref<3x12x8xbf16, #tpu.memory_space<vmem>>, vector<1x12x8xbf16>
    %39 = vector.shape_cast %38 : vector<1x12x8xbf16> to vector<12x8xbf16>
    %cst_21 = arith.constant dense<0.000000e+00> : vector<128x8xf32>
    %40 = tpu.matmul %37, %39, %cst_21 {dimension_numbers = #tpu.dot_dimension_numbers<[1], [0], [0], [1], [0, 0, 1, 1], [], []>} : vector<128x12xbf16>, vector<12x8xbf16>, vector<128x8xf32> -> vector<128x8xf32>
    %41 = arith.addf %35, %40 : vector<128x8xf32>
    %42 = vector.extract_strided_slice %34 {offsets = [1, 0, 0], sizes = [8, 16, 12], strides = [1, 1, 1]} : vector<10x16x12xbf16> to vector<8x16x12xbf16>
    %43 = vector.shape_cast %42 : vector<8x16x12xbf16> to vector<128x12xbf16>
    %c1 = arith.constant 1 : index
    %c0_22 = arith.constant 0 : index
    %c0_23 = arith.constant 0 : index
    %44 = vector.load %arg6[%c1, %c0_22, %c0_23] : memref<3x12x8xbf16, #tpu.memory_space<vmem>>, vector<1x12x8xbf16>
    %45 = vector.shape_cast %44 : vector<1x12x8xbf16> to vector<12x8xbf16>
    %cst_24 = arith.constant dense<0.000000e+00> : vector<128x8xf32>
    %46 = tpu.matmul %43, %45, %cst_24 {dimension_numbers = #tpu.dot_dimension_numbers<[1], [0], [0], [1], [0, 0, 1, 1], [], []>} : vector<128x12xbf16>, vector<12x8xbf16>, vector<128x8xf32> -> vector<128x8xf32>
    %47 = arith.addf %41, %46 : vector<128x8xf32>
    %48 = vector.extract_strided_slice %34 {offsets = [2, 0, 0], sizes = [8, 16, 12], strides = [1, 1, 1]} : vector<10x16x12xbf16> to vector<8x16x12xbf16>
    %49 = vector.shape_cast %48 : vector<8x16x12xbf16> to vector<128x12xbf16>
    %c2 = arith.constant 2 : index
    %c0_25 = arith.constant 0 : index
    %c0_26 = arith.constant 0 : index
    %50 = vector.load %arg6[%c2, %c0_25, %c0_26] : memref<3x12x8xbf16, #tpu.memory_space<vmem>>, vector<1x12x8xbf16>
    %51 = vector.shape_cast %50 : vector<1x12x8xbf16> to vector<12x8xbf16>
    %cst_27 = arith.constant dense<0.000000e+00> : vector<128x8xf32>
    %52 = tpu.matmul %49, %51, %cst_27 {dimension_numbers = #tpu.dot_dimension_numbers<[1], [0], [0], [1], [0, 0, 1, 1], [], []>} : vector<128x12xbf16>, vector<12x8xbf16>, vector<128x8xf32> -> vector<128x8xf32>
    %53 = arith.addf %47, %52 : vector<128x8xf32>
    %54 = vector.shape_cast %53 : vector<128x8xf32> to vector<8x16x8xf32>
    %55 = arith.truncf %54 : vector<8x16x8xf32> to vector<8x16x8xbf16>
    %c0_28 = arith.constant 0 : index
    %c0_29 = arith.constant 0 : index
    %c0_30 = arith.constant 0 : index
    %c0_31 = arith.constant 0 : index
    %56 = vector.load %arg7[%c0_28, %c0_29, %c0_30, %c0_31] : memref<1x8x16x8xbf16, #tpu.memory_space<vmem>>, vector<1x8x16x8xbf16>
    %57 = vector.shape_cast %56 : vector<1x8x16x8xbf16> to vector<8x16x8xbf16>
    %58 = vector.shape_cast %55 : vector<8x16x8xbf16> to vector<1x8x16x8xbf16>
    tpu.vector_store %arg7[%c0_28, %c0_29, %c0_30, %c0_31], %58 {strides = array<i32>} : memref<1x8x16x8xbf16, #tpu.memory_space<vmem>>, vector<1x8x16x8xbf16>,
    %cst_32 = arith.constant dense<0.000000e+00> : vector<8xf32>
    %59 = vector.multi_reduction <add>, %53, %cst_32 [0] : vector<128x8xf32> to vector<8xf32>
    %60 = arith.mulf %53, %53 : vector<128x8xf32>
    %cst_33 = arith.constant dense<0.000000e+00> : vector<8xf32>
    %61 = vector.multi_reduction <add>, %60, %cst_33 [0] : vector<128x8xf32> to vector<8xf32>
    %62 = vector.shape_cast %59 : vector<8xf32> to vector<1x8xf32>
    %63 = vector.shape_cast %61 : vector<8xf32> to vector<1x8xf32>
    %64 = tpu.concatenate %62, %63 in 0 : vector<1x8xf32>, vector<1x8xf32> -> vector<2x8xf32>
    %c0_34 = arith.constant 0 : index
    %c0_35 = arith.constant 0 : index
    %c0_36 = arith.constant 0 : index
    %c0_37 = arith.constant 0 : index
    %65 = vector.load %arg8[%c0_34, %c0_35, %c0_36, %c0_37] : memref<1x1x2x8xf32, #tpu.memory_space<vmem>>, vector<1x1x2x8xf32>
    %66 = vector.shape_cast %65 : vector<1x1x2x8xf32> to vector<2x8xf32>
    %67 = vector.shape_cast %64 : vector<2x8xf32> to vector<1x1x2x8xf32>
    tpu.vector_store %arg8[%c0_34, %c0_35, %c0_36, %c0_37], %67 {strides = array<i32>} : memref<1x1x2x8xf32, #tpu.memory_space<vmem>>, vector<1x1x2x8xf32>,
    return
  }
  func.func @transform_0(%arg0: i32, %arg1: i32) -> (i32, i32, i32) {
    %c0_i32 = arith.constant 0 : i32
    %c0_i32_0 = arith.constant 0 : i32
    %c0_i32_1 = arith.constant 0 : i32
    %c0_i32_2 = arith.constant 0 : i32
    return %c0_i32, %c0_i32_0, %c0_i32_1 : i32, i32, i32
  }
  func.func @transform_1(%arg0: i32, %arg1: i32) -> (i32, i32, i32, i32) {
    %c8_i32 = arith.constant 8 : i32
    %0 = arith.muli %arg1, %c8_i32 : i32
    %c1_i32 = arith.constant 1 : i32
    %1 = arith.subi %0, %c1_i32 : i32
    %c0_i32 = arith.constant 0 : i32
    %2 = arith.maxsi %1, %c0_i32 : i32
    %c0_i32_0 = arith.constant 0 : i32
    %c0_i32_1 = arith.constant 0 : i32
    %c0_i32_2 = arith.constant 0 : i32
    return %arg0, %2, %c0_i32_0, %c0_i32_1 : i32, i32, i32, i32
  }
  func.func @transform_2(%arg0: i32, %arg1: i32) -> (i32, i32, i32, i32) {
    %c0_i32 = arith.constant 0 : i32
    %c0_i32_0 = arith.constant 0 : i32
    %c0_i32_1 = arith.constant 0 : i32
    return %arg0, %arg1, %c0_i32, %c0_i32_0 : i32, i32, i32, i32
  }
  func.func @transform_3(%arg0: i32, %arg1: i32) -> (i32, i32, i32, i32) {
    %c1_i32 = arith.constant 1 : i32
    %0 = arith.addi %arg1, %c1_i32 : i32
    %c8_i32 = arith.constant 8 : i32
    %1 = arith.muli %0, %c8_i32 : i32
    %c15_i32 = arith.constant 15 : i32
    %2 = arith.minsi %1, %c15_i32 : i32
    %c0_i32 = arith.constant 0 : i32
    %c0_i32_0 = arith.constant 0 : i32
    %c0_i32_1 = arith.constant 0 : i32
    return %arg0, %2, %c0_i32, %c0_i32_0 : i32, i32, i32, i32
  }
  func.func @transform_4(%arg0: i32, %arg1: i32) -> (i32, i32, i32) {
    %c0_i32 = arith.constant 0 : i32
    %c0_i32_0 = arith.constant 0 : i32
    %c0_i32_1 = arith.constant 0 : i32
    %c0_i32_2 = arith.constant 0 : i32
    return %c0_i32, %c0_i32_0, %c0_i32_1 : i32, i32, i32
  }
  func.func @transform_5(%arg0: i32, %arg1: i32) -> (i32, i32, i32, i32) {
    %c0_i32 = arith.constant 0 : i32
    %c0_i32_0 = arith.constant 0 : i32
    %c0_i32_1 = arith.constant 0 : i32
    return %arg0, %arg1, %c0_i32, %c0_i32_0 : i32, i32, i32, i32
  }
  func.func @transform_6(%arg0: i32, %arg1: i32) -> (i32, i32, i32, i32) {
    %c0_i32 = arith.constant 0 : i32
    %c0_i32_0 = arith.constant 0 : i32
    %c0_i32_1 = arith.constant 0 : i32
    return %arg0, %arg1, %c0_i32, %c0_i32_0 : i32, i32, i32, i32
  }
}

module attributes {stable_mosaic.version = 11 : i64} {
  func.func @_conv3x3_kernel(%arg0: i32, %arg1: i32, %arg2: memref<1x1x8xf32, #tpu.memory_space<vmem>>, %arg3: memref<1x1x16x8xbf16, #tpu.memory_space<vmem>>, %arg4: memref<1x8x16x8xbf16, #tpu.memory_space<vmem>>, %arg5: memref<1x1x16x8xbf16, #tpu.memory_space<vmem>>, %arg6: memref<3x24x8xbf16, #tpu.memory_space<vmem>>, %arg7: memref<1x8x16x8xbf16, #tpu.memory_space<vmem>>, %arg8: memref<1x1x2x8xf32, #tpu.memory_space<vmem>>) attributes {dimension_semantics = [#tpu.dimension_semantics<parallel>, #tpu.dimension_semantics<parallel>], iteration_bounds = array<i64: 2, 2>, scalar_prefetch = 0 : i64, scratch_operands = 0 : i64, tpu.core_type = #tpu.core_type<tc>, window_params = [{pipeline_mode = #tpu.pipeline_mode<synchronous>, transform_indices = @transform_0, window_bounds = array<i64: 1, 1, 8>}, {transform_indices = @transform_1, window_bounds = array<i64: 1, 1, 16, 8>}, {transform_indices = @transform_2, window_bounds = array<i64: 1, 8, 16, 8>}, {transform_indices = @transform_3, window_bounds = array<i64: 1, 1, 16, 8>}, {pipeline_mode = #tpu.pipeline_mode<synchronous>, transform_indices = @transform_4, window_bounds = array<i64: 3, 24, 8>}, {transform_indices = @transform_5, window_bounds = array<i64: 1, 8, 16, 8>}, {transform_indices = @transform_6, window_bounds = array<i64: 1, 1, 2, 8>}]} {
    %c0 = arith.constant 0 : index
    %c0_0 = arith.constant 0 : index
    %c0_1 = arith.constant 0 : index
    %c0_2 = arith.constant 0 : index
    %0 = vector.load %arg3[%c0, %c0_0, %c0_1, %c0_2] : memref<1x1x16x8xbf16, #tpu.memory_space<vmem>>, vector<1x1x16x8xbf16>
    %1 = vector.shape_cast %0 : vector<1x1x16x8xbf16> to vector<1x16x8xbf16>
    %2 = arith.extf %1 : vector<1x16x8xbf16> to vector<1x16x8xf32>
    %c0_3 = arith.constant 0 : index
    %c0_4 = arith.constant 0 : index
    %c0_5 = arith.constant 0 : index
    %3 = vector.load %arg2[%c0_3, %c0_4, %c0_5] : memref<1x1x8xf32, #tpu.memory_space<vmem>>, vector<1x1x8xf32>
    %4 = vector.broadcast %3 : vector<1x1x8xf32> to vector<1x16x8xf32>
    %5 = arith.addf %2, %4 : vector<1x16x8xf32>
    %cst = arith.constant 0.000000e+00 : f32
    %6 = vector.broadcast %cst : f32 to vector<1x16x8xf32>
    %7 = arith.maximumf %5, %6 : vector<1x16x8xf32>
    %c0_6 = arith.constant 0 : index
    %c0_7 = arith.constant 0 : index
    %c0_8 = arith.constant 0 : index
    %c0_9 = arith.constant 0 : index
    %8 = vector.load %arg4[%c0_6, %c0_7, %c0_8, %c0_9] : memref<1x8x16x8xbf16, #tpu.memory_space<vmem>>, vector<1x8x16x8xbf16>
    %9 = vector.shape_cast %8 : vector<1x8x16x8xbf16> to vector<8x16x8xbf16>
    %10 = arith.extf %9 : vector<8x16x8xbf16> to vector<8x16x8xf32>
    %c0_10 = arith.constant 0 : index
    %c0_11 = arith.constant 0 : index
    %c0_12 = arith.constant 0 : index
    %11 = vector.load %arg2[%c0_10, %c0_11, %c0_12] : memref<1x1x8xf32, #tpu.memory_space<vmem>>, vector<1x1x8xf32>
    %12 = vector.broadcast %11 : vector<1x1x8xf32> to vector<8x16x8xf32>
    %13 = arith.addf %10, %12 : vector<8x16x8xf32>
    %cst_13 = arith.constant 0.000000e+00 : f32
    %14 = vector.broadcast %cst_13 : f32 to vector<8x16x8xf32>
    %15 = arith.maximumf %13, %14 : vector<8x16x8xf32>
    %c0_14 = arith.constant 0 : index
    %c0_15 = arith.constant 0 : index
    %c0_16 = arith.constant 0 : index
    %c0_17 = arith.constant 0 : index
    %16 = vector.load %arg5[%c0_14, %c0_15, %c0_16, %c0_17] : memref<1x1x16x8xbf16, #tpu.memory_space<vmem>>, vector<1x1x16x8xbf16>
    %17 = vector.shape_cast %16 : vector<1x1x16x8xbf16> to vector<1x16x8xbf16>
    %18 = arith.extf %17 : vector<1x16x8xbf16> to vector<1x16x8xf32>
    %c0_18 = arith.constant 0 : index
    %c0_19 = arith.constant 0 : index
    %c0_20 = arith.constant 0 : index
    %19 = vector.load %arg2[%c0_18, %c0_19, %c0_20] : memref<1x1x8xf32, #tpu.memory_space<vmem>>, vector<1x1x8xf32>
    %20 = vector.broadcast %19 : vector<1x1x8xf32> to vector<1x16x8xf32>
    %21 = arith.addf %18, %20 : vector<1x16x8xf32>
    %cst_21 = arith.constant 0.000000e+00 : f32
    %22 = vector.broadcast %cst_21 : f32 to vector<1x16x8xf32>
    %23 = arith.maximumf %21, %22 : vector<1x16x8xf32>
    %c0_i32 = arith.constant 0 : i32
    %24 = arith.cmpi sgt, %arg1, %c0_i32 : i32
    %cst_22 = arith.constant 0.000000e+00 : f32
    %25 = vector.broadcast %cst_22 : f32 to vector<1x16x8xf32>
    %26 = arith.select %24, %7, %25 : vector<1x16x8xf32>
    %c1_i32 = arith.constant 1 : i32
    %27 = arith.cmpi slt, %arg1, %c1_i32 : i32
    %cst_23 = arith.constant 0.000000e+00 : f32
    %28 = vector.broadcast %cst_23 : f32 to vector<1x16x8xf32>
    %29 = arith.select %27, %23, %28 : vector<1x16x8xf32>
    %30 = tpu.concatenate %26, %15, %29 in 0 : vector<1x16x8xf32>, vector<8x16x8xf32>, vector<1x16x8xf32> -> vector<10x16x8xf32>
    %31 = tpu.iota {dimensions = array<i32: 1>} : vector<1x16x1xi32>
    %c0_i32_24 = arith.constant 0 : i32
    %32 = vector.broadcast %c0_i32_24 : i32 to vector<1x16x1xi32>
    %33 = arith.cmpi sgt, %31, %32 : vector<1x16x1xi32>
    %c1_i32_25 = arith.constant 1 : i32
    %34 = tpu.dynamic_rotate %30 by %c1_i32_25 dim 1 : vector<10x16x8xf32>, i32 -> vector<10x16x8xf32>
    %cst_26 = arith.constant 0.000000e+00 : f32
    %35 = vector.shape_cast %33 : vector<1x16x1xi1> to vector<1x16x1xi1>
    %36 = vector.broadcast %35 : vector<1x16x1xi1> to vector<10x16x8xi1>
    %37 = vector.broadcast %cst_26 : f32 to vector<10x16x8xf32>
    %38 = arith.select %36, %34, %37 : vector<10x16x8xi1>, vector<10x16x8xf32>
    %c15_i32 = arith.constant 15 : i32
    %39 = vector.broadcast %c15_i32 : i32 to vector<1x16x1xi32>
    %40 = arith.cmpi slt, %31, %39 : vector<1x16x1xi32>
    %c15_i32_27 = arith.constant 15 : i32
    %41 = tpu.dynamic_rotate %30 by %c15_i32_27 dim 1 : vector<10x16x8xf32>, i32 -> vector<10x16x8xf32>
    %cst_28 = arith.constant 0.000000e+00 : f32
    %42 = vector.shape_cast %40 : vector<1x16x1xi1> to vector<1x16x1xi1>
    %43 = vector.broadcast %42 : vector<1x16x1xi1> to vector<10x16x8xi1>
    %44 = vector.broadcast %cst_28 : f32 to vector<10x16x8xf32>
    %45 = arith.select %43, %41, %44 : vector<10x16x8xi1>, vector<10x16x8xf32>
    %46 = arith.truncf %38 : vector<10x16x8xf32> to vector<10x16x8xbf16>
    %47 = arith.truncf %30 : vector<10x16x8xf32> to vector<10x16x8xbf16>
    %48 = arith.truncf %45 : vector<10x16x8xf32> to vector<10x16x8xbf16>
    %49 = tpu.concatenate %46, %47, %48 in 2 : vector<10x16x8xbf16>, vector<10x16x8xbf16>, vector<10x16x8xbf16> -> vector<10x16x24xbf16>
    %cst_29 = arith.constant 0.000000e+00 : f32
    %50 = vector.broadcast %cst_29 : f32 to vector<128x8xf32>
    %51 = vector.extract_strided_slice %49 {offsets = [0, 0, 0], sizes = [8, 16, 24], strides = [1, 1, 1]} : vector<10x16x24xbf16> to vector<8x16x24xbf16>
    %52 = vector.shape_cast %51 : vector<8x16x24xbf16> to vector<128x24xbf16>
    %c0_30 = arith.constant 0 : index
    %c0_31 = arith.constant 0 : index
    %c0_32 = arith.constant 0 : index
    %53 = vector.load %arg6[%c0_30, %c0_31, %c0_32] : memref<3x24x8xbf16, #tpu.memory_space<vmem>>, vector<1x24x8xbf16>
    %54 = vector.shape_cast %53 : vector<1x24x8xbf16> to vector<24x8xbf16>
    %cst_33 = arith.constant dense<0.000000e+00> : vector<128x8xf32>
    %55 = tpu.matmul %52, %54, %cst_33 {dimension_numbers = #tpu.dot_dimension_numbers<[1], [0], [0], [1], [0, 0, 1, 1], [], []>} : vector<128x24xbf16>, vector<24x8xbf16>, vector<128x8xf32> -> vector<128x8xf32>
    %56 = arith.addf %50, %55 : vector<128x8xf32>
    %57 = vector.extract_strided_slice %49 {offsets = [1, 0, 0], sizes = [8, 16, 24], strides = [1, 1, 1]} : vector<10x16x24xbf16> to vector<8x16x24xbf16>
    %58 = vector.shape_cast %57 : vector<8x16x24xbf16> to vector<128x24xbf16>
    %c1 = arith.constant 1 : index
    %c0_34 = arith.constant 0 : index
    %c0_35 = arith.constant 0 : index
    %59 = vector.load %arg6[%c1, %c0_34, %c0_35] : memref<3x24x8xbf16, #tpu.memory_space<vmem>>, vector<1x24x8xbf16>
    %60 = vector.shape_cast %59 : vector<1x24x8xbf16> to vector<24x8xbf16>
    %cst_36 = arith.constant dense<0.000000e+00> : vector<128x8xf32>
    %61 = tpu.matmul %58, %60, %cst_36 {dimension_numbers = #tpu.dot_dimension_numbers<[1], [0], [0], [1], [0, 0, 1, 1], [], []>} : vector<128x24xbf16>, vector<24x8xbf16>, vector<128x8xf32> -> vector<128x8xf32>
    %62 = arith.addf %56, %61 : vector<128x8xf32>
    %63 = vector.extract_strided_slice %49 {offsets = [2, 0, 0], sizes = [8, 16, 24], strides = [1, 1, 1]} : vector<10x16x24xbf16> to vector<8x16x24xbf16>
    %64 = vector.shape_cast %63 : vector<8x16x24xbf16> to vector<128x24xbf16>
    %c2 = arith.constant 2 : index
    %c0_37 = arith.constant 0 : index
    %c0_38 = arith.constant 0 : index
    %65 = vector.load %arg6[%c2, %c0_37, %c0_38] : memref<3x24x8xbf16, #tpu.memory_space<vmem>>, vector<1x24x8xbf16>
    %66 = vector.shape_cast %65 : vector<1x24x8xbf16> to vector<24x8xbf16>
    %cst_39 = arith.constant dense<0.000000e+00> : vector<128x8xf32>
    %67 = tpu.matmul %64, %66, %cst_39 {dimension_numbers = #tpu.dot_dimension_numbers<[1], [0], [0], [1], [0, 0, 1, 1], [], []>} : vector<128x24xbf16>, vector<24x8xbf16>, vector<128x8xf32> -> vector<128x8xf32>
    %68 = arith.addf %62, %67 : vector<128x8xf32>
    %69 = vector.shape_cast %68 : vector<128x8xf32> to vector<8x16x8xf32>
    %70 = arith.truncf %69 : vector<8x16x8xf32> to vector<8x16x8xbf16>
    %c0_40 = arith.constant 0 : index
    %c0_41 = arith.constant 0 : index
    %c0_42 = arith.constant 0 : index
    %c0_43 = arith.constant 0 : index
    %71 = vector.load %arg7[%c0_40, %c0_41, %c0_42, %c0_43] : memref<1x8x16x8xbf16, #tpu.memory_space<vmem>>, vector<1x8x16x8xbf16>
    %72 = vector.shape_cast %71 : vector<1x8x16x8xbf16> to vector<8x16x8xbf16>
    %73 = vector.shape_cast %70 : vector<8x16x8xbf16> to vector<1x8x16x8xbf16>
    tpu.vector_store %arg7[%c0_40, %c0_41, %c0_42, %c0_43], %73 {strides = array<i32>} : memref<1x8x16x8xbf16, #tpu.memory_space<vmem>>, vector<1x8x16x8xbf16>,
    %cst_44 = arith.constant dense<0.000000e+00> : vector<8xf32>
    %74 = vector.multi_reduction <add>, %68, %cst_44 [0] : vector<128x8xf32> to vector<8xf32>
    %75 = arith.mulf %68, %68 : vector<128x8xf32>
    %cst_45 = arith.constant dense<0.000000e+00> : vector<8xf32>
    %76 = vector.multi_reduction <add>, %75, %cst_45 [0] : vector<128x8xf32> to vector<8xf32>
    %77 = vector.shape_cast %74 : vector<8xf32> to vector<1x8xf32>
    %78 = vector.shape_cast %76 : vector<8xf32> to vector<1x8xf32>
    %79 = tpu.concatenate %77, %78 in 0 : vector<1x8xf32>, vector<1x8xf32> -> vector<2x8xf32>
    %c0_46 = arith.constant 0 : index
    %c0_47 = arith.constant 0 : index
    %c0_48 = arith.constant 0 : index
    %c0_49 = arith.constant 0 : index
    %80 = vector.load %arg8[%c0_46, %c0_47, %c0_48, %c0_49] : memref<1x1x2x8xf32, #tpu.memory_space<vmem>>, vector<1x1x2x8xf32>
    %81 = vector.shape_cast %80 : vector<1x1x2x8xf32> to vector<2x8xf32>
    %82 = vector.shape_cast %79 : vector<2x8xf32> to vector<1x1x2x8xf32>
    tpu.vector_store %arg8[%c0_46, %c0_47, %c0_48, %c0_49], %82 {strides = array<i32>} : memref<1x1x2x8xf32, #tpu.memory_space<vmem>>, vector<1x1x2x8xf32>,
    return
  }
  func.func @transform_0(%arg0: i32, %arg1: i32) -> (i32, i32, i32) {
    %c0_i32 = arith.constant 0 : i32
    %c0_i32_0 = arith.constant 0 : i32
    %c0_i32_1 = arith.constant 0 : i32
    %c0_i32_2 = arith.constant 0 : i32
    return %c0_i32, %c0_i32_0, %c0_i32_1 : i32, i32, i32
  }
  func.func @transform_1(%arg0: i32, %arg1: i32) -> (i32, i32, i32, i32) {
    %c8_i32 = arith.constant 8 : i32
    %0 = arith.muli %arg1, %c8_i32 : i32
    %c1_i32 = arith.constant 1 : i32
    %1 = arith.subi %0, %c1_i32 : i32
    %c0_i32 = arith.constant 0 : i32
    %2 = arith.maxsi %1, %c0_i32 : i32
    %c0_i32_0 = arith.constant 0 : i32
    %c0_i32_1 = arith.constant 0 : i32
    %c0_i32_2 = arith.constant 0 : i32
    return %arg0, %2, %c0_i32_0, %c0_i32_1 : i32, i32, i32, i32
  }
  func.func @transform_2(%arg0: i32, %arg1: i32) -> (i32, i32, i32, i32) {
    %c0_i32 = arith.constant 0 : i32
    %c0_i32_0 = arith.constant 0 : i32
    %c0_i32_1 = arith.constant 0 : i32
    return %arg0, %arg1, %c0_i32, %c0_i32_0 : i32, i32, i32, i32
  }
  func.func @transform_3(%arg0: i32, %arg1: i32) -> (i32, i32, i32, i32) {
    %c1_i32 = arith.constant 1 : i32
    %0 = arith.addi %arg1, %c1_i32 : i32
    %c8_i32 = arith.constant 8 : i32
    %1 = arith.muli %0, %c8_i32 : i32
    %c15_i32 = arith.constant 15 : i32
    %2 = arith.minsi %1, %c15_i32 : i32
    %c0_i32 = arith.constant 0 : i32
    %c0_i32_0 = arith.constant 0 : i32
    %c0_i32_1 = arith.constant 0 : i32
    return %arg0, %2, %c0_i32, %c0_i32_0 : i32, i32, i32, i32
  }
  func.func @transform_4(%arg0: i32, %arg1: i32) -> (i32, i32, i32) {
    %c0_i32 = arith.constant 0 : i32
    %c0_i32_0 = arith.constant 0 : i32
    %c0_i32_1 = arith.constant 0 : i32
    %c0_i32_2 = arith.constant 0 : i32
    return %c0_i32, %c0_i32_0, %c0_i32_1 : i32, i32, i32
  }
  func.func @transform_5(%arg0: i32, %arg1: i32) -> (i32, i32, i32, i32) {
    %c0_i32 = arith.constant 0 : i32
    %c0_i32_0 = arith.constant 0 : i32
    %c0_i32_1 = arith.constant 0 : i32
    return %arg0, %arg1, %c0_i32, %c0_i32_0 : i32, i32, i32, i32
  }
  func.func @transform_6(%arg0: i32, %arg1: i32) -> (i32, i32, i32, i32) {
    %c0_i32 = arith.constant 0 : i32
    %c0_i32_0 = arith.constant 0 : i32
    %c0_i32_1 = arith.constant 0 : i32
    return %arg0, %arg1, %c0_i32, %c0_i32_0 : i32, i32, i32, i32
  }
}

module attributes {stable_mosaic.version = 11 : i64} {
  func.func @_bn_relu_pool_kernel(%arg0: i32, %arg1: i32, %arg2: memref<1x1x16xf32, #tpu.memory_space<vmem>>, %arg3: memref<1x1x8xf32, #tpu.memory_space<vmem>>, %arg4: memref<1x8x2x8x16xbf16, #tpu.memory_space<vmem>>, %arg5: memref<1x8x8x8xf32, #tpu.memory_space<vmem>>) attributes {dimension_semantics = [#tpu.dimension_semantics<parallel>, #tpu.dimension_semantics<parallel>], iteration_bounds = array<i64: 2, 1>, scalar_prefetch = 0 : i64, scratch_operands = 0 : i64, tpu.core_type = #tpu.core_type<tc>, window_params = [{pipeline_mode = #tpu.pipeline_mode<synchronous>, transform_indices = @transform_0, window_bounds = array<i64: 1, 1, 16>}, {pipeline_mode = #tpu.pipeline_mode<synchronous>, transform_indices = @transform_1, window_bounds = array<i64: 1, 1, 8>}, {transform_indices = @transform_2, window_bounds = array<i64: 1, 8, 2, 8, 16>}, {transform_indices = @transform_3, window_bounds = array<i64: 1, 8, 8, 8>}]} {
    %c0 = arith.constant 0 : index
    %c0_0 = arith.constant 0 : index
    %c0_1 = arith.constant 0 : index
    %c0_2 = arith.constant 0 : index
    %c0_3 = arith.constant 0 : index
    %0 = vector.load %arg4[%c0, %c0_0, %c0_1, %c0_2, %c0_3] : memref<1x8x2x8x16xbf16, #tpu.memory_space<vmem>>, vector<1x8x2x8x16xbf16>
    %1 = vector.shape_cast %0 : vector<1x8x2x8x16xbf16> to vector<8x2x8x16xbf16>
    %2 = arith.extf %1 : vector<8x2x8x16xbf16> to vector<8x2x8x16xf32>
    %c0_4 = arith.constant 0 : index
    %c0_5 = arith.constant 0 : index
    %c0_6 = arith.constant 0 : index
    %3 = vector.load %arg2[%c0_4, %c0_5, %c0_6] : memref<1x1x16xf32, #tpu.memory_space<vmem>>, vector<1x1x16xf32>
    %4 = vector.shape_cast %3 : vector<1x1x16xf32> to vector<1x1x1x16xf32>
    %5 = vector.broadcast %4 : vector<1x1x1x16xf32> to vector<8x2x8x16xf32>
    %6 = arith.addf %2, %5 : vector<8x2x8x16xf32>
    %cst = arith.constant 0.000000e+00 : f32
    %7 = vector.broadcast %cst : f32 to vector<8x2x8x16xf32>
    %8 = arith.maximumf %6, %7 : vector<8x2x8x16xf32>
    %9 = vector.extract_strided_slice %8 {offsets = [0, 0, 0, 0], sizes = [8, 1, 8, 16], strides = [1, 1, 1, 1]} : vector<8x2x8x16xf32> to vector<8x1x8x16xf32>
    %10 = vector.shape_cast %9 : vector<8x1x8x16xf32> to vector<8x8x16xf32>
    %11 = vector.extract_strided_slice %8 {offsets = [0, 1, 0, 0], sizes = [8, 1, 8, 16], strides = [1, 1, 1, 1]} : vector<8x2x8x16xf32> to vector<8x1x8x16xf32>
    %12 = vector.shape_cast %11 : vector<8x1x8x16xf32> to vector<8x8x16xf32>
    %13 = arith.addf %10, %12 : vector<8x8x16xf32>
    %14 = vector.extract_strided_slice %13 {offsets = [0, 0, 0], sizes = [8, 8, 8], strides = [1, 1, 1]} : vector<8x8x16xf32> to vector<8x8x8xf32>
    %15 = vector.extract_strided_slice %13 {offsets = [0, 0, 8], sizes = [8, 8, 8], strides = [1, 1, 1]} : vector<8x8x16xf32> to vector<8x8x8xf32>
    %16 = arith.addf %14, %15 : vector<8x8x8xf32>
    %c0_7 = arith.constant 0 : index
    %c0_8 = arith.constant 0 : index
    %c0_9 = arith.constant 0 : index
    %17 = vector.load %arg3[%c0_7, %c0_8, %c0_9] : memref<1x1x8xf32, #tpu.memory_space<vmem>>, vector<1x1x8xf32>
    %18 = vector.broadcast %17 : vector<1x1x8xf32> to vector<8x8x8xf32>
    %19 = arith.mulf %16, %18 : vector<8x8x8xf32>
    %c0_10 = arith.constant 0 : index
    %c0_11 = arith.constant 0 : index
    %c0_12 = arith.constant 0 : index
    %c0_13 = arith.constant 0 : index
    %20 = vector.load %arg5[%c0_10, %c0_11, %c0_12, %c0_13] : memref<1x8x8x8xf32, #tpu.memory_space<vmem>>, vector<1x8x8x8xf32>
    %21 = vector.shape_cast %20 : vector<1x8x8x8xf32> to vector<8x8x8xf32>
    %22 = vector.shape_cast %19 : vector<8x8x8xf32> to vector<1x8x8x8xf32>
    tpu.vector_store %arg5[%c0_10, %c0_11, %c0_12, %c0_13], %22 {strides = array<i32>} : memref<1x8x8x8xf32, #tpu.memory_space<vmem>>, vector<1x8x8x8xf32>,
    return
  }
  func.func @transform_0(%arg0: i32, %arg1: i32) -> (i32, i32, i32) {
    %c0_i32 = arith.constant 0 : i32
    %c0_i32_0 = arith.constant 0 : i32
    %c0_i32_1 = arith.constant 0 : i32
    %c0_i32_2 = arith.constant 0 : i32
    return %c0_i32, %c0_i32_0, %c0_i32_1 : i32, i32, i32
  }
  func.func @transform_1(%arg0: i32, %arg1: i32) -> (i32, i32, i32) {
    %c0_i32 = arith.constant 0 : i32
    %c0_i32_0 = arith.constant 0 : i32
    %c0_i32_1 = arith.constant 0 : i32
    %c0_i32_2 = arith.constant 0 : i32
    return %c0_i32, %c0_i32_0, %c0_i32_1 : i32, i32, i32
  }
  func.func @transform_2(%arg0: i32, %arg1: i32) -> (i32, i32, i32, i32, i32) {
    %c0_i32 = arith.constant 0 : i32
    %c0_i32_0 = arith.constant 0 : i32
    %c0_i32_1 = arith.constant 0 : i32
    %c0_i32_2 = arith.constant 0 : i32
    return %arg0, %arg1, %c0_i32, %c0_i32_0, %c0_i32_1 : i32, i32, i32, i32, i32
  }
  func.func @transform_3(%arg0: i32, %arg1: i32) -> (i32, i32, i32, i32) {
    %c0_i32 = arith.constant 0 : i32
    %c0_i32_0 = arith.constant 0 : i32
    %c0_i32_1 = arith.constant 0 : i32
    return %arg0, %arg1, %c0_i32, %c0_i32_0 : i32, i32, i32, i32
  }
}

</mosaic_0001>

<llo_original>
// kernel: conv_block_forward.5
$region0: #{conv_block_forward.5}
  #allocation0 [shape = 'u32[]', space=smem, size = 0x4, offset = 0x4, fixed_abs, tag = 'smem constant byte address 0x4 - core index']
  #allocation1 [shape = 'u32[72,128]{1,0:T(1,128)}', space=vmem, size = 0x9000, scoped, tag = 'internal scratch']
  %s0 = inlined_call_operand.vmem [shape: f32[1,1,16], index: 0, kind: input, shape index: {}]
  %s1 = inlined_call_operand.vmem [shape: f32[1,1,8], index: 1, kind: input, shape index: {}]
  %s2 = inlined_call_operand.vmem [shape: bf16[2,8,2,8,16], index: 2, kind: input, shape index: {}]
  %s3 = inlined_call_operand.vmem [shape: f32[2,8,8,8], index: 3, kind: output, shape index: {}]
  %s4 = sld [smem:[#allocation0]]
  $region45: #{conv_block_forward.5} parent=0
    _
  %s6 = ssub.s32 1, %s4
  %s7 = scalar_select 0, %s6, %s4
  loop: start=0, step=1, limit=4
  $region2: #{conv_block_forward.5} parent=0 // loop_pre_header
    _
  $region3: #{conv_block_forward.5} parent=0 // loop_header
    %s9 = sphi 0, %s13
    %p10 = scmp.ge.s32.totalorder %s9, 4
    %s16 = sphi 0, %s28
    %s17 = sphi 0, %s24
    %s18 = sphi 0, %s16
    %s19 = sphi 0, %s17
    %s20 = sphi 0, %s18
    %s21 = sphi 0, %s19
    %s29 = sphi 0, %s29
    %s31 = sphi 0, %s29
    %s32 = sphi 0, %s31
    %s46 = sphi 0, %s32
    %s50 = sphi 0, %s50
    %s52 = sphi 0, %s50
    %s53 = sphi 0, %s52
    %s67 = sphi 0, %s53
    %s75 = sphi 0, %s77
    %s78 = sphi 0, %s75
    %s79 = sphi 0, %s78
    %s95 = sphi 0, %s79
    %s103 = sphi 0, %s105
    %s106 = sphi 0, %s103
    %s107 = sphi 0, %s106
    %s123 = sphi 0, %s107
  $region4: #{conv_block_forward.5} parent=0 // loop_header_branch
    %12 = sbr.rel (%p10) target = $region8
  $region5: #{conv_block_forward.5} parent=0 // loop_body
    %s14 = ssub.s32 %s9, 1
    %s15 = ssub.s32 %s9, 2
    %s22 = sadd.s32 1, %s17
    %p23 = scmp.ge.s32.totalorder %s22, 1
    %s24 = scalar_select %p23, 0, %s22
    %s25 = sadd.s32 1, %s16
    %s26 = scalar_select %p23, %s25, %s16
    %p27 = scmp.ge.s32.totalorder %s26, 2
    %s28 = scalar_select %p27, 0, %s26
    %s30 = sadd.s32 %s29, 1
    %p33 = scmp.eq.s32.totalorder %s9, 1
    %p34 = scmp.ne.s32.totalorder %s29, %s31
    %p35 = scmp.eq.s32.totalorder %s9, 0
    %p36 = por %p34, %p35
    %p37 = scmp.ne.s32.totalorder %s29, %s31
    %p38 = scmp.eq.s32.totalorder %s14, 1
    %p39 = por %p37, %p38
    %p40 = scmp.ne.s32.totalorder %s31, %s32
    %p41 = scmp.eq.s32.totalorder %s14, 0
    %p42 = por %p40, %p41
    %p43 = scmp.ne.s32.totalorder %s31, %s32
    %p44 = scmp.eq.s32.totalorder %s15, 1
    %p45 = por %p43, %p44
    %p47 = scmp.ne.s32.totalorder %s32, %s46
    %p48 = scmp.eq.s32.totalorder %s15, 0
    %p49 = por %p47, %p48
    %s51 = sadd.s32 %s50, 1
    %p54 = scmp.eq.s32.totalorder %s9, 1
    %p55 = scmp.ne.s32.totalorder %s50, %s52
    %p56 = scmp.eq.s32.totalorder %s9, 0
    %p57 = por %p55, %p56
    %p58 = scmp.ne.s32.totalorder %s50, %s52
    %p59 = scmp.eq.s32.totalorder %s14, 1
    %p60 = por %p58, %p59
    %p61 = scmp.ne.s32.totalorder %s52, %s53
    %p62 = scmp.eq.s32.totalorder %s14, 0
    %p63 = por %p61, %p62
    %p64 = scmp.ne.s32.totalorder %s52, %s53
    %p65 = scmp.eq.s32.totalorder %s15, 1
    %p66 = por %p64, %p65
    %p68 = scmp.ne.s32.totalorder %s53, %s67
    %p69 = scmp.eq.s32.totalorder %s15, 0
    %p70 = por %p68, %p69
    %s71 = ssub.s32 %s16, %s28
    %s72 = ssub.s32 %s17, %s24
    %s73 = sor.u32 %s71, %s72
    %p74 = scmp.eq.s32.totalorder %s73, 0
    %s76 = sadd.s32 %s75, 1
    %s77 = scalar_select %p74, %s75, %s76
    %p80 = pneg %p74
    %p81 = scmp.eq.s32.totalorder %s9, 1
    %p82 = por %p80, %p81
    %p83 = scmp.ne.s32.totalorder %s75, %s78
    %p84 = scmp.eq.s32.totalorder %s9, 0
    %p85 = por %p83, %p84
    %p86 = scmp.ne.s32.totalorder %s75, %s78
    %p87 = scmp.eq.s32.totalorder %s14, 1
    %p88 = por %p86, %p87
    %p89 = scmp.ne.s32.totalorder %s78, %s79
    %p90 = scmp.eq.s32.totalorder %s14, 0
    %p91 = por %p89, %p90
    %p92 = scmp.ne.s32.totalorder %s78, %s79
    %p93 = scmp.eq.s32.totalorder %s15, 1
    %p94 = por %p92, %p93
    %p96 = scmp.ne.s32.totalorder %s79, %s95
    %p97 = scmp.eq.s32.totalorder %s15, 0
    %p98 = por %p96, %p97
    %s99 = ssub.s32 %s16, %s28
    %s100 = ssub.s32 %s17, %s24
    %s101 = sor.u32 %s99, %s100
    %p102 = scmp.eq.s32.totalorder %s101, 0
    %s104 = sadd.s32 %s103, 1
    %s105 = scalar_select %p102, %s103, %s104
    %p108 = pneg %p102
    %p109 = scmp.eq.s32.totalorder %s9, 1
    %p110 = por %p108, %p109
    %p111 = scmp.ne.s32.totalorder %s103, %s106
    %p112 = scmp.eq.s32.totalorder %s9, 0
    %p113 = por %p111, %p112
    %p114 = scmp.ne.s32.totalorder %s103, %s106
    %p115 = scmp.eq.s32.totalorder %s14, 1
    %p116 = por %p114, %p115
    %p117 = scmp.ne.s32.totalorder %s106, %s107
    %p118 = scmp.eq.s32.totalorder %s14, 0
    %p119 = por %p117, %p118
    %p120 = scmp.ne.s32.totalorder %s106, %s107
    %p121 = scmp.eq.s32.totalorder %s15, 1
    %p122 = por %p120, %p121
    %p124 = scmp.ne.s32.totalorder %s107, %s123
    %p125 = scmp.eq.s32.totalorder %s15, 0
    %p126 = por %p124, %p125
    %p127 = scmp.le.s32.totalorder 1, %s9
    %p128 = scmp.lt.s32.totalorder %s9, 3
    %p129 = pnand %p127, %p128
    %p130 = pneg %p129
    // Predicated region
    $region9: #{conv_block_forward.5} parent=5 // pred_check
      _
    $region10: #{conv_block_forward.5} parent=5 // pred_check_branch
      %132 = sbr.rel (%p129) target = $region12
    $region11: #{conv_block_forward.5} parent=5 // pred_region
      %s133 = ssub.s32 %s9, 1
      // Predicated region
      $region13: #{conv_block_forward.5} parent=11 // pred_check
        %p134 = pneg %p42
      $region14: #{conv_block_forward.5} parent=11 // pred_check_branch
        %136 = sbr.rel (%p134) target = $region16
      $region15: #{conv_block_forward.5} parent=11 // pred_region
        _
      $region16: #{conv_block_forward.5} parent=11 // pred_fallthru
        _
      // Predicated region
      $region17: #{conv_block_forward.5} parent=11 // pred_check
        %p137 = pneg %p63
      $region18: #{conv_block_forward.5} parent=11 // pred_check_branch
        %139 = sbr.rel (%p137) target = $region20
      $region19: #{conv_block_forward.5} parent=11 // pred_region
        _
      $region20: #{conv_block_forward.5} parent=11 // pred_fallthru
        _
    $region12: #{conv_block_forward.5} parent=5 // pred_fallthru
      _
    %p140 = scmp.lt.s32.totalorder %s9, 2
    // Predicated region
    $region21: #{conv_block_forward.5} parent=5 // pred_check
      %p141 = pneg %p140
    $region22: #{conv_block_forward.5} parent=5 // pred_check_branch
      %143 = sbr.rel (%p141) target = $region24
    $region23: #{conv_block_forward.5} parent=5 // pred_region
      // Predicated region
      $region25: #{conv_block_forward.5} parent=23 // pred_check
        %p144 = pneg %p85
      $region26: #{conv_block_forward.5} parent=23 // pred_check_branch
        %146 = sbr.rel (%p144) target = $region28
      $region27: #{conv_block_forward.5} parent=23 // pred_region
        %s147 = smul.u32 8, %s17
        %p148 = scmp.lt.s32.totalorder %s16, 1
        %s149 = scalar_select %p148, %s16, 1
        %p150 = scmp.lt.s32.totalorder %s147, 7
        %s151 = scalar_select %p150, %s147, 7
        %s152 = smul.addr %s151, 2
        %s153 = smul.addr %s149, 16
        %s154 = sadd.s32 %s152, %s153
        %s155 = smul.addr %s154, 4
        %s156 = scalar_lea.vmem %s2, %s155
        %s157 = smul.u32 8, %s17
      $region28: #{conv_block_forward.5} parent=23 // pred_fallthru
        _
    $region24: #{conv_block_forward.5} parent=5 // pred_fallthru
      _
    %p158 = scmp.le.s32.totalorder 1, %s9
    %p159 = scmp.lt.s32.totalorder %s9, 3
    %p160 = pnand %p158, %p159
    %p161 = pneg %p160
    // Predicated region
    $region29: #{conv_block_forward.5} parent=5 // pred_check
      _
    $region30: #{conv_block_forward.5} parent=5 // pred_check_branch
      %163 = sbr.rel (%p160) target = $region32
    $region31: #{conv_block_forward.5} parent=5 // pred_region
      %s164 = ssub.s32 %s9, 1
      %p165 = pneg %p42
      %p166 = pneg %p39
      %p167 = pneg %p63
      %p168 = pneg %p60
      %s169 = smul.u32 8, %s19
      %p170 = scmp.lt.s32.totalorder %s18, 1
      %s171 = scalar_select %p170, %s18, 1
      %p172 = scmp.lt.s32.totalorder %s169, 7
      %s173 = scalar_select %p172, %s169, 7
      %s174 = smul.addr %s173, 2
      %s175 = smul.addr %s171, 16
      %s176 = sadd.s32 %s174, %s175
      %s177 = smul.addr %s176, 4
      %s178 = scalar_lea.vmem %s2, %s177
      %p179 = pneg %p91
      %p180 = pneg %p88
      %p181 = pneg %p119
      %p182 = pneg %p116
      %s183 = smul.u32 8, %s19
      %p184 = scmp.lt.s32.totalorder %s18, 1
      %s185 = scalar_select %p184, %s18, 1
      %p186 = scmp.lt.s32.totalorder %s183, 7
      %s187 = scalar_select %p186, %s183, 7
      %s188 = smul.addr %s185, 8
      %s189 = sadd.s32 %s187, %s188
      %s190 = smul.addr %s189, 8
      %s191 = scalar_lea.vmem %s3, %s190
      %s192 = smul.u32 8, %s19
      %p193 = scmp.lt.s32.totalorder %s18, 1
      %s194 = scalar_select %p193, %s18, 1
      %p195 = scmp.lt.s32.totalorder %s192, 7
      %s196 = scalar_select %p195, %s192, 7
      %s197 = smul.addr %s196, 2
      %s198 = smul.addr %s194, 16
      %s199 = sadd.s32 %s197, %s198
      %s200 = smul.addr %s199, 4
      %s201 = scalar_lea.vmem %s2, %s200
      %s202 = smul.u32 8, %s19
      %s203 = smul.u32 8, %s19
      %p204 = scmp.lt.s32.totalorder %s18, 1
      %s205 = scalar_select %p204, %s18, 1
      %p206 = scmp.lt.s32.totalorder %s203, 7
      %s207 = scalar_select %p206, %s203, 7
      %s208 = smul.addr %s205, 8
      %s209 = sadd.s32 %s207, %s208
      %s210 = smul.addr %s209, 8
      %s211 = scalar_lea.vmem %s3, %s210
      %s212 = smul.u32 8, %s19
      %v213 = vld [vmem:[%s201] sm:$0xf]
      %v214 = vld [vmem:[%s201 + $0x4] sm:$0xf]
      %v215 = vld [vmem:[%s201 + $0x8] sm:$0xf]
      %v216 = vld [vmem:[%s201 + $0xc] sm:$0xf]
      %v217 = vld [vmem:[%s201 + $0x10] sm:$0xf]
      %v218 = vld [vmem:[%s201 + $0x14] sm:$0xf]
      %v219 = vld [vmem:[%s201 + $0x18] sm:$0xf]
      %v220 = vld [vmem:[%s201 + $0x1c] sm:$0xf]
      %v221 = vld [vmem:[%s201 + $0x20] sm:$0xf]
      %v222 = vld [vmem:[%s201 + $0x24] sm:$0xf]
      %v223 = vld [vmem:[%s201 + $0x28] sm:$0xf]
      %v224 = vld [vmem:[%s201 + $0x2c] sm:$0xf]
      %v225 = vld [vmem:[%s201 + $0x30] sm:$0xf]
      %v226 = vld [vmem:[%s201 + $0x34] sm:$0xf]
      %v227 = vld [vmem:[%s201 + $0x38] sm:$0xf]
      %v228 = vld [vmem:[%s201 + $0x3c] sm:$0xf]
      %v229 = vunpack.c.l.bf16 %v213
      %v230 = vunpack.c.l.bf16 %v214
      %v231 = vunpack.c.l.bf16 %v215
      %v232 = vunpack.c.l.bf16 %v216
      %v233 = vunpack.c.l.bf16 %v217
      %v234 = vunpack.c.l.bf16 %v218
      %v235 = vunpack.c.l.bf16 %v219
      %v236 = vunpack.c.l.bf16 %v220
      %v237 = vunpack.c.l.bf16 %v221
      %v238 = vunpack.c.l.bf16 %v222
      %v239 = vunpack.c.l.bf16 %v223
      %v240 = vunpack.c.l.bf16 %v224
      %v241 = vunpack.c.l.bf16 %v225
      %v242 = vunpack.c.l.bf16 %v226
      %v243 = vunpack.c.l.bf16 %v227
      %v244 = vunpack.c.l.bf16 %v228
      %v245 = vld [vmem:[%s0] sm:$0x1]
      %v247 = vperm.slane %v245, 0
      %v249 = vadd.f32 %v229, %v247
      %v250 = vadd.f32 %v230, %v247
      %v251 = vadd.f32 %v231, %v247
      %v252 = vadd.f32 %v232, %v247
      %v253 = vadd.f32 %v233, %v247
      %v254 = vadd.f32 %v234, %v247
      %v255 = vadd.f32 %v235, %v247
      %v256 = vadd.f32 %v236, %v247
      %v257 = vadd.f32 %v237, %v247
      %v258 = vadd.f32 %v238, %v247
      %v259 = vadd.f32 %v239, %v247
      %v260 = vadd.f32 %v240, %v247
      %v261 = vadd.f32 %v241, %v247
      %v262 = vadd.f32 %v242, %v247
      %v263 = vadd.f32 %v243, %v247
      %v264 = vadd.f32 %v244, %v247
      %v265 = vmax.f32 %v249, 0.0
      %v266 = vmax.f32 %v250, 0.0
      %v267 = vmax.f32 %v251, 0.0
      %v268 = vmax.f32 %v252, 0.0
      %v269 = vmax.f32 %v253, 0.0
      %v270 = vmax.f32 %v254, 0.0
      %v271 = vmax.f32 %v255, 0.0
      %v272 = vmax.f32 %v256, 0.0
      %v273 = vmax.f32 %v257, 0.0
      %v274 = vmax.f32 %v258, 0.0
      %v275 = vmax.f32 %v259, 0.0
      %v276 = vmax.f32 %v260, 0.0
      %v277 = vmax.f32 %v261, 0.0
      %v278 = vmax.f32 %v262, 0.0
      %v279 = vmax.f32 %v263, 0.0
      %v280 = vmax.f32 %v264, 0.0
      %v281 = vadd.f32 %v265, %v266
      %v282 = vadd.f32 %v267, %v268
      %v283 = vadd.f32 %v269, %v270
      %v284 = vadd.f32 %v271, %v272
      %v285 = vadd.f32 %v273, %v274
      %v286 = vadd.f32 %v275, %v276
      %v287 = vadd.f32 %v277, %v278
      %v288 = vadd.f32 %v279, %v280
      %297 = vrot.lane.b32.xlu0 %v281, 120
      %v298 = vpop.permute.xlu0 %297
      %299 = vrot.lane.b32.xlu0 %v282, 120
      %v300 = vpop.permute.xlu0 %299
      %301 = vrot.lane.b32.xlu0 %v283, 120
      %v302 = vpop.permute.xlu0 %301
      %303 = vrot.lane.b32.xlu0 %v284, 120
      %v304 = vpop.permute.xlu0 %303
      %305 = vrot.lane.b32.xlu0 %v285, 120
      %v306 = vpop.permute.xlu0 %305
      %307 = vrot.lane.b32.xlu0 %v286, 120
      %v308 = vpop.permute.xlu0 %307
      %309 = vrot.lane.b32.xlu0 %v287, 120
      %v310 = vpop.permute.xlu0 %309
      %311 = vrot.lane.b32.xlu0 %v288, 120
      %v312 = vpop.permute.xlu0 %311
      %v321 = vadd.f32 %v281, %v298
      %v322 = vadd.f32 %v282, %v300
      %v323 = vadd.f32 %v283, %v302
      %v324 = vadd.f32 %v284, %v304
      %v325 = vadd.f32 %v285, %v306
      %v326 = vadd.f32 %v286, %v308
      %v327 = vadd.f32 %v287, %v310
      %v328 = vadd.f32 %v288, %v312
      %v329 = vld [vmem:[%s1] sm:$0x1]
      %v331 = vperm.slane %v329, 0
      %v333 = vmul.f32 %v321, %v331
      %v334 = vmul.f32 %v322, %v331
      %v335 = vmul.f32 %v323, %v331
      %v336 = vmul.f32 %v324, %v331
      %v337 = vmul.f32 %v325, %v331
      %v338 = vmul.f32 %v326, %v331
      %v339 = vmul.f32 %v327, %v331
      %v340 = vmul.f32 %v328, %v331
      %vm341 = vcmask 64512
      %342 = vst.msk [vmem:[%s211] sm:$0xff] %vm341, %v333
      %343 = vst.msk [vmem:[%s211 + $0x8] sm:$0xff] %vm341, %v334
      %344 = vst.msk [vmem:[%s211 + $0x10] sm:$0xff] %vm341, %v335
      %345 = vst.msk [vmem:[%s211 + $0x18] sm:$0xff] %vm341, %v336
      %346 = vst.msk [vmem:[%s211 + $0x20] sm:$0xff] %vm341, %v337
      %347 = vst.msk [vmem:[%s211 + $0x28] sm:$0xff] %vm341, %v338
      %348 = vst.msk [vmem:[%s211 + $0x30] sm:$0xff] %vm341, %v339
      %349 = vst.msk [vmem:[%s211 + $0x38] sm:$0xff] %vm341, %v340
      %s350 = smul.u32 8, %s19
      %p351 = scmp.lt.s32.totalorder %s18, 1
      %s352 = scalar_select %p351, %s18, 1
      %p353 = scmp.lt.s32.totalorder %s350, 7
      %s354 = scalar_select %p353, %s350, 7
      %s355 = smul.addr %s352, 8
      %s356 = sadd.s32 %s354, %s355
      %s357 = smul.addr %s356, 8
      %s358 = scalar_lea.vmem %s3, %s357
      // Predicated region
      $region33: #{conv_block_forward.5} parent=31 // pred_check
        %p359 = pneg %p116
      $region34: #{conv_block_forward.5} parent=31 // pred_check_branch
        %361 = sbr.rel (%p359) target = $region36
      $region35: #{conv_block_forward.5} parent=31 // pred_region
        %s362 = smul.u32 8, %s19
      $region36: #{conv_block_forward.5} parent=31 // pred_fallthru
        _
    $region32: #{conv_block_forward.5} parent=5 // pred_fallthru
      _
    %p363 = scmp.le.s32.totalorder 2, %s9
    // Predicated region
    $region37: #{conv_block_forward.5} parent=5 // pred_check
      %p364 = pneg %p363
    $region38: #{conv_block_forward.5} parent=5 // pred_check_branch
      %366 = sbr.rel (%p364) target = $region40
    $region39: #{conv_block_forward.5} parent=5 // pred_region
      %s367 = ssub.s32 %s9, 2
      // Predicated region
      $region41: #{conv_block_forward.5} parent=39 // pred_check
        %p368 = pneg %p122
      $region42: #{conv_block_forward.5} parent=39 // pred_check_branch
        %370 = sbr.rel (%p368) target = $region44
      $region43: #{conv_block_forward.5} parent=39 // pred_region
        %s371 = smul.u32 8, %s21
        %p372 = scmp.lt.s32.totalorder %s20, 1
        %s373 = scalar_select %p372, %s20, 1
        %p374 = scmp.lt.s32.totalorder %s371, 7
        %s375 = scalar_select %p374, %s371, 7
        %s376 = smul.addr %s373, 8
        %s377 = sadd.s32 %s375, %s376
        %s378 = smul.addr %s377, 8
        %s379 = scalar_lea.vmem %s3, %s378
      $region44: #{conv_block_forward.5} parent=39 // pred_fallthru
        _
    $region40: #{conv_block_forward.5} parent=5 // pred_fallthru
      _
  $region6: #{conv_block_forward.5} parent=0 // loop_footer
    %s13 = sadd.s32 1, %s9
  $region7: #{conv_block_forward.5} parent=0 // loop_footer_branch
    %8 = sbr.rel target = $region3
  $region8: #{conv_block_forward.5} parent=0 // loop_exit
    _

// kernel: conv_block_forward.3
$region0: #{conv_block_forward.3}
  #allocation0 [shape = 'u32[]', space=smem, size = 0x4, offset = 0x4, fixed_abs, tag = 'smem constant byte address 0x4 - core index']
  #allocation1 [shape = 'u32[72,128]{1,0:T(1,128)}', space=vmem, size = 0x9000, scoped, tag = 'internal scratch']
  %s0 = inlined_call_operand.vmem [shape: f32[1,1,4], index: 0, kind: input, shape index: {}]
  %s1 = inlined_call_operand.vmem [shape: bf16[2,16,16,4], index: 1, kind: input, shape index: {}, may-alias: {1,2,3}]
  %s2 = inlined_call_operand.vmem [shape: bf16[2,16,16,4], index: 2, kind: input, shape index: {}, may-alias: {1,2,3}]
  %s3 = inlined_call_operand.vmem [shape: bf16[2,16,16,4], index: 3, kind: input, shape index: {}, may-alias: {1,2,3}]
  %s4 = inlined_call_operand.vmem [shape: bf16[3,12,8], index: 4, kind: input, shape index: {}]
  %s5 = inlined_call_operand.vmem [shape: bf16[2,16,16,8], index: 5, kind: output, shape index: {0}]
  %s6 = inlined_call_operand.vmem [shape: f32[2,2,2,8], index: 6, kind: output, shape index: {1}]
  %7 = xla_tuple %s5, %s6
  %s8 = sld [smem:[#allocation0]]
  $region61: #{conv_block_forward.3} parent=0
    _
  %s10 = ssub.s32 1, %s8
  %s11 = scalar_select 0, %s10, %s8
  loop: start=0, step=1, limit=6
  $region2: #{conv_block_forward.3} parent=0 // loop_pre_header
    _
  $region3: #{conv_block_forward.3} parent=0 // loop_header
    %s13 = sphi 0, %s17
    %p14 = scmp.ge.s32.totalorder %s13, 6
    %s20 = sphi 0, %s32
    %s21 = sphi 0, %s28
    %s22 = sphi 0, %s20
    %s23 = sphi 0, %s21
    %s24 = sphi 0, %s22
    %s25 = sphi 0, %s23
    %s33 = sphi 0, %s33
    %s35 = sphi 0, %s33
    %s36 = sphi 0, %s35
    %s50 = sphi 0, %s36
    %s66 = sphi 0, %s68
    %s69 = sphi 0, %s66
    %s70 = sphi 0, %s69
    %s86 = sphi 0, %s70
    %s94 = sphi 0, %s96
    %s97 = sphi 0, %s94
    %s98 = sphi 0, %s97
    %s114 = sphi 0, %s98
    %s130 = sphi 0, %s132
    %s133 = sphi 0, %s130
    %s134 = sphi 0, %s133
    %s150 = sphi 0, %s134
    %s154 = sphi 0, %s154
    %s156 = sphi 0, %s154
    %s157 = sphi 0, %s156
    %s171 = sphi 0, %s157
    %s179 = sphi 0, %s181
    %s182 = sphi 0, %s179
    %s183 = sphi 0, %s182
    %s199 = sphi 0, %s183
    %s207 = sphi 0, %s209
    %s210 = sphi 0, %s207
    %s211 = sphi 0, %s210
    %s227 = sphi 0, %s211
  $region4: #{conv_block_forward.3} parent=0 // loop_header_branch
    %16 = sbr.rel (%p14) target = $region8
  $region5: #{conv_block_forward.3} parent=0 // loop_body
    %s18 = ssub.s32 %s13, 1
    %s19 = ssub.s32 %s13, 2
    %s26 = sadd.s32 1, %s21
    %p27 = scmp.ge.s32.totalorder %s26, 2
    %s28 = scalar_select %p27, 0, %s26
    %s29 = sadd.s32 1, %s20
    %s30 = scalar_select %p27, %s29, %s20
    %p31 = scmp.ge.s32.totalorder %s30, 2
    %s32 = scalar_select %p31, 0, %s30
    %s34 = sadd.s32 %s33, 1
    %p37 = scmp.eq.s32.totalorder %s13, 3
    %p38 = scmp.ne.s32.totalorder %s33, %s35
    %p39 = scmp.eq.s32.totalorder %s13, 0
    %p40 = por %p38, %p39
    %p41 = scmp.ne.s32.totalorder %s33, %s35
    %p42 = scmp.eq.s32.totalorder %s18, 3
    %p43 = por %p41, %p42
    %p44 = scmp.ne.s32.totalorder %s35, %s36
    %p45 = scmp.eq.s32.totalorder %s18, 0
    %p46 = por %p44, %p45
    %p47 = scmp.ne.s32.totalorder %s35, %s36
    %p48 = scmp.eq.s32.totalorder %s19, 3
    %p49 = por %p47, %p48
    %p51 = scmp.ne.s32.totalorder %s36, %s50
    %p52 = scmp.eq.s32.totalorder %s19, 0
    %p53 = por %p51, %p52
    %s54 = smul.u32 %s21, 8
    %s55 = ssub.s32 %s54, 1
    %p56 = scmp.gt.s32.totalorder %s55, 0
    %s57 = scalar_select %p56, %s55, 0
    %s58 = smul.u32 %s28, 8
    %s59 = ssub.s32 %s58, 1
    %p60 = scmp.gt.s32.totalorder %s59, 0
    %s61 = scalar_select %p60, %s59, 0
    %s62 = ssub.s32 %s20, %s32
    %s63 = ssub.s32 %s57, %s61
    %s64 = sor.u32 %s62, %s63
    %p65 = scmp.eq.s32.totalorder %s64, 0
    %s67 = sadd.s32 %s66, 1
    %s68 = scalar_select %p65, %s66, %s67
    %p71 = pneg %p65
    %p72 = scmp.eq.s32.totalorder %s13, 3
    %p73 = por %p71, %p72
    %p74 = scmp.ne.s32.totalorder %s66, %s69
    %p75 = scmp.eq.s32.totalorder %s13, 0
    %p76 = por %p74, %p75
    %p77 = scmp.ne.s32.totalorder %s66, %s69
    %p78 = scmp.eq.s32.totalorder %s18, 3
    %p79 = por %p77, %p78
    %p80 = scmp.ne.s32.totalorder %s69, %s70
    %p81 = scmp.eq.s32.totalorder %s18, 0
    %p82 = por %p80, %p81
    %p83 = scmp.ne.s32.totalorder %s69, %s70
    %p84 = scmp.eq.s32.totalorder %s19, 3
    %p85 = por %p83, %p84
    %p87 = scmp.ne.s32.totalorder %s70, %s86
    %p88 = scmp.eq.s32.totalorder %s19, 0
    %p89 = por %p87, %p88
    %s90 = ssub.s32 %s20, %s32
    %s91 = ssub.s32 %s21, %s28
    %s92 = sor.u32 %s90, %s91
    %p93 = scmp.eq.s32.totalorder %s92, 0
    %s95 = sadd.s32 %s94, 1
    %s96 = scalar_select %p93, %s94, %s95
    %p99 = pneg %p93
    %p100 = scmp.eq.s32.totalorder %s13, 3
    %p101 = por %p99, %p100
    %p102 = scmp.ne.s32.totalorder %s94, %s97
    %p103 = scmp.eq.s32.totalorder %s13, 0
    %p104 = por %p102, %p103
    %p105 = scmp.ne.s32.totalorder %s94, %s97
    %p106 = scmp.eq.s32.totalorder %s18, 3
    %p107 = por %p105, %p106
    %p108 = scmp.ne.s32.totalorder %s97, %s98
    %p109 = scmp.eq.s32.totalorder %s18, 0
    %p110 = por %p108, %p109
    %p111 = scmp.ne.s32.totalorder %s97, %s98
    %p112 = scmp.eq.s32.totalorder %s19, 3
    %p113 = por %p111, %p112
    %p115 = scmp.ne.s32.totalorder %s98, %s114
    %p116 = scmp.eq.s32.totalorder %s19, 0
    %p117 = por %p115, %p116
    %s118 = sadd.s32 %s21, 1
    %s119 = smul.u32 %s118, 8
    %p120 = scmp.lt.s32.totalorder %s119, 15
    %s121 = scalar_select %p120, %s119, 15
    %s122 = sadd.s32 %s28, 1
    %s123 = smul.u32 %s122, 8
    %p124 = scmp.lt.s32.totalorder %s123, 15
    %s125 = scalar_select %p124, %s123, 15
    %s126 = ssub.s32 %s20, %s32
    %s127 = ssub.s32 %s121, %s125
    %s128 = sor.u32 %s126, %s127
    %p129 = scmp.eq.s32.totalorder %s128, 0
    %s131 = sadd.s32 %s130, 1
    %s132 = scalar_select %p129, %s130, %s131
    %p135 = pneg %p129
    %p136 = scmp.eq.s32.totalorder %s13, 3
    %p137 = por %p135, %p136
    %p138 = scmp.ne.s32.totalorder %s130, %s133
    %p139 = scmp.eq.s32.totalorder %s13, 0
    %p140 = por %p138, %p139
    %p141 = scmp.ne.s32.totalorder %s130, %s133
    %p142 = scmp.eq.s32.totalorder %s18, 3
    %p143 = por %p141, %p142
    %p144 = scmp.ne.s32.totalorder %s133, %s134
    %p145 = scmp.eq.s32.totalorder %s18, 0
    %p146 = por %p144, %p145
    %p147 = scmp.ne.s32.totalorder %s133, %s134
    %p148 = scmp.eq.s32.totalorder %s19, 3
    %p149 = por %p147, %p148
    %p151 = scmp.ne.s32.totalorder %s134, %s150
    %p152 = scmp.eq.s32.totalorder %s19, 0
    %p153 = por %p151, %p152
    %s155 = sadd.s32 %s154, 1
    %p158 = scmp.eq.s32.totalorder %s13, 3
    %p159 = scmp.ne.s32.totalorder %s154, %s156
    %p160 = scmp.eq.s32.totalorder %s13, 0
    %p161 = por %p159, %p160
    %p162 = scmp.ne.s32.totalorder %s154, %s156
    %p163 = scmp.eq.s32.totalorder %s18, 3
    %p164 = por %p162, %p163
    %p165 = scmp.ne.s32.totalorder %s156, %s157
    %p166 = scmp.eq.s32.totalorder %s18, 0
    %p167 = por %p165, %p166
    %p168 = scmp.ne.s32.totalorder %s156, %s157
    %p169 = scmp.eq.s32.totalorder %s19, 3
    %p170 = por %p168, %p169
    %p172 = scmp.ne.s32.totalorder %s157, %s171
    %p173 = scmp.eq.s32.totalorder %s19, 0
    %p174 = por %p172, %p173
    %s175 = ssub.s32 %s20, %s32
    %s176 = ssub.s32 %s21, %s28
    %s177 = sor.u32 %s175, %s176
    %p178 = scmp.eq.s32.totalorder %s177, 0
    %s180 = sadd.s32 %s179, 1
    %s181 = scalar_select %p178, %s179, %s180
    %p184 = pneg %p178
    %p185 = scmp.eq.s32.totalorder %s13, 3
    %p186 = por %p184, %p185
    %p187 = scmp.ne.s32.totalorder %s179, %s182
    %p188 = scmp.eq.s32.totalorder %s13, 0
    %p189 = por %p187, %p188
    %p190 = scmp.ne.s32.totalorder %s179, %s182
    %p191 = scmp.eq.s32.totalorder %s18, 3
    %p192 = por %p190, %p191
    %p193 = scmp.ne.s32.totalorder %s182, %s183
    %p194 = scmp.eq.s32.totalorder %s18, 0
    %p195 = por %p193, %p194
    %p196 = scmp.ne.s32.totalorder %s182, %s183
    %p197 = scmp.eq.s32.totalorder %s19, 3
    %p198 = por %p196, %p197
    %p200 = scmp.ne.s32.totalorder %s183, %s199
    %p201 = scmp.eq.s32.totalorder %s19, 0
    %p202 = por %p200, %p201
    %s203 = ssub.s32 %s20, %s32
    %s204 = ssub.s32 %s21, %s28
    %s205 = sor.u32 %s203, %s204
    %p206 = scmp.eq.s32.totalorder %s205, 0
    %s208 = sadd.s32 %s207, 1
    %s209 = scalar_select %p206, %s207, %s208
    %p212 = pneg %p206
    %p213 = scmp.eq.s32.totalorder %s13, 3
    %p214 = por %p212, %p213
    %p215 = scmp.ne.s32.totalorder %s207, %s210
    %p216 = scmp.eq.s32.totalorder %s13, 0
    %p217 = por %p215, %p216
    %p218 = scmp.ne.s32.totalorder %s207, %s210
    %p219 = scmp.eq.s32.totalorder %s18, 3
    %p220 = por %p218, %p219
    %p221 = scmp.ne.s32.totalorder %s210, %s211
    %p222 = scmp.eq.s32.totalorder %s18, 0
    %p223 = por %p221, %p222
    %p224 = scmp.ne.s32.totalorder %s210, %s211
    %p225 = scmp.eq.s32.totalorder %s19, 3
    %p226 = por %p224, %p225
    %p228 = scmp.ne.s32.totalorder %s211, %s227
    %p229 = scmp.eq.s32.totalorder %s19, 0
    %p230 = por %p228, %p229
    %p231 = scmp.le.s32.totalorder 1, %s13
    %p232 = scmp.lt.s32.totalorder %s13, 5
    %p233 = pnand %p231, %p232
    %p234 = pneg %p233
    // Predicated region
    $region9: #{conv_block_forward.3} parent=5 // pred_check
      _
    $region10: #{conv_block_forward.3} parent=5 // pred_check_branch
      %236 = sbr.rel (%p233) target = $region12
    $region11: #{conv_block_forward.3} parent=5 // pred_region
      %s237 = ssub.s32 %s13, 1
      // Predicated region
      $region13: #{conv_block_forward.3} parent=11 // pred_check
        %p238 = pneg %p46
      $region14: #{conv_block_forward.3} parent=11 // pred_check_branch
        %240 = sbr.rel (%p238) target = $region16
      $region15: #{conv_block_forward.3} parent=11 // pred_region
        _
      $region16: #{conv_block_forward.3} parent=11 // pred_fallthru
        _
      // Predicated region
      $region17: #{conv_block_forward.3} parent=11 // pred_check
        %p241 = pneg %p167
      $region18: #{conv_block_forward.3} parent=11 // pred_check_branch
        %243 = sbr.rel (%p241) target = $region20
      $region19: #{conv_block_forward.3} parent=11 // pred_region
        _
      $region20: #{conv_block_forward.3} parent=11 // pred_fallthru
        _
    $region12: #{conv_block_forward.3} parent=5 // pred_fallthru
      _
    %p244 = scmp.lt.s32.totalorder %s13, 4
    // Predicated region
    $region21: #{conv_block_forward.3} parent=5 // pred_check
      %p245 = pneg %p244
    $region22: #{conv_block_forward.3} parent=5 // pred_check_branch
      %247 = sbr.rel (%p245) target = $region24
    $region23: #{conv_block_forward.3} parent=5 // pred_region
      // Predicated region
      $region25: #{conv_block_forward.3} parent=23 // pred_check
        %p248 = pneg %p76
      $region26: #{conv_block_forward.3} parent=23 // pred_check_branch
        %250 = sbr.rel (%p248) target = $region28
      $region27: #{conv_block_forward.3} parent=23 // pred_region
        %s251 = smul.u32 %s21, 8
        %s252 = ssub.s32 %s251, 1
        %p253 = scmp.gt.s32.totalorder %s252, 0
        %s254 = scalar_select %p253, %s252, 0
        %p255 = scmp.lt.s32.totalorder %s20, 1
        %s256 = scalar_select %p255, %s20, 1
        %p257 = scmp.lt.s32.totalorder %s254, 15
        %s258 = scalar_select %p257, %s254, 15
        %s259 = smul.addr %s258, 2
        %s260 = smul.addr %s256, 32
        %s261 = sadd.s32 %s259, %s260
        %s262 = smul.addr %s261, 4
        %s263 = scalar_lea.vmem %s1, %s262
        %s264 = smul.u32 %s21, 8
        %s265 = ssub.s32 %s264, 1
        %p266 = scmp.gt.s32.totalorder %s265, 0
        %s267 = scalar_select %p266, %s265, 0
      $region28: #{conv_block_forward.3} parent=23 // pred_fallthru
        _
      // Predicated region
      $region29: #{conv_block_forward.3} parent=23 // pred_check
        %p268 = pneg %p104
      $region30: #{conv_block_forward.3} parent=23 // pred_check_branch
        %270 = sbr.rel (%p268) target = $region32
      $region31: #{conv_block_forward.3} parent=23 // pred_region
        %s271 = smul.u32 8, %s21
        %p272 = scmp.lt.s32.totalorder %s20, 1
        %s273 = scalar_select %p272, %s20, 1
        %p274 = scmp.lt.s32.totalorder %s271, 15
        %s275 = scalar_select %p274, %s271, 15
        %s276 = smul.addr %s275, 2
        %s277 = smul.addr %s273, 32
        %s278 = sadd.s32 %s276, %s277
        %s279 = smul.addr %s278, 4
        %s280 = scalar_lea.vmem %s2, %s279
        %s281 = smul.u32 8, %s21
      $region32: #{conv_block_forward.3} parent=23 // pred_fallthru
        _
      // Predicated region
      $region33: #{conv_block_forward.3} parent=23 // pred_check
        %p282 = pneg %p140
      $region34: #{conv_block_forward.3} parent=23 // pred_check_branch
        %284 = sbr.rel (%p282) target = $region36
      $region35: #{conv_block_forward.3} parent=23 // pred_region
        %s285 = sadd.s32 %s21, 1
        %s286 = smul.u32 %s285, 8
        %p287 = scmp.lt.s32.totalorder %s286, 15
        %s288 = scalar_select %p287, %s286, 15
        %p289 = scmp.lt.s32.totalorder %s20, 1
        %s290 = scalar_select %p289, %s20, 1
        %p291 = scmp.lt.s32.totalorder %s288, 15
        %s292 = scalar_select %p291, %s288, 15
        %s293 = smul.addr %s292, 2
        %s294 = smul.addr %s290, 32
        %s295 = sadd.s32 %s293, %s294
        %s296 = smul.addr %s295, 4
        %s297 = scalar_lea.vmem %s3, %s296
        %s298 = sadd.s32 %s21, 1
        %s299 = smul.u32 %s298, 8
        %p300 = scmp.lt.s32.totalorder %s299, 15
        %s301 = scalar_select %p300, %s299, 15
      $region36: #{conv_block_forward.3} parent=23 // pred_fallthru
        _
    $region24: #{conv_block_forward.3} parent=5 // pred_fallthru
      _
    %p302 = scmp.le.s32.totalorder 1, %s13
    %p303 = scmp.lt.s32.totalorder %s13, 5
    %p304 = pnand %p302, %p303
    %p305 = pneg %p304
    // Predicated region
    $region37: #{conv_block_forward.3} parent=5 // pred_check
      _
    $region38: #{conv_block_forward.3} parent=5 // pred_check_branch
      %307 = sbr.rel (%p304) target = $region40
    $region39: #{conv_block_forward.3} parent=5 // pred_region
      %s308 = ssub.s32 %s13, 1
      %p309 = pneg %p46
      %p310 = pneg %p43
      %s311 = smul.u32 %s23, 8
      %s312 = ssub.s32 %s311, 1
      %p313 = scmp.gt.s32.totalorder %s312, 0
      %s314 = scalar_select %p313, %s312, 0
      %p315 = scmp.lt.s32.totalorder %s22, 1
      %s316 = scalar_select %p315, %s22, 1
      %p317 = scmp.lt.s32.totalorder %s314, 15
      %s318 = scalar_select %p317, %s314, 15
      %s319 = smul.addr %s318, 2
      %s320 = smul.addr %s316, 32
      %s321 = sadd.s32 %s319, %s320
      %s322 = smul.addr %s321, 4
      %s323 = scalar_lea.vmem %s1, %s322
      %p324 = pneg %p82
      %p325 = pneg %p79
      %s326 = smul.u32 8, %s23
      %p327 = scmp.lt.s32.totalorder %s22, 1
      %s328 = scalar_select %p327, %s22, 1
      %p329 = scmp.lt.s32.totalorder %s326, 15
      %s330 = scalar_select %p329, %s326, 15
      %s331 = smul.addr %s330, 2
      %s332 = smul.addr %s328, 32
      %s333 = sadd.s32 %s331, %s332
      %s334 = smul.addr %s333, 4
      %s335 = scalar_lea.vmem %s2, %s334
      %p336 = pneg %p110
      %p337 = pneg %p107
      %s338 = sadd.s32 %s23, 1
      %s339 = smul.u32 %s338, 8
      %p340 = scmp.lt.s32.totalorder %s339, 15
      %s341 = scalar_select %p340, %s339, 15
      %p342 = scmp.lt.s32.totalorder %s22, 1
      %s343 = scalar_select %p342, %s22, 1
      %p344 = scmp.lt.s32.totalorder %s341, 15
      %s345 = scalar_select %p344, %s341, 15
      %s346 = smul.addr %s345, 2
      %s347 = smul.addr %s343, 32
      %s348 = sadd.s32 %s346, %s347
      %s349 = smul.addr %s348, 4
      %s350 = scalar_lea.vmem %s3, %s349
      %p351 = pneg %p146
      %p352 = pneg %p143
      %p353 = pneg %p167
      %p354 = pneg %p164
      %p355 = pneg %p195
      %p356 = pneg %p192
      %s357 = smul.u32 8, %s23
      %p358 = scmp.lt.s32.totalorder %s22, 1
      %s359 = scalar_select %p358, %s22, 1
      %p360 = scmp.lt.s32.totalorder %s357, 15
      %s361 = scalar_select %p360, %s357, 15
      %s362 = smul.addr %s361, 2
      %s363 = smul.addr %s359, 32
      %s364 = sadd.s32 %s362, %s363
      %s365 = smul.addr %s364, 4
      %s366 = scalar_lea.vmem %s5, %s365
      %p367 = pneg %p223
      %p368 = pneg %p220
      %p369 = scmp.lt.s32.totalorder %s22, 1
      %s370 = scalar_select %p369, %s22, 1
      %p371 = scmp.lt.s32.totalorder %s23, 1
      %s372 = scalar_select %p371, %s23, 1
      %s373 = smul.addr %s370, 2
      %s374 = sadd.s32 %s372, %s373
      %s375 = smul.addr %s374, 2
      %s376 = scalar_lea.vmem %s6, %s375
      %s377 = smul.u32 %s23, 8
      %s378 = ssub.s32 %s377, 1
      %p379 = scmp.gt.s32.totalorder %s378, 0
      %s380 = scalar_select %p379, %s378, 0
      %p381 = scmp.lt.s32.totalorder %s22, 1
      %s382 = scalar_select %p381, %s22, 1
      %p383 = scmp.lt.s32.totalorder %s380, 15
      %s384 = scalar_select %p383, %s380, 15
      %s385 = smul.addr %s384, 2
      %s386 = smul.addr %s382, 32
      %s387 = sadd.s32 %s385, %s386
      %s388 = smul.addr %s387, 4
      %s389 = scalar_lea.vmem %s1, %s388
      %s390 = smul.u32 %s23, 8
      %s391 = ssub.s32 %s390, 1
      %p392 = scmp.gt.s32.totalorder %s391, 0
      %s393 = scalar_select %p392, %s391, 0
      %s394 = smul.u32 8, %s23
      %p395 = scmp.lt.s32.totalorder %s22, 1
      %s396 = scalar_select %p395, %s22, 1
      %p397 = scmp.lt.s32.totalorder %s394, 15
      %s398 = scalar_select %p397, %s394, 15
      %s399 = smul.addr %s398, 2
      %s400 = smul.addr %s396, 32
      %s401 = sadd.s32 %s399, %s400
      %s402 = smul.addr %s401, 4
      %s403 = scalar_lea.vmem %s2, %s402
      %s404 = smul.u32 8, %s23
      %s405 = sadd.s32 %s23, 1
      %s406 = smul.u32 %s405, 8
      %p407 = scmp.lt.s32.totalorder %s406, 15
      %s408 = scalar_select %p407, %s406, 15
      %p409 = scmp.lt.s32.totalorder %s22, 1
      %s410 = scalar_select %p409, %s22, 1
      %p411 = scmp.lt.s32.totalorder %s408, 15
      %s412 = scalar_select %p411, %s408, 15
      %s413 = smul.addr %s412, 2
      %s414 = smul.addr %s410, 32
      %s415 = sadd.s32 %s413, %s414
      %s416 = smul.addr %s415, 4
      %s417 = scalar_lea.vmem %s3, %s416
      %s418 = sadd.s32 %s23, 1
      %s419 = smul.u32 %s418, 8
      %p420 = scmp.lt.s32.totalorder %s419, 15
      %s421 = scalar_select %p420, %s419, 15
      %s422 = smul.u32 8, %s23
      %p423 = scmp.lt.s32.totalorder %s22, 1
      %s424 = scalar_select %p423, %s22, 1
      %p425 = scmp.lt.s32.totalorder %s422, 15
      %s426 = scalar_select %p425, %s422, 15
      %s427 = smul.addr %s426, 2
      %s428 = smul.addr %s424, 32
      %s429 = sadd.s32 %s427, %s428
      %s430 = smul.addr %s429, 4
      %s431 = scalar_lea.vmem %s5, %s430
      %s432 = smul.u32 8, %s23
      %p433 = scmp.lt.s32.totalorder %s22, 1
      %s434 = scalar_select %p433, %s22, 1
      %p435 = scmp.lt.s32.totalorder %s23, 1
      %s436 = scalar_select %p435, %s23, 1
      %s437 = smul.addr %s434, 2
      %s438 = sadd.s32 %s436, %s437
      %s439 = smul.addr %s438, 2
      %s440 = scalar_lea.vmem %s6, %s439
      %v442 = vld [vmem:[%s389] sm:$0xf]
      %v443 = vld [vmem:[%s389 + $0x4] sm:$0xf]
      %v444 = vunpack.c.l.bf16 %v442
      %v445 = vunpack.c.l.bf16 %v443
      %v446 = vld [vmem:[%s403] sm:$0xf]
      %v447 = vld [vmem:[%s403 + $0x4] sm:$0xf]
      %v448 = vld [vmem:[%s403 + $0x8] sm:$0xf]
      %v449 = vld [vmem:[%s403 + $0xc] sm:$0xf]
      %v450 = vld [vmem:[%s403 + $0x10] sm:$0xf]
      %v451 = vld [vmem:[%s403 + $0x14] sm:$0xf]
      %v452 = vld [vmem:[%s403 + $0x18] sm:$0xf]
      %v453 = vld [vmem:[%s403 + $0x1c] sm:$0xf]
      %v454 = vld [vmem:[%s403 + $0x20] sm:$0xf]
      %v455 = vld [vmem:[%s403 + $0x24] sm:$0xf]
      %v456 = vld [vmem:[%s403 + $0x28] sm:$0xf]
      %v457 = vld [vmem:[%s403 + $0x2c] sm:$0xf]
      %v458 = vld [vmem:[%s403 + $0x30] sm:$0xf]
      %v459 = vld [vmem:[%s403 + $0x34] sm:$0xf]
      %v460 = vld [vmem:[%s403 + $0x38] sm:$0xf]
      %v461 = vld [vmem:[%s403 + $0x3c] sm:$0xf]
      %v462 = vunpack.c.l.bf16 %v446
      %v463 = vunpack.c.l.bf16 %v447
      %v464 = vunpack.c.l.bf16 %v448
      %v465 = vunpack.c.l.bf16 %v449
      %v466 = vunpack.c.l.bf16 %v450
      %v467 = vunpack.c.l.bf16 %v451
      %v468 = vunpack.c.l.bf16 %v452
      %v469 = vunpack.c.l.bf16 %v453
      %v470 = vunpack.c.l.bf16 %v454
      %v471 = vunpack.c.l.bf16 %v455
      %v472 = vunpack.c.l.bf16 %v456
      %v473 = vunpack.c.l.bf16 %v457
      %v474 = vunpack.c.l.bf16 %v458
      %v475 = vunpack.c.l.bf16 %v459
      %v476 = vunpack.c.l.bf16 %v460
      %v477 = vunpack.c.l.bf16 %v461
      %v478 = vld [vmem:[%s417] sm:$0xf]
      %v479 = vld [vmem:[%s417 + $0x4] sm:$0xf]
      %v480 = vunpack.c.l.bf16 %v478
      %v481 = vunpack.c.l.bf16 %v479
      %p482 = scmp.gt.s32.totalorder %s23, 0
      %s483 = scalar_select %p482, 1, 0
      %v484 = vstv %s483
      %vm485 = vcmp.eq.s32.totalorder %v484, 1
      %v486 = vsel %vm485, %v444, 0.0
      %v487 = vsel %vm485, %v445, 0.0
      %p488 = scmp.lt.s32.totalorder %s23, 1
      %s489 = scalar_select %p488, 1, 0
      %v490 = vstv %s489
      %vm491 = vcmp.eq.s32.totalorder %v490, 1
      %v492 = vsel %vm491, %v480, 0.0
      %v493 = vsel %vm491, %v481, 0.0
      %v494 = vlaneseq
      %v495 = vshrl.u32 %v494, 7
      %v496 = vadd.s32 %v495, 8
      %vm497 = vcmp.gt.s32.totalorder %v495, 0
      %vm498 = vcmp.gt.s32.totalorder %v496, 0
      %v499 = vrot.slane %v486, 7
      %v500 = vrot.slane %v462, 7
      %v501 = vrot.slane %v464, 7
      %v502 = vrot.slane %v466, 7
      %v503 = vrot.slane %v468, 7
      %v504 = vrot.slane %v470, 7
      %v505 = vrot.slane %v472, 7
      %v506 = vrot.slane %v474, 7
      %v507 = vrot.slane %v476, 7
      %v508 = vrot.slane %v492, 7
      %v509 = vrot.slane %v487, 7
      %v510 = vrot.slane %v463, 7
      %v511 = vrot.slane %v465, 7
      %v512 = vrot.slane %v467, 7
      %v513 = vrot.slane %v469, 7
      %v514 = vrot.slane %v471, 7
      %v515 = vrot.slane %v473, 7
      %v516 = vrot.slane %v475, 7
      %v517 = vrot.slane %v477, 7
      %v518 = vrot.slane %v493, 7
      %vm519 = vcmp.lt.s32.totalorder %v495, 1
      %v520 = vsel %vm519, %v499, %v509
      %v521 = vsel %vm519, %v500, %v510
      %v522 = vsel %vm519, %v501, %v511
      %v523 = vsel %vm519, %v502, %v512
      %v524 = vsel %vm519, %v503, %v513
      %v525 = vsel %vm519, %v504, %v514
      %v526 = vsel %vm519, %v505, %v515
      %v527 = vsel %vm519, %v506, %v516
      %v528 = vsel %vm519, %v507, %v517
      %v529 = vsel %vm519, %v508, %v518
      %v530 = vsel %vm519, %v509, %v499
      %v531 = vsel %vm519, %v510, %v500
      %v532 = vsel %vm519, %v511, %v501
      %v533 = vsel %vm519, %v512, %v502
      %v534 = vsel %vm519, %v513, %v503
      %v535 = vsel %vm519, %v514, %v504
      %v536 = vsel %vm519, %v515, %v505
      %v537 = vsel %vm519, %v516, %v506
      %v538 = vsel %vm519, %v517, %v507
      %v539 = vsel %vm519, %v518, %v508
      %v540 = vsel %vm497, 1, 0
      %v541 = vsel %vm498, 1, 0
      %vm542 = vcmp.eq.s32.totalorder %v540, 1
      %vm543 = vcmp.eq.s32.totalorder %v541, 1
      %v544 = vsel %vm542, %v530, 0.0
      %v545 = vsel %vm543, %v520, 0.0
      %v546 = vsel %vm542, %v531, 0.0
      %v547 = vsel %vm543, %v521, 0.0
      %v548 = vsel %vm542, %v532, 0.0
      %v549 = vsel %vm543, %v522, 0.0
      %v550 = vsel %vm542, %v533, 0.0
      %v551 = vsel %vm543, %v523, 0.0
      %v552 = vsel %vm542, %v534, 0.0
      %v553 = vsel %vm543, %v524, 0.0
      %v554 = vsel %vm542, %v535, 0.0
      %v555 = vsel %vm543, %v525, 0.0
      %v556 = vsel %vm542, %v536, 0.0
      %v557 = vsel %vm543, %v526, 0.0
      %v558 = vsel %vm542, %v537, 0.0
      %v559 = vsel %vm543, %v527, 0.0
      %v560 = vsel %vm542, %v538, 0.0
      %v561 = vsel %vm543, %v528, 0.0
      %v562 = vsel %vm542, %v539, 0.0
      %v563 = vsel %vm543, %v529, 0.0
      %vm564 = vcmp.lt.s32.totalorder %v495, 15
      %vm565 = vcmp.lt.s32.totalorder %v496, 15
      %v566 = vrot.slane %v486, 1
      %v567 = vrot.slane %v462, 1
      %v568 = vrot.slane %v464, 1
      %v569 = vrot.slane %v466, 1
      %v570 = vrot.slane %v468, 1
      %v571 = vrot.slane %v470, 1
      %v572 = vrot.slane %v472, 1
      %v573 = vrot.slane %v474, 1
      %v574 = vrot.slane %v476, 1
      %v575 = vrot.slane %v492, 1
      %v576 = vrot.slane %v487, 1
      %v577 = vrot.slane %v463, 1
      %v578 = vrot.slane %v465, 1
      %v579 = vrot.slane %v467, 1
      %v580 = vrot.slane %v469, 1
      %v581 = vrot.slane %v471, 1
      %v582 = vrot.slane %v473, 1
      %v583 = vrot.slane %v475, 1
      %v584 = vrot.slane %v477, 1
      %v585 = vrot.slane %v493, 1
      %vm586 = vcmp.lt.s32.totalorder %v495, 7
      %v587 = vsel %vm586, %v566, %v576
      %v588 = vsel %vm586, %v567, %v577
      %v589 = vsel %vm586, %v568, %v578
      %v590 = vsel %vm586, %v569, %v579
      %v591 = vsel %vm586, %v570, %v580
      %v592 = vsel %vm586, %v571, %v581
      %v593 = vsel %vm586, %v572, %v582
      %v594 = vsel %vm586, %v573, %v583
      %v595 = vsel %vm586, %v574, %v584
      %v596 = vsel %vm586, %v575, %v585
      %v597 = vsel %vm586, %v576, %v566
      %v598 = vsel %vm586, %v577, %v567
      %v599 = vsel %vm586, %v578, %v568
      %v600 = vsel %vm586, %v579, %v569
      %v601 = vsel %vm586, %v580, %v570
      %v602 = vsel %vm586, %v581, %v571
      %v603 = vsel %vm586, %v582, %v572
      %v604 = vsel %vm586, %v583, %v573
      %v605 = vsel %vm586, %v584, %v574
      %v606 = vsel %vm586, %v585, %v575
      %v607 = vsel %vm564, 1, 0
      %v608 = vsel %vm565, 1, 0
      %vm609 = vcmp.eq.s32.totalorder %v607, 1
      %vm610 = vcmp.eq.s32.totalorder %v608, 1
      %v611 = vsel %vm609, %v587, 0.0
      %v612 = vsel %vm610, %v597, 0.0
      %v613 = vsel %vm609, %v588, 0.0
      %v614 = vsel %vm610, %v598, 0.0
      %v615 = vsel %vm609, %v589, 0.0
      %v616 = vsel %vm610, %v599, 0.0
      %v617 = vsel %vm609, %v590, 0.0
      %v618 = vsel %vm610, %v600, 0.0
      %v619 = vsel %vm609, %v591, 0.0
      %v620 = vsel %vm610, %v601, 0.0
      %v621 = vsel %vm609, %v592, 0.0
      %v622 = vsel %vm610, %v602, 0.0
      %v623 = vsel %vm609, %v593, 0.0
      %v624 = vsel %vm610, %v603, 0.0
      %v625 = vsel %vm609, %v594, 0.0
      %v626 = vsel %vm610, %v604, 0.0
      %v627 = vsel %vm609, %v595, 0.0
      %v628 = vsel %vm610, %v605, 0.0
      %v629 = vsel %vm609, %v596, 0.0
      %v630 = vsel %vm610, %v606, 0.0
      %v631 = vpack.c.bf16 %v544, %v544
      %v632 = vpack.c.bf16 %v545, %v545
      %v633 = vpack.c.bf16 %v546, %v546
      %v634 = vpack.c.bf16 %v547, %v547
      %v635 = vpack.c.bf16 %v548, %v548
      %v636 = vpack.c.bf16 %v549, %v549
      %v637 = vpack.c.bf16 %v550, %v550
      %v638 = vpack.c.bf16 %v551, %v551
      %v639 = vpack.c.bf16 %v552, %v552
      %v640 = vpack.c.bf16 %v553, %v553
      %v641 = vpack.c.bf16 %v554, %v554
      %v642 = vpack.c.bf16 %v555, %v555
      %v643 = vpack.c.bf16 %v556, %v556
      %v644 = vpack.c.bf16 %v557, %v557
      %v645 = vpack.c.bf16 %v558, %v558
      %v646 = vpack.c.bf16 %v559, %v559
      %v647 = vpack.c.bf16 %v560, %v560
      %v648 = vpack.c.bf16 %v561, %v561
      %v649 = vpack.c.bf16 %v562, %v562
      %v650 = vpack.c.bf16 %v563, %v563
      %v651 = vpack.c.bf16 %v486, %v486
      %v652 = vpack.c.bf16 %v487, %v487
      %v653 = vpack.c.bf16 %v462, %v462
      %v654 = vpack.c.bf16 %v463, %v463
      %v655 = vpack.c.bf16 %v464, %v464
      %v656 = vpack.c.bf16 %v465, %v465
      %v657 = vpack.c.bf16 %v466, %v466
      %v658 = vpack.c.bf16 %v467, %v467
      %v659 = vpack.c.bf16 %v468, %v468
      %v660 = vpack.c.bf16 %v469, %v469
      %v661 = vpack.c.bf16 %v470, %v470
      %v662 = vpack.c.bf16 %v471, %v471
      %v663 = vpack.c.bf16 %v472, %v472
      %v664 = vpack.c.bf16 %v473, %v473
      %v665 = vpack.c.bf16 %v474, %v474
      %v666 = vpack.c.bf16 %v475, %v475
      %v667 = vpack.c.bf16 %v476, %v476
      %v668 = vpack.c.bf16 %v477, %v477
      %v669 = vpack.c.bf16 %v492, %v492
      %v670 = vpack.c.bf16 %v493, %v493
      %v671 = vpack.c.bf16 %v611, %v611
      %v672 = vpack.c.bf16 %v612, %v612
      %v673 = vpack.c.bf16 %v613, %v613
      %v674 = vpack.c.bf16 %v614, %v614
      %v675 = vpack.c.bf16 %v615, %v615
      %v676 = vpack.c.bf16 %v616, %v616
      %v677 = vpack.c.bf16 %v617, %v617
      %v678 = vpack.c.bf16 %v618, %v618
      %v679 = vpack.c.bf16 %v619, %v619
      %v680 = vpack.c.bf16 %v620, %v620
      %v681 = vpack.c.bf16 %v621, %v621
      %v682 = vpack.c.bf16 %v622, %v622
      %v683 = vpack.c.bf16 %v623, %v623
      %v684 = vpack.c.bf16 %v624, %v624
      %v685 = vpack.c.bf16 %v625, %v625
      %v686 = vpack.c.bf16 %v626, %v626
      %v687 = vpack.c.bf16 %v627, %v627
      %v688 = vpack.c.bf16 %v628, %v628
      %v689 = vpack.c.bf16 %v629, %v629
      %v690 = vpack.c.bf16 %v630, %v630
      %v711 = vunpack.c.l.b16 %v631
      %v712 = vunpack.c.l.b16 %v632
      %v713 = vunpack.c.l.b16 %v633
      %v714 = vunpack.c.l.b16 %v634
      %v715 = vunpack.c.l.b16 %v635
      %v716 = vunpack.c.l.b16 %v636
      %v717 = vunpack.c.l.b16 %v637
      %v718 = vunpack.c.l.b16 %v638
      %v719 = vunpack.c.l.b16 %v639
      %v720 = vunpack.c.l.b16 %v640
      %v721 = vunpack.c.l.b16 %v641
      %v722 = vunpack.c.l.b16 %v642
      %v723 = vunpack.c.l.b16 %v643
      %v724 = vunpack.c.l.b16 %v644
      %v725 = vunpack.c.l.b16 %v645
      %v726 = vunpack.c.l.b16 %v646
      %v727 = vunpack.c.l.b16 %v647
      %v728 = vunpack.c.l.b16 %v648
      %v729 = vunpack.c.l.b16 %v649
      %v730 = vunpack.c.l.b16 %v650
      %v731 = vpack.c.b16 %v712, %v711
      %v732 = vpack.c.b16 %v714, %v713
      %v733 = vpack.c.b16 %v716, %v715
      %v734 = vpack.c.b16 %v718, %v717
      %v735 = vpack.c.b16 %v720, %v719
      %v736 = vpack.c.b16 %v722, %v721
      %v737 = vpack.c.b16 %v724, %v723
      %v738 = vpack.c.b16 %v726, %v725
      %v739 = vpack.c.b16 %v728, %v727
      %v740 = vpack.c.b16 %v730, %v729
      %v761 = vunpack.c.l.b16 %v651
      %v762 = vunpack.c.l.b16 %v652
      %v763 = vunpack.c.l.b16 %v653
      %v764 = vunpack.c.l.b16 %v654
      %v765 = vunpack.c.l.b16 %v655
      %v766 = vunpack.c.l.b16 %v656
      %v767 = vunpack.c.l.b16 %v657
      %v768 = vunpack.c.l.b16 %v658
      %v769 = vunpack.c.l.b16 %v659
      %v770 = vunpack.c.l.b16 %v660
      %v771 = vunpack.c.l.b16 %v661
      %v772 = vunpack.c.l.b16 %v662
      %v773 = vunpack.c.l.b16 %v663
      %v774 = vunpack.c.l.b16 %v664
      %v775 = vunpack.c.l.b16 %v665
      %v776 = vunpack.c.l.b16 %v666
      %v777 = vunpack.c.l.b16 %v667
      %v778 = vunpack.c.l.b16 %v668
      %v779 = vunpack.c.l.b16 %v669
      %v780 = vunpack.c.l.b16 %v670
      %v781 = vpack.c.b16 %v762, %v761
      %v782 = vpack.c.b16 %v764, %v763
      %v783 = vpack.c.b16 %v766, %v765
      %v784 = vpack.c.b16 %v768, %v767
      %v785 = vpack.c.b16 %v770, %v769
      %v786 = vpack.c.b16 %v772, %v771
      %v787 = vpack.c.b16 %v774, %v773
      %v788 = vpack.c.b16 %v776, %v775
      %v789 = vpack.c.b16 %v778, %v777
      %v790 = vpack.c.b16 %v780, %v779
      %791 = vrot.lane.b32.xlu0 %v781, 4
      %v792 = vpop.permute.xlu0 %791
      %793 = vrot.lane.b32.xlu0 %v782, 4
      %v794 = vpop.permute.xlu0 %793
      %795 = vrot.lane.b32.xlu0 %v783, 4
      %v796 = vpop.permute.xlu0 %795
      %797 = vrot.lane.b32.xlu0 %v784, 4
      %v798 = vpop.permute.xlu0 %797
      %799 = vrot.lane.b32.xlu0 %v785, 4
      %v800 = vpop.permute.xlu0 %799
      %801 = vrot.lane.b32.xlu0 %v786, 4
      %v802 = vpop.permute.xlu0 %801
      %803 = vrot.lane.b32.xlu0 %v787, 4
      %v804 = vpop.permute.xlu0 %803
      %805 = vrot.lane.b32.xlu0 %v788, 4
      %v806 = vpop.permute.xlu0 %805
      %807 = vrot.lane.b32.xlu0 %v789, 4
      %v808 = vpop.permute.xlu0 %807
      %809 = vrot.lane.b32.xlu0 %v790, 4
      %v810 = vpop.permute.xlu0 %809
      %v831 = vunpack.c.l.b16 %v671
      %v832 = vunpack.c.l.b16 %v672
      %v833 = vunpack.c.l.b16 %v673
      %v834 = vunpack.c.l.b16 %v674
      %v835 = vunpack.c.l.b16 %v675
      %v836 = vunpack.c.l.b16 %v676
      %v837 = vunpack.c.l.b16 %v677
      %v838 = vunpack.c.l.b16 %v678
      %v839 = vunpack.c.l.b16 %v679
      %v840 = vunpack.c.l.b16 %v680
      %v841 = vunpack.c.l.b16 %v681
      %v842 = vunpack.c.l.b16 %v682
      %v843 = vunpack.c.l.b16 %v683
      %v844 = vunpack.c.l.b16 %v684
      %v845 = vunpack.c.l.b16 %v685
      %v846 = vunpack.c.l.b16 %v686
      %v847 = vunpack.c.l.b16 %v687
      %v848 = vunpack.c.l.b16 %v688
      %v849 = vunpack.c.l.b16 %v689
      %v850 = vunpack.c.l.b16 %v690
      %v851 = vpack.c.b16 %v832, %v831
      %v852 = vpack.c.b16 %v834, %v833
      %v853 = vpack.c.b16 %v836, %v835
      %v854 = vpack.c.b16 %v838, %v837
      %v855 = vpack.c.b16 %v840, %v839
      %v856 = vpack.c.b16 %v842, %v841
      %v857 = vpack.c.b16 %v844, %v843
      %v858 = vpack.c.b16 %v846, %v845
      %v859 = vpack.c.b16 %v848, %v847
      %v860 = vpack.c.b16 %v850, %v849
      %861 = vrot.lane.b32.xlu0 %v851, 8
      %v862 = vpop.permute.xlu0 %861
      %863 = vrot.lane.b32.xlu0 %v852, 8
      %v864 = vpop.permute.xlu0 %863
      %865 = vrot.lane.b32.xlu0 %v853, 8
      %v866 = vpop.permute.xlu0 %865
      %867 = vrot.lane.b32.xlu0 %v854, 8
      %v868 = vpop.permute.xlu0 %867
      %869 = vrot.lane.b32.xlu0 %v855, 8
      %v870 = vpop.permute.xlu0 %869
      %871 = vrot.lane.b32.xlu0 %v856, 8
      %v872 = vpop.permute.xlu0 %871
      %873 = vrot.lane.b32.xlu0 %v857, 8
      %v874 = vpop.permute.xlu0 %873
      %875 = vrot.lane.b32.xlu0 %v858, 8
      %v876 = vpop.permute.xlu0 %875
      %877 = vrot.lane.b32.xlu0 %v859, 8
      %v878 = vpop.permute.xlu0 %877
      %879 = vrot.lane.b32.xlu0 %v860, 8
      %v880 = vpop.permute.xlu0 %879
      %vm881 = vcmask 31744
      %v884 = vsel %vm881, %v731, %v792
      %v887 = vsel %vm881, %v732, %v794
      %v890 = vsel %vm881, %v733, %v796
      %v893 = vsel %vm881, %v734, %v798
      %v896 = vsel %vm881, %v735, %v800
      %v899 = vsel %vm881, %v736, %v802
      %v902 = vsel %vm881, %v737, %v804
      %v905 = vsel %vm881, %v738, %v806
      %v908 = vsel %vm881, %v739, %v808
      %v911 = vsel %vm881, %v740, %v810
      %vm912 = vcmask 64512
      %v914 = vsel %vm912, %v884, %v862
      %v916 = vsel %vm912, %v887, %v864
      %v918 = vsel %vm912, %v890, %v866
      %v920 = vsel %vm912, %v893, %v868
      %v922 = vsel %vm912, %v896, %v870
      %v924 = vsel %vm912, %v899, %v872
      %v926 = vsel %vm912, %v902, %v874
      %v928 = vsel %vm912, %v905, %v876
      %v930 = vsel %vm912, %v908, %v878
      %v932 = vsel %vm912, %v911, %v880
      %v933 = vld [vmem:[%s4] sm:$0xf]
      %v934 = vld [vmem:[%s4 + $0x4] sm:$0x3]
      %s935 = scalar_lea.vmem %s4, 8
      %v936 = vld [vmem:[%s935] sm:$0xf]
      %v937 = vld [vmem:[%s935 + $0x4] sm:$0x3]
      %v940 = vunpack.c.l.b16 %v936
      %v941 = vunpack.c.l.b16 %v937
      %v942 = vpack.c.b16 %v941, %v940
      %vm943 = vcmask 97280
      %v944 = vsel %vm943, %v916, 0
      %v946 = vsel %vm943, %v918, 0
      %v948 = vsel %vm943, %v920, 0
      %v950 = vsel %vm943, %v922, 0
      %v952 = vsel %vm943, %v924, 0
      %v954 = vsel %vm943, %v926, 0
      %v956 = vsel %vm943, %v928, 0
      %v958 = vsel %vm943, %v930, 0
      %vm960 = vcmask 1045504
      %v962 = vsel %vm960, %v942, 0
      %964 = vmatpush.bf16.msra.mxu0 0
      %965 = vmatpush.bf16.msra.mxu0 0
      %966 = vmatpush.bf16.msra.mxu0 0
      %967 = vmatpush.bf16.msra.mxu0 0
      %968 = vmatpush.bf16.msra.mxu0 0
      %969 = vmatpush.bf16.msra.mxu0 0
      %970 = vmatpush.bf16.msra.mxu0 0
      %971 = vmatpush.bf16.msra.mxu0 %v962
      %972 = vmatmul.bf16.gmra.mxu0 %v944
      %v973 = vpop.f32.mrf.mxu0
      %v974 = vadd.f32 0.0, %v973
      %v975 = vpop.f32.mrf.mxu0
      %v976 = vadd.f32 0.0, %v975
      %977 = vmatmul.bf16.gmra.mxu0 %v946
      %v978 = vpop.f32.mrf.mxu0
      %v979 = vadd.f32 0.0, %v978
      %v980 = vpop.f32.mrf.mxu0
      %v981 = vadd.f32 0.0, %v980
      %982 = vmatmul.bf16.gmra.mxu0 %v948
      %v983 = vpop.f32.mrf.mxu0
      %v984 = vadd.f32 0.0, %v983
      %v985 = vpop.f32.mrf.mxu0
      %v986 = vadd.f32 0.0, %v985
      %987 = vmatmul.bf16.gmra.mxu0 %v950
      %v988 = vpop.f32.mrf.mxu0
      %v989 = vadd.f32 0.0, %v988
      %v990 = vpop.f32.mrf.mxu0
      %v991 = vadd.f32 0.0, %v990
      %992 = vmatmul.bf16.gmra.mxu0 %v952
      %v993 = vpop.f32.mrf.mxu0
      %v994 = vadd.f32 0.0, %v993
      %v995 = vpop.f32.mrf.mxu0
      %v996 = vadd.f32 0.0, %v995
      %997 = vmatmul.bf16.gmra.mxu0 %v954
      %v998 = vpop.f32.mrf.mxu0
      %v999 = vadd.f32 0.0, %v998
      %v1000 = vpop.f32.mrf.mxu0
      %v1001 = vadd.f32 0.0, %v1000
      %1002 = vmatmul.bf16.gmra.mxu0 %v956
      %v1003 = vpop.f32.mrf.mxu0
      %v1004 = vadd.f32 0.0, %v1003
      %v1005 = vpop.f32.mrf.mxu0
      %v1006 = vadd.f32 0.0, %v1005
      %1007 = vmatmul.bf16.gmra.mxu0 %v958
      %v1008 = vpop.f32.mrf.mxu0
      %v1009 = vadd.f32 0.0, %v1008
      %v1010 = vpop.f32.mrf.mxu0
      %v1011 = vadd.f32 0.0, %v1010
      %1012 = vdwg.mxu0
      %v1015 = vunpack.c.l.b16 %v933
      %v1016 = vunpack.c.l.b16 %v934
      %v1017 = vpack.c.b16 %v1016, %v1015
      %v1018 = vsel %vm943, %v914, 0
      %v1021 = vsel %vm960, %v1017, 0
      %1023 = vmatpush.bf16.msra.mxu0 0
      %1024 = vmatpush.bf16.msra.mxu0 0
      %1025 = vmatpush.bf16.msra.mxu0 0
      %1026 = vmatpush.bf16.msra.mxu0 0
      %1027 = vmatpush.bf16.msra.mxu0 0
      %1028 = vmatpush.bf16.msra.mxu0 0
      %1029 = vmatpush.bf16.msra.mxu0 0
      %1030 = vmatpush.bf16.msra.mxu0 %v1021
      %1031 = vmatmul.bf16.gmra.mxu0 %v1018
      %v1032 = vpop.f32.mrf.mxu0
      %v1033 = vadd.f32 %v974, %v1032
      %v1034 = vpop.f32.mrf.mxu0
      %v1035 = vadd.f32 %v976, %v1034
      %1036 = vmatmul.bf16.gmra.mxu0 %v944
      %v1037 = vpop.f32.mrf.mxu0
      %v1038 = vadd.f32 %v979, %v1037
      %v1039 = vpop.f32.mrf.mxu0
      %v1040 = vadd.f32 %v981, %v1039
      %1041 = vmatmul.bf16.gmra.mxu0 %v946
      %v1042 = vpop.f32.mrf.mxu0
      %v1043 = vadd.f32 %v984, %v1042
      %v1044 = vpop.f32.mrf.mxu0
      %v1045 = vadd.f32 %v986, %v1044
      %1046 = vmatmul.bf16.gmra.mxu0 %v948
      %v1047 = vpop.f32.mrf.mxu0
      %v1048 = vadd.f32 %v989, %v1047
      %v1049 = vpop.f32.mrf.mxu0
      %v1050 = vadd.f32 %v991, %v1049
      %1051 = vmatmul.bf16.gmra.mxu0 %v950
      %v1052 = vpop.f32.mrf.mxu0
      %v1053 = vadd.f32 %v994, %v1052
      %v1054 = vpop.f32.mrf.mxu0
      %v1055 = vadd.f32 %v996, %v1054
      %1056 = vmatmul.bf16.gmra.mxu0 %v952
      %v1057 = vpop.f32.mrf.mxu0
      %v1058 = vadd.f32 %v999, %v1057
      %v1059 = vpop.f32.mrf.mxu0
      %v1060 = vadd.f32 %v1001, %v1059
      %1061 = vmatmul.bf16.gmra.mxu0 %v954
      %v1062 = vpop.f32.mrf.mxu0
      %v1063 = vadd.f32 %v1004, %v1062
      %v1064 = vpop.f32.mrf.mxu0
      %v1065 = vadd.f32 %v1006, %v1064
      %1066 = vmatmul.bf16.gmra.mxu0 %v956
      %v1067 = vpop.f32.mrf.mxu0
      %v1068 = vadd.f32 %v1009, %v1067
      %v1069 = vpop.f32.mrf.mxu0
      %v1070 = vadd.f32 %v1011, %v1069
      %1071 = vdwg.mxu0
      %s1072 = scalar_lea.vmem %s4, 16
      %v1073 = vld [vmem:[%s1072] sm:$0xf]
      %v1074 = vld [vmem:[%s1072 + $0x4] sm:$0x3]
      %v1077 = vunpack.c.l.b16 %v1073
      %v1078 = vunpack.c.l.b16 %v1074
      %v1079 = vpack.c.b16 %v1078, %v1077
      %v1080 = vsel %vm943, %v932, 0
      %v1083 = vsel %vm960, %v1079, 0
      %1085 = vmatpush.bf16.msra.mxu0 0
      %1086 = vmatpush.bf16.msra.mxu0 0
      %1087 = vmatpush.bf16.msra.mxu0 0
      %1088 = vmatpush.bf16.msra.mxu0 0
      %1089 = vmatpush.bf16.msra.mxu0 0
      %1090 = vmatpush.bf16.msra.mxu0 0
      %1091 = vmatpush.bf16.msra.mxu0 0
      %1092 = vmatpush.bf16.msra.mxu0 %v1083
      %1093 = vmatmul.bf16.gmra.mxu0 %v946
      %v1094 = vpop.f32.mrf.mxu0
      %v1095 = vadd.f32 0.0, %v1094
      %v1096 = vpop.f32.mrf.mxu0
      %v1097 = vadd.f32 0.0, %v1096
      %1098 = vmatmul.bf16.gmra.mxu0 %v948
      %v1099 = vpop.f32.mrf.mxu0
      %v1100 = vadd.f32 0.0, %v1099
      %v1101 = vpop.f32.mrf.mxu0
      %v1102 = vadd.f32 0.0, %v1101
      %1103 = vmatmul.bf16.gmra.mxu0 %v950
      %v1104 = vpop.f32.mrf.mxu0
      %v1105 = vadd.f32 0.0, %v1104
      %v1106 = vpop.f32.mrf.mxu0
      %v1107 = vadd.f32 0.0, %v1106
      %1108 = vmatmul.bf16.gmra.mxu0 %v952
      %v1109 = vpop.f32.mrf.mxu0
      %v1110 = vadd.f32 0.0, %v1109
      %v1111 = vpop.f32.mrf.mxu0
      %v1112 = vadd.f32 0.0, %v1111
      %1113 = vmatmul.bf16.gmra.mxu0 %v954
      %v1114 = vpop.f32.mrf.mxu0
      %v1115 = vadd.f32 0.0, %v1114
      %v1116 = vpop.f32.mrf.mxu0
      %v1117 = vadd.f32 0.0, %v1116
      %1118 = vmatmul.bf16.gmra.mxu0 %v956
      %v1119 = vpop.f32.mrf.mxu0
      %v1120 = vadd.f32 0.0, %v1119
      %v1121 = vpop.f32.mrf.mxu0
      %v1122 = vadd.f32 0.0, %v1121
      %1123 = vmatmul.bf16.gmra.mxu0 %v958
      %v1124 = vpop.f32.mrf.mxu0
      %v1125 = vadd.f32 0.0, %v1124
      %v1126 = vpop.f32.mrf.mxu0
      %v1127 = vadd.f32 0.0, %v1126
      %1128 = vmatmul.bf16.gmra.mxu0 %v1080
      %v1129 = vpop.f32.mrf.mxu0
      %v1130 = vadd.f32 0.0, %v1129
      %v1131 = vpop.f32.mrf.mxu0
      %v1132 = vadd.f32 0.0, %v1131
      %1133 = vdwg.mxu0
      %v1134 = vadd.f32 %v1033, %v1095
      %v1135 = vadd.f32 %v1035, %v1097
      %v1136 = vadd.f32 %v1038, %v1100
      %v1137 = vadd.f32 %v1040, %v1102
      %v1138 = vadd.f32 %v1043, %v1105
      %v1139 = vadd.f32 %v1045, %v1107
      %v1140 = vadd.f32 %v1048, %v1110
      %v1141 = vadd.f32 %v1050, %v1112
      %v1142 = vadd.f32 %v1053, %v1115
      %v1143 = vadd.f32 %v1055, %v1117
      %v1144 = vadd.f32 %v1058, %v1120
      %v1145 = vadd.f32 %v1060, %v1122
      %v1146 = vadd.f32 %v1063, %v1125
      %v1147 = vadd.f32 %v1065, %v1127
      %v1148 = vadd.f32 %v1068, %v1130
      %v1149 = vadd.f32 %v1070, %v1132
      %v1150 = vpack.c.bf16 %v1134, %v1134
      %v1151 = vpack.c.bf16 %v1135, %v1135
      %v1152 = vpack.c.bf16 %v1136, %v1136
      %v1153 = vpack.c.bf16 %v1137, %v1137
      %v1154 = vpack.c.bf16 %v1138, %v1138
      %v1155 = vpack.c.bf16 %v1139, %v1139
      %v1156 = vpack.c.bf16 %v1140, %v1140
      %v1157 = vpack.c.bf16 %v1141, %v1141
      %v1158 = vpack.c.bf16 %v1142, %v1142
      %v1159 = vpack.c.bf16 %v1143, %v1143
      %v1160 = vpack.c.bf16 %v1144, %v1144
      %v1161 = vpack.c.bf16 %v1145, %v1145
      %v1162 = vpack.c.bf16 %v1146, %v1146
      %v1163 = vpack.c.bf16 %v1147, %v1147
      %v1164 = vpack.c.bf16 %v1148, %v1148
      %v1165 = vpack.c.bf16 %v1149, %v1149
      %vm1166 = vcmask 60416
      %1167 = vst.msk [vmem:[%s431] sm:$0xf] %vm1166, %v1150
      %1168 = vst.msk [vmem:[%s431 + $0x4] sm:$0xf] %vm1166, %v1151
      %1169 = vst.msk [vmem:[%s431 + $0x8] sm:$0xf] %vm1166, %v1152
      %1170 = vst.msk [vmem:[%s431 + $0xc] sm:$0xf] %vm1166, %v1153
      %1171 = vst.msk [vmem:[%s431 + $0x10] sm:$0xf] %vm1166, %v1154
      %1172 = vst.msk [vmem:[%s431 + $0x14] sm:$0xf] %vm1166, %v1155
      %1173 = vst.msk [vmem:[%s431 + $0x18] sm:$0xf] %vm1166, %v1156
      %1174 = vst.msk [vmem:[%s431 + $0x1c] sm:$0xf] %vm1166, %v1157
      %1175 = vst.msk [vmem:[%s431 + $0x20] sm:$0xf] %vm1166, %v1158
      %1176 = vst.msk [vmem:[%s431 + $0x24] sm:$0xf] %vm1166, %v1159
      %1177 = vst.msk [vmem:[%s431 + $0x28] sm:$0xf] %vm1166, %v1160
      %1178 = vst.msk [vmem:[%s431 + $0x2c] sm:$0xf] %vm1166, %v1161
      %1179 = vst.msk [vmem:[%s431 + $0x30] sm:$0xf] %vm1166, %v1162
      %1180 = vst.msk [vmem:[%s431 + $0x34] sm:$0xf] %vm1166, %v1163
      %1181 = vst.msk [vmem:[%s431 + $0x38] sm:$0xf] %vm1166, %v1164
      %1182 = vst.msk [vmem:[%s431 + $0x3c] sm:$0xf] %vm1166, %v1165
      %v1183 = vsel %vm912, %v1134, 0.0
      %v1184 = vsel %vm912, %v1135, 0.0
      %v1185 = vadd.f32 %v1183, %v1184
      %v1186 = vsel %vm912, %v1136, 0.0
      %v1187 = vadd.f32 %v1185, %v1186
      %v1188 = vsel %vm912, %v1137, 0.0
      %v1189 = vadd.f32 %v1187, %v1188
      %v1190 = vsel %vm912, %v1138, 0.0
      %v1191 = vadd.f32 %v1189, %v1190
      %v1192 = vsel %vm912, %v1139, 0.0
      %v1193 = vadd.f32 %v1191, %v1192
      %v1194 = vsel %vm912, %v1140, 0.0
      %v1195 = vadd.f32 %v1193, %v1194
      %v1196 = vsel %vm912, %v1141, 0.0
      %v1197 = vadd.f32 %v1195, %v1196
      %v1198 = vsel %vm912, %v1142, 0.0
      %v1199 = vadd.f32 %v1197, %v1198
      %v1200 = vsel %vm912, %v1143, 0.0
      %v1201 = vadd.f32 %v1199, %v1200
      %v1202 = vsel %vm912, %v1144, 0.0
      %v1203 = vadd.f32 %v1201, %v1202
      %v1204 = vsel %vm912, %v1145, 0.0
      %v1205 = vadd.f32 %v1203, %v1204
      %v1206 = vsel %vm912, %v1146, 0.0
      %v1207 = vadd.f32 %v1205, %v1206
      %v1208 = vsel %vm912, %v1147, 0.0
      %v1209 = vadd.f32 %v1207, %v1208
      %v1210 = vsel %vm912, %v1148, 0.0
      %v1211 = vadd.f32 %v1209, %v1210
      %v1212 = vsel %vm912, %v1149, 0.0
      %v1213 = vadd.f32 %v1211, %v1212
      %v1214 = vrot.slane %v1213, 4
      %v1215 = vadd.f32 %v1213, %v1214
      %v1216 = vrot.slane %v1215, 2
      %v1217 = vadd.f32 %v1215, %v1216
      %v1218 = vrot.slane %v1217, 1
      %v1219 = vadd.f32 %v1217, %v1218
      %v1220 = vmul.f32 %v1134, %v1134
      %v1221 = vmul.f32 %v1135, %v1135
      %v1222 = vmul.f32 %v1136, %v1136
      %v1223 = vmul.f32 %v1137, %v1137
      %v1224 = vmul.f32 %v1138, %v1138
      %v1225 = vmul.f32 %v1139, %v1139
      %v1226 = vmul.f32 %v1140, %v1140
      %v1227 = vmul.f32 %v1141, %v1141
      %v1228 = vmul.f32 %v1142, %v1142
      %v1229 = vmul.f32 %v1143, %v1143
      %v1230 = vmul.f32 %v1144, %v1144
      %v1231 = vmul.f32 %v1145, %v1145
      %v1232 = vmul.f32 %v1146, %v1146
      %v1233 = vmul.f32 %v1147, %v1147
      %v1234 = vmul.f32 %v1148, %v1148
      %v1235 = vmul.f32 %v1149, %v1149
      %v1236 = vsel %vm912, %v1220, 0.0
      %v1237 = vsel %vm912, %v1221, 0.0
      %v1238 = vadd.f32 %v1236, %v1237
      %v1239 = vsel %vm912, %v1222, 0.0
      %v1240 = vadd.f32 %v1238, %v1239
      %v1241 = vsel %vm912, %v1223, 0.0
      %v1242 = vadd.f32 %v1240, %v1241
      %v1243 = vsel %vm912, %v1224, 0.0
      %v1244 = vadd.f32 %v1242, %v1243
      %v1245 = vsel %vm912, %v1225, 0.0
      %v1246 = vadd.f32 %v1244, %v1245
      %v1247 = vsel %vm912, %v1226, 0.0
      %v1248 = vadd.f32 %v1246, %v1247
      %v1249 = vsel %vm912, %v1227, 0.0
      %v1250 = vadd.f32 %v1248, %v1249
      %v1251 = vsel %vm912, %v1228, 0.0
      %v1252 = vadd.f32 %v1250, %v1251
      %v1253 = vsel %vm912, %v1229, 0.0
      %v1254 = vadd.f32 %v1252, %v1253
      %v1255 = vsel %vm912, %v1230, 0.0
      %v1256 = vadd.f32 %v1254, %v1255
      %v1257 = vsel %vm912, %v1231, 0.0
      %v1258 = vadd.f32 %v1256, %v1257
      %v1259 = vsel %vm912, %v1232, 0.0
      %v1260 = vadd.f32 %v1258, %v1259
      %v1261 = vsel %vm912, %v1233, 0.0
      %v1262 = vadd.f32 %v1260, %v1261
      %v1263 = vsel %vm912, %v1234, 0.0
      %v1264 = vadd.f32 %v1262, %v1263
      %v1265 = vsel %vm912, %v1235, 0.0
      %v1266 = vadd.f32 %v1264, %v1265
      %v1267 = vrot.slane %v1266, 4
      %v1268 = vadd.f32 %v1266, %v1267
      %v1269 = vrot.slane %v1268, 2
      %v1270 = vadd.f32 %v1268, %v1269
      %v1271 = vrot.slane %v1270, 1
      %v1272 = vadd.f32 %v1270, %v1271
      %vm1273 = vcmask 1040384
      %v1274 = vsel %vm1273, %v1219, %v1272
      %vm1275 = vcmask 58368
      %1276 = vst.msk [vmem:[%s440] sm:$0x3] %vm1275, %v1274
      %s1277 = smul.u32 8, %s23
      %p1278 = scmp.lt.s32.totalorder %s22, 1
      %s1279 = scalar_select %p1278, %s22, 1
      %p1280 = scmp.lt.s32.totalorder %s1277, 15
      %s1281 = scalar_select %p1280, %s1277, 15
      %s1282 = smul.addr %s1281, 2
      %s1283 = smul.addr %s1279, 32
      %s1284 = sadd.s32 %s1282, %s1283
      %s1285 = smul.addr %s1284, 4
      %s1286 = scalar_lea.vmem %s5, %s1285
      %p1287 = scmp.lt.s32.totalorder %s22, 1
      %s1288 = scalar_select %p1287, %s22, 1
      %p1289 = scmp.lt.s32.totalorder %s23, 1
      %s1290 = scalar_select %p1289, %s23, 1
      %s1291 = smul.addr %s1288, 2
      %s1292 = sadd.s32 %s1290, %s1291
      %s1293 = smul.addr %s1292, 2
      %s1294 = scalar_lea.vmem %s6, %s1293
      // Predicated region
      $region41: #{conv_block_forward.3} parent=39 // pred_check
        %p1295 = pneg %p192
      $region42: #{conv_block_forward.3} parent=39 // pred_check_branch
        %1297 = sbr.rel (%p1295) target = $region44
      $region43: #{conv_block_forward.3} parent=39 // pred_region
        %s1298 = smul.u32 8, %s23
      $region44: #{conv_block_forward.3} parent=39 // pred_fallthru
        _
      // Predicated region
      $region45: #{conv_block_forward.3} parent=39 // pred_check
        %p1299 = pneg %p220
      $region46: #{conv_block_forward.3} parent=39 // pred_check_branch
        %1301 = sbr.rel (%p1299) target = $region48
      $region47: #{conv_block_forward.3} parent=39 // pred_region
        _
      $region48: #{conv_block_forward.3} parent=39 // pred_fallthru
        _
    $region40: #{conv_block_forward.3} parent=5 // pred_fallthru
      _
    %p1302 = scmp.le.s32.totalorder 2, %s13
    // Predicated region
    $region49: #{conv_block_forward.3} parent=5 // pred_check
      %p1303 = pneg %p1302
    $region50: #{conv_block_forward.3} parent=5 // pred_check_branch
      %1305 = sbr.rel (%p1303) target = $region52
    $region51: #{conv_block_forward.3} parent=5 // pred_region
      %s1306 = ssub.s32 %s13, 2
      // Predicated region
      $region53: #{conv_block_forward.3} parent=51 // pred_check
        %p1307 = pneg %p198
      $region54: #{conv_block_forward.3} parent=51 // pred_check_branch
        %1309 = sbr.rel (%p1307) target = $region56
      $region55: #{conv_block_forward.3} parent=51 // pred_region
        %s1310 = smul.u32 8, %s25
        %p1311 = scmp.lt.s32.totalorder %s24, 1
        %s1312 = scalar_select %p1311, %s24, 1
        %p1313 = scmp.lt.s32.totalorder %s1310, 15
        %s1314 = scalar_select %p1313, %s1310, 15
        %s1315 = smul.addr %s1314, 2
        %s1316 = smul.addr %s1312, 32
        %s1317 = sadd.s32 %s1315, %s1316
        %s1318 = smul.addr %s1317, 4
        %s1319 = scalar_lea.vmem %s5, %s1318
      $region56: #{conv_block_forward.3} parent=51 // pred_fallthru
        _
      // Predicated region
      $region57: #{conv_block_forward.3} parent=51 // pred_check
        %p1320 = pneg %p226
      $region58: #{conv_block_forward.3} parent=51 // pred_check_branch
        %1322 = sbr.rel (%p1320) target = $region60
      $region59: #{conv_block_forward.3} parent=51 // pred_region
        %p1323 = scmp.lt.s32.totalorder %s24, 1
        %s1324 = scalar_select %p1323, %s24, 1
        %p1325 = scmp.lt.s32.totalorder %s25, 1
        %s1326 = scalar_select %p1325, %s25, 1
        %s1327 = smul.addr %s1324, 2
        %s1328 = sadd.s32 %s1326, %s1327
        %s1329 = smul.addr %s1328, 2
        %s1330 = scalar_lea.vmem %s6, %s1329
      $region60: #{conv_block_forward.3} parent=51 // pred_fallthru
        _
    $region52: #{conv_block_forward.3} parent=5 // pred_fallthru
      _
  $region6: #{conv_block_forward.3} parent=0 // loop_footer
    %s17 = sadd.s32 1, %s13
  $region7: #{conv_block_forward.3} parent=0 // loop_footer_branch
    %12 = sbr.rel target = $region3
  $region8: #{conv_block_forward.3} parent=0 // loop_exit
    _

// kernel: conv_block_forward.4
$region0: #{conv_block_forward.4}
  #allocation0 [shape = 'u32[]', space=smem, size = 0x4, offset = 0x4, fixed_abs, tag = 'smem constant byte address 0x4 - core index']
  #allocation1 [shape = 'u32[72,128]{1,0:T(1,128)}', space=vmem, size = 0x9000, scoped, tag = 'internal scratch']
  %s0 = inlined_call_operand.vmem [shape: f32[1,1,8], index: 0, kind: input, shape index: {}]
  %s1 = inlined_call_operand.vmem [shape: bf16[2,16,16,8], index: 1, kind: input, shape index: {}, may-alias: {1,2,3}]
  %s2 = inlined_call_operand.vmem [shape: bf16[2,16,16,8], index: 2, kind: input, shape index: {}, may-alias: {1,2,3}]
  %s3 = inlined_call_operand.vmem [shape: bf16[2,16,16,8], index: 3, kind: input, shape index: {}, may-alias: {1,2,3}]
  %s4 = inlined_call_operand.vmem [shape: bf16[3,24,8], index: 4, kind: input, shape index: {}]
  %s5 = inlined_call_operand.vmem [shape: bf16[2,16,16,8], index: 5, kind: output, shape index: {0}]
  %s6 = inlined_call_operand.vmem [shape: f32[2,2,2,8], index: 6, kind: output, shape index: {1}]
  %7 = xla_tuple %s5, %s6
  %s8 = sld [smem:[#allocation0]]
  $region61: #{conv_block_forward.4} parent=0
    _
  %s10 = ssub.s32 1, %s8
  %s11 = scalar_select 0, %s10, %s8
  loop: start=0, step=1, limit=6
  $region2: #{conv_block_forward.4} parent=0 // loop_pre_header
    _
  $region3: #{conv_block_forward.4} parent=0 // loop_header
    %s13 = sphi 0, %s17
    %p14 = scmp.ge.s32.totalorder %s13, 6
    %s20 = sphi 0, %s32
    %s21 = sphi 0, %s28
    %s22 = sphi 0, %s20
    %s23 = sphi 0, %s21
    %s24 = sphi 0, %s22
    %s25 = sphi 0, %s23
    %s33 = sphi 0, %s33
    %s35 = sphi 0, %s33
    %s36 = sphi 0, %s35
    %s50 = sphi 0, %s36
    %s66 = sphi 0, %s68
    %s69 = sphi 0, %s66
    %s70 = sphi 0, %s69
    %s86 = sphi 0, %s70
    %s94 = sphi 0, %s96
    %s97 = sphi 0, %s94
    %s98 = sphi 0, %s97
    %s114 = sphi 0, %s98
    %s130 = sphi 0, %s132
    %s133 = sphi 0, %s130
    %s134 = sphi 0, %s133
    %s150 = sphi 0, %s134
    %s154 = sphi 0, %s154
    %s156 = sphi 0, %s154
    %s157 = sphi 0, %s156
    %s171 = sphi 0, %s157
    %s179 = sphi 0, %s181
    %s182 = sphi 0, %s179
    %s183 = sphi 0, %s182
    %s199 = sphi 0, %s183
    %s207 = sphi 0, %s209
    %s210 = sphi 0, %s207
    %s211 = sphi 0, %s210
    %s227 = sphi 0, %s211
  $region4: #{conv_block_forward.4} parent=0 // loop_header_branch
    %16 = sbr.rel (%p14) target = $region8
  $region5: #{conv_block_forward.4} parent=0 // loop_body
    %s18 = ssub.s32 %s13, 1
    %s19 = ssub.s32 %s13, 2
    %s26 = sadd.s32 1, %s21
    %p27 = scmp.ge.s32.totalorder %s26, 2
    %s28 = scalar_select %p27, 0, %s26
    %s29 = sadd.s32 1, %s20
    %s30 = scalar_select %p27, %s29, %s20
    %p31 = scmp.ge.s32.totalorder %s30, 2
    %s32 = scalar_select %p31, 0, %s30
    %s34 = sadd.s32 %s33, 1
    %p37 = scmp.eq.s32.totalorder %s13, 3
    %p38 = scmp.ne.s32.totalorder %s33, %s35
    %p39 = scmp.eq.s32.totalorder %s13, 0
    %p40 = por %p38, %p39
    %p41 = scmp.ne.s32.totalorder %s33, %s35
    %p42 = scmp.eq.s32.totalorder %s18, 3
    %p43 = por %p41, %p42
    %p44 = scmp.ne.s32.totalorder %s35, %s36
    %p45 = scmp.eq.s32.totalorder %s18, 0
    %p46 = por %p44, %p45
    %p47 = scmp.ne.s32.totalorder %s35, %s36
    %p48 = scmp.eq.s32.totalorder %s19, 3
    %p49 = por %p47, %p48
    %p51 = scmp.ne.s32.totalorder %s36, %s50
    %p52 = scmp.eq.s32.totalorder %s19, 0
    %p53 = por %p51, %p52
    %s54 = smul.u32 %s21, 8
    %s55 = ssub.s32 %s54, 1
    %p56 = scmp.gt.s32.totalorder %s55, 0
    %s57 = scalar_select %p56, %s55, 0
    %s58 = smul.u32 %s28, 8
    %s59 = ssub.s32 %s58, 1
    %p60 = scmp.gt.s32.totalorder %s59, 0
    %s61 = scalar_select %p60, %s59, 0
    %s62 = ssub.s32 %s20, %s32
    %s63 = ssub.s32 %s57, %s61
    %s64 = sor.u32 %s62, %s63
    %p65 = scmp.eq.s32.totalorder %s64, 0
    %s67 = sadd.s32 %s66, 1
    %s68 = scalar_select %p65, %s66, %s67
    %p71 = pneg %p65
    %p72 = scmp.eq.s32.totalorder %s13, 3
    %p73 = por %p71, %p72
    %p74 = scmp.ne.s32.totalorder %s66, %s69
    %p75 = scmp.eq.s32.totalorder %s13, 0
    %p76 = por %p74, %p75
    %p77 = scmp.ne.s32.totalorder %s66, %s69
    %p78 = scmp.eq.s32.totalorder %s18, 3
    %p79 = por %p77, %p78
    %p80 = scmp.ne.s32.totalorder %s69, %s70
    %p81 = scmp.eq.s32.totalorder %s18, 0
    %p82 = por %p80, %p81
    %p83 = scmp.ne.s32.totalorder %s69, %s70
    %p84 = scmp.eq.s32.totalorder %s19, 3
    %p85 = por %p83, %p84
    %p87 = scmp.ne.s32.totalorder %s70, %s86
    %p88 = scmp.eq.s32.totalorder %s19, 0
    %p89 = por %p87, %p88
    %s90 = ssub.s32 %s20, %s32
    %s91 = ssub.s32 %s21, %s28
    %s92 = sor.u32 %s90, %s91
    %p93 = scmp.eq.s32.totalorder %s92, 0
    %s95 = sadd.s32 %s94, 1
    %s96 = scalar_select %p93, %s94, %s95
    %p99 = pneg %p93
    %p100 = scmp.eq.s32.totalorder %s13, 3
    %p101 = por %p99, %p100
    %p102 = scmp.ne.s32.totalorder %s94, %s97
    %p103 = scmp.eq.s32.totalorder %s13, 0
    %p104 = por %p102, %p103
    %p105 = scmp.ne.s32.totalorder %s94, %s97
    %p106 = scmp.eq.s32.totalorder %s18, 3
    %p107 = por %p105, %p106
    %p108 = scmp.ne.s32.totalorder %s97, %s98
    %p109 = scmp.eq.s32.totalorder %s18, 0
    %p110 = por %p108, %p109
    %p111 = scmp.ne.s32.totalorder %s97, %s98
    %p112 = scmp.eq.s32.totalorder %s19, 3
    %p113 = por %p111, %p112
    %p115 = scmp.ne.s32.totalorder %s98, %s114
    %p116 = scmp.eq.s32.totalorder %s19, 0
    %p117 = por %p115, %p116
    %s118 = sadd.s32 %s21, 1
    %s119 = smul.u32 %s118, 8
    %p120 = scmp.lt.s32.totalorder %s119, 15
    %s121 = scalar_select %p120, %s119, 15
    %s122 = sadd.s32 %s28, 1
    %s123 = smul.u32 %s122, 8
    %p124 = scmp.lt.s32.totalorder %s123, 15
    %s125 = scalar_select %p124, %s123, 15
    %s126 = ssub.s32 %s20, %s32
    %s127 = ssub.s32 %s121, %s125
    %s128 = sor.u32 %s126, %s127
    %p129 = scmp.eq.s32.totalorder %s128, 0
    %s131 = sadd.s32 %s130, 1
    %s132 = scalar_select %p129, %s130, %s131
    %p135 = pneg %p129
    %p136 = scmp.eq.s32.totalorder %s13, 3
    %p137 = por %p135, %p136
    %p138 = scmp.ne.s32.totalorder %s130, %s133
    %p139 = scmp.eq.s32.totalorder %s13, 0
    %p140 = por %p138, %p139
    %p141 = scmp.ne.s32.totalorder %s130, %s133
    %p142 = scmp.eq.s32.totalorder %s18, 3
    %p143 = por %p141, %p142
    %p144 = scmp.ne.s32.totalorder %s133, %s134
    %p145 = scmp.eq.s32.totalorder %s18, 0
    %p146 = por %p144, %p145
    %p147 = scmp.ne.s32.totalorder %s133, %s134
    %p148 = scmp.eq.s32.totalorder %s19, 3
    %p149 = por %p147, %p148
    %p151 = scmp.ne.s32.totalorder %s134, %s150
    %p152 = scmp.eq.s32.totalorder %s19, 0
    %p153 = por %p151, %p152
    %s155 = sadd.s32 %s154, 1
    %p158 = scmp.eq.s32.totalorder %s13, 3
    %p159 = scmp.ne.s32.totalorder %s154, %s156
    %p160 = scmp.eq.s32.totalorder %s13, 0
    %p161 = por %p159, %p160
    %p162 = scmp.ne.s32.totalorder %s154, %s156
    %p163 = scmp.eq.s32.totalorder %s18, 3
    %p164 = por %p162, %p163
    %p165 = scmp.ne.s32.totalorder %s156, %s157
    %p166 = scmp.eq.s32.totalorder %s18, 0
    %p167 = por %p165, %p166
    %p168 = scmp.ne.s32.totalorder %s156, %s157
    %p169 = scmp.eq.s32.totalorder %s19, 3
    %p170 = por %p168, %p169
    %p172 = scmp.ne.s32.totalorder %s157, %s171
    %p173 = scmp.eq.s32.totalorder %s19, 0
    %p174 = por %p172, %p173
    %s175 = ssub.s32 %s20, %s32
    %s176 = ssub.s32 %s21, %s28
    %s177 = sor.u32 %s175, %s176
    %p178 = scmp.eq.s32.totalorder %s177, 0
    %s180 = sadd.s32 %s179, 1
    %s181 = scalar_select %p178, %s179, %s180
    %p184 = pneg %p178
    %p185 = scmp.eq.s32.totalorder %s13, 3
    %p186 = por %p184, %p185
    %p187 = scmp.ne.s32.totalorder %s179, %s182
    %p188 = scmp.eq.s32.totalorder %s13, 0
    %p189 = por %p187, %p188
    %p190 = scmp.ne.s32.totalorder %s179, %s182
    %p191 = scmp.eq.s32.totalorder %s18, 3
    %p192 = por %p190, %p191
    %p193 = scmp.ne.s32.totalorder %s182, %s183
    %p194 = scmp.eq.s32.totalorder %s18, 0
    %p195 = por %p193, %p194
    %p196 = scmp.ne.s32.totalorder %s182, %s183
    %p197 = scmp.eq.s32.totalorder %s19, 3
    %p198 = por %p196, %p197
    %p200 = scmp.ne.s32.totalorder %s183, %s199
    %p201 = scmp.eq.s32.totalorder %s19, 0
    %p202 = por %p200, %p201
    %s203 = ssub.s32 %s20, %s32
    %s204 = ssub.s32 %s21, %s28
    %s205 = sor.u32 %s203, %s204
    %p206 = scmp.eq.s32.totalorder %s205, 0
    %s208 = sadd.s32 %s207, 1
    %s209 = scalar_select %p206, %s207, %s208
    %p212 = pneg %p206
    %p213 = scmp.eq.s32.totalorder %s13, 3
    %p214 = por %p212, %p213
    %p215 = scmp.ne.s32.totalorder %s207, %s210
    %p216 = scmp.eq.s32.totalorder %s13, 0
    %p217 = por %p215, %p216
    %p218 = scmp.ne.s32.totalorder %s207, %s210
    %p219 = scmp.eq.s32.totalorder %s18, 3
    %p220 = por %p218, %p219
    %p221 = scmp.ne.s32.totalorder %s210, %s211
    %p222 = scmp.eq.s32.totalorder %s18, 0
    %p223 = por %p221, %p222
    %p224 = scmp.ne.s32.totalorder %s210, %s211
    %p225 = scmp.eq.s32.totalorder %s19, 3
    %p226 = por %p224, %p225
    %p228 = scmp.ne.s32.totalorder %s211, %s227
    %p229 = scmp.eq.s32.totalorder %s19, 0
    %p230 = por %p228, %p229
    %p231 = scmp.le.s32.totalorder 1, %s13
    %p232 = scmp.lt.s32.totalorder %s13, 5
    %p233 = pnand %p231, %p232
    %p234 = pneg %p233
    // Predicated region
    $region9: #{conv_block_forward.4} parent=5 // pred_check
      _
    $region10: #{conv_block_forward.4} parent=5 // pred_check_branch
      %236 = sbr.rel (%p233) target = $region12
    $region11: #{conv_block_forward.4} parent=5 // pred_region
      %s237 = ssub.s32 %s13, 1
      // Predicated region
      $region13: #{conv_block_forward.4} parent=11 // pred_check
        %p238 = pneg %p46
      $region14: #{conv_block_forward.4} parent=11 // pred_check_branch
        %240 = sbr.rel (%p238) target = $region16
      $region15: #{conv_block_forward.4} parent=11 // pred_region
        _
      $region16: #{conv_block_forward.4} parent=11 // pred_fallthru
        _
      // Predicated region
      $region17: #{conv_block_forward.4} parent=11 // pred_check
        %p241 = pneg %p167
      $region18: #{conv_block_forward.4} parent=11 // pred_check_branch
        %243 = sbr.rel (%p241) target = $region20
      $region19: #{conv_block_forward.4} parent=11 // pred_region
        _
      $region20: #{conv_block_forward.4} parent=11 // pred_fallthru
        _
    $region12: #{conv_block_forward.4} parent=5 // pred_fallthru
      _
    %p244 = scmp.lt.s32.totalorder %s13, 4
    // Predicated region
    $region21: #{conv_block_forward.4} parent=5 // pred_check
      %p245 = pneg %p244
    $region22: #{conv_block_forward.4} parent=5 // pred_check_branch
      %247 = sbr.rel (%p245) target = $region24
    $region23: #{conv_block_forward.4} parent=5 // pred_region
      // Predicated region
      $region25: #{conv_block_forward.4} parent=23 // pred_check
        %p248 = pneg %p76
      $region26: #{conv_block_forward.4} parent=23 // pred_check_branch
        %250 = sbr.rel (%p248) target = $region28
      $region27: #{conv_block_forward.4} parent=23 // pred_region
        %s251 = smul.u32 %s21, 8
        %s252 = ssub.s32 %s251, 1
        %p253 = scmp.gt.s32.totalorder %s252, 0
        %s254 = scalar_select %p253, %s252, 0
        %p255 = scmp.lt.s32.totalorder %s20, 1
        %s256 = scalar_select %p255, %s20, 1
        %p257 = scmp.lt.s32.totalorder %s254, 15
        %s258 = scalar_select %p257, %s254, 15
        %s259 = smul.addr %s258, 2
        %s260 = smul.addr %s256, 32
        %s261 = sadd.s32 %s259, %s260
        %s262 = smul.addr %s261, 4
        %s263 = scalar_lea.vmem %s1, %s262
        %s264 = smul.u32 %s21, 8
        %s265 = ssub.s32 %s264, 1
        %p266 = scmp.gt.s32.totalorder %s265, 0
        %s267 = scalar_select %p266, %s265, 0
      $region28: #{conv_block_forward.4} parent=23 // pred_fallthru
        _
      // Predicated region
      $region29: #{conv_block_forward.4} parent=23 // pred_check
        %p268 = pneg %p104
      $region30: #{conv_block_forward.4} parent=23 // pred_check_branch
        %270 = sbr.rel (%p268) target = $region32
      $region31: #{conv_block_forward.4} parent=23 // pred_region
        %s271 = smul.u32 8, %s21
        %p272 = scmp.lt.s32.totalorder %s20, 1
        %s273 = scalar_select %p272, %s20, 1
        %p274 = scmp.lt.s32.totalorder %s271, 15
        %s275 = scalar_select %p274, %s271, 15
        %s276 = smul.addr %s275, 2
        %s277 = smul.addr %s273, 32
        %s278 = sadd.s32 %s276, %s277
        %s279 = smul.addr %s278, 4
        %s280 = scalar_lea.vmem %s2, %s279
        %s281 = smul.u32 8, %s21
      $region32: #{conv_block_forward.4} parent=23 // pred_fallthru
        _
      // Predicated region
      $region33: #{conv_block_forward.4} parent=23 // pred_check
        %p282 = pneg %p140
      $region34: #{conv_block_forward.4} parent=23 // pred_check_branch
        %284 = sbr.rel (%p282) target = $region36
      $region35: #{conv_block_forward.4} parent=23 // pred_region
        %s285 = sadd.s32 %s21, 1
        %s286 = smul.u32 %s285, 8
        %p287 = scmp.lt.s32.totalorder %s286, 15
        %s288 = scalar_select %p287, %s286, 15
        %p289 = scmp.lt.s32.totalorder %s20, 1
        %s290 = scalar_select %p289, %s20, 1
        %p291 = scmp.lt.s32.totalorder %s288, 15
        %s292 = scalar_select %p291, %s288, 15
        %s293 = smul.addr %s292, 2
        %s294 = smul.addr %s290, 32
        %s295 = sadd.s32 %s293, %s294
        %s296 = smul.addr %s295, 4
        %s297 = scalar_lea.vmem %s3, %s296
        %s298 = sadd.s32 %s21, 1
        %s299 = smul.u32 %s298, 8
        %p300 = scmp.lt.s32.totalorder %s299, 15
        %s301 = scalar_select %p300, %s299, 15
      $region36: #{conv_block_forward.4} parent=23 // pred_fallthru
        _
    $region24: #{conv_block_forward.4} parent=5 // pred_fallthru
      _
    %p302 = scmp.le.s32.totalorder 1, %s13
    %p303 = scmp.lt.s32.totalorder %s13, 5
    %p304 = pnand %p302, %p303
    %p305 = pneg %p304
    // Predicated region
    $region37: #{conv_block_forward.4} parent=5 // pred_check
      _
    $region38: #{conv_block_forward.4} parent=5 // pred_check_branch
      %307 = sbr.rel (%p304) target = $region40
    $region39: #{conv_block_forward.4} parent=5 // pred_region
      %s308 = ssub.s32 %s13, 1
      %p309 = pneg %p46
      %p310 = pneg %p43
      %s311 = smul.u32 %s23, 8
      %s312 = ssub.s32 %s311, 1
      %p313 = scmp.gt.s32.totalorder %s312, 0
      %s314 = scalar_select %p313, %s312, 0
      %p315 = scmp.lt.s32.totalorder %s22, 1
      %s316 = scalar_select %p315, %s22, 1
      %p317 = scmp.lt.s32.totalorder %s314, 15
      %s318 = scalar_select %p317, %s314, 15
      %s319 = smul.addr %s318, 2
      %s320 = smul.addr %s316, 32
      %s321 = sadd.s32 %s319, %s320
      %s322 = smul.addr %s321, 4
      %s323 = scalar_lea.vmem %s1, %s322
      %p324 = pneg %p82
      %p325 = pneg %p79
      %s326 = smul.u32 8, %s23
      %p327 = scmp.lt.s32.totalorder %s22, 1
      %s328 = scalar_select %p327, %s22, 1
      %p329 = scmp.lt.s32.totalorder %s326, 15
      %s330 = scalar_select %p329, %s326, 15
      %s331 = smul.addr %s330, 2
      %s332 = smul.addr %s328, 32
      %s333 = sadd.s32 %s331, %s332
      %s334 = smul.addr %s333, 4
      %s335 = scalar_lea.vmem %s2, %s334
      %p336 = pneg %p110
      %p337 = pneg %p107
      %s338 = sadd.s32 %s23, 1
      %s339 = smul.u32 %s338, 8
      %p340 = scmp.lt.s32.totalorder %s339, 15
      %s341 = scalar_select %p340, %s339, 15
      %p342 = scmp.lt.s32.totalorder %s22, 1
      %s343 = scalar_select %p342, %s22, 1
      %p344 = scmp.lt.s32.totalorder %s341, 15
      %s345 = scalar_select %p344, %s341, 15
      %s346 = smul.addr %s345, 2
      %s347 = smul.addr %s343, 32
      %s348 = sadd.s32 %s346, %s347
      %s349 = smul.addr %s348, 4
      %s350 = scalar_lea.vmem %s3, %s349
      %p351 = pneg %p146
      %p352 = pneg %p143
      %p353 = pneg %p167
      %p354 = pneg %p164
      %p355 = pneg %p195
      %p356 = pneg %p192
      %s357 = smul.u32 8, %s23
      %p358 = scmp.lt.s32.totalorder %s22, 1
      %s359 = scalar_select %p358, %s22, 1
      %p360 = scmp.lt.s32.totalorder %s357, 15
      %s361 = scalar_select %p360, %s357, 15
      %s362 = smul.addr %s361, 2
      %s363 = smul.addr %s359, 32
      %s364 = sadd.s32 %s362, %s363
      %s365 = smul.addr %s364, 4
      %s366 = scalar_lea.vmem %s5, %s365
      %p367 = pneg %p223
      %p368 = pneg %p220
      %p369 = scmp.lt.s32.totalorder %s22, 1
      %s370 = scalar_select %p369, %s22, 1
      %p371 = scmp.lt.s32.totalorder %s23, 1
      %s372 = scalar_select %p371, %s23, 1
      %s373 = smul.addr %s370, 2
      %s374 = sadd.s32 %s372, %s373
      %s375 = smul.addr %s374, 2
      %s376 = scalar_lea.vmem %s6, %s375
      %s377 = smul.u32 %s23, 8
      %s378 = ssub.s32 %s377, 1
      %p379 = scmp.gt.s32.totalorder %s378, 0
      %s380 = scalar_select %p379, %s378, 0
      %p381 = scmp.lt.s32.totalorder %s22, 1
      %s382 = scalar_select %p381, %s22, 1
      %p383 = scmp.lt.s32.totalorder %s380, 15
      %s384 = scalar_select %p383, %s380, 15
      %s385 = smul.addr %s384, 2
      %s386 = smul.addr %s382, 32
      %s387 = sadd.s32 %s385, %s386
      %s388 = smul.addr %s387, 4
      %s389 = scalar_lea.vmem %s1, %s388
      %s390 = smul.u32 %s23, 8
      %s391 = ssub.s32 %s390, 1
      %p392 = scmp.gt.s32.totalorder %s391, 0
      %s393 = scalar_select %p392, %s391, 0
      %s394 = smul.u32 8, %s23
      %p395 = scmp.lt.s32.totalorder %s22, 1
      %s396 = scalar_select %p395, %s22, 1
      %p397 = scmp.lt.s32.totalorder %s394, 15
      %s398 = scalar_select %p397, %s394, 15
      %s399 = smul.addr %s398, 2
      %s400 = smul.addr %s396, 32
      %s401 = sadd.s32 %s399, %s400
      %s402 = smul.addr %s401, 4
      %s403 = scalar_lea.vmem %s2, %s402
      %s404 = smul.u32 8, %s23
      %s405 = sadd.s32 %s23, 1
      %s406 = smul.u32 %s405, 8
      %p407 = scmp.lt.s32.totalorder %s406, 15
      %s408 = scalar_select %p407, %s406, 15
      %p409 = scmp.lt.s32.totalorder %s22, 1
      %s410 = scalar_select %p409, %s22, 1
      %p411 = scmp.lt.s32.totalorder %s408, 15
      %s412 = scalar_select %p411, %s408, 15
      %s413 = smul.addr %s412, 2
      %s414 = smul.addr %s410, 32
      %s415 = sadd.s32 %s413, %s414
      %s416 = smul.addr %s415, 4
      %s417 = scalar_lea.vmem %s3, %s416
      %s418 = sadd.s32 %s23, 1
      %s419 = smul.u32 %s418, 8
      %p420 = scmp.lt.s32.totalorder %s419, 15
      %s421 = scalar_select %p420, %s419, 15
      %s422 = smul.u32 8, %s23
      %p423 = scmp.lt.s32.totalorder %s22, 1
      %s424 = scalar_select %p423, %s22, 1
      %p425 = scmp.lt.s32.totalorder %s422, 15
      %s426 = scalar_select %p425, %s422, 15
      %s427 = smul.addr %s426, 2
      %s428 = smul.addr %s424, 32
      %s429 = sadd.s32 %s427, %s428
      %s430 = smul.addr %s429, 4
      %s431 = scalar_lea.vmem %s5, %s430
      %s432 = smul.u32 8, %s23
      %p433 = scmp.lt.s32.totalorder %s22, 1
      %s434 = scalar_select %p433, %s22, 1
      %p435 = scmp.lt.s32.totalorder %s23, 1
      %s436 = scalar_select %p435, %s23, 1
      %s437 = smul.addr %s434, 2
      %s438 = sadd.s32 %s436, %s437
      %s439 = smul.addr %s438, 2
      %s440 = scalar_lea.vmem %s6, %s439
      %v442 = vld [vmem:[%s389] sm:$0xf]
      %v443 = vld [vmem:[%s389 + $0x4] sm:$0xf]
      %v444 = vunpack.c.l.bf16 %v442
      %v445 = vunpack.c.l.bf16 %v443
      %v446 = vld [vmem:[%s0] sm:$0x1]
      %v448 = vperm.slane %v446, 0
      %v450 = vadd.f32 %v444, %v448
      %v451 = vadd.f32 %v445, %v448
      %v452 = vmax.f32 %v450, 0.0
      %v453 = vmax.f32 %v451, 0.0
      %v454 = vld [vmem:[%s403] sm:$0xf]
      %v455 = vld [vmem:[%s403 + $0x4] sm:$0xf]
      %v456 = vld [vmem:[%s403 + $0x8] sm:$0xf]
      %v457 = vld [vmem:[%s403 + $0xc] sm:$0xf]
      %v458 = vld [vmem:[%s403 + $0x10] sm:$0xf]
      %v459 = vld [vmem:[%s403 + $0x14] sm:$0xf]
      %v460 = vld [vmem:[%s403 + $0x18] sm:$0xf]
      %v461 = vld [vmem:[%s403 + $0x1c] sm:$0xf]
      %v462 = vld [vmem:[%s403 + $0x20] sm:$0xf]
      %v463 = vld [vmem:[%s403 + $0x24] sm:$0xf]
      %v464 = vld [vmem:[%s403 + $0x28] sm:$0xf]
      %v465 = vld [vmem:[%s403 + $0x2c] sm:$0xf]
      %v466 = vld [vmem:[%s403 + $0x30] sm:$0xf]
      %v467 = vld [vmem:[%s403 + $0x34] sm:$0xf]
      %v468 = vld [vmem:[%s403 + $0x38] sm:$0xf]
      %v469 = vld [vmem:[%s403 + $0x3c] sm:$0xf]
      %v470 = vunpack.c.l.bf16 %v454
      %v471 = vunpack.c.l.bf16 %v455
      %v472 = vunpack.c.l.bf16 %v456
      %v473 = vunpack.c.l.bf16 %v457
      %v474 = vunpack.c.l.bf16 %v458
      %v475 = vunpack.c.l.bf16 %v459
      %v476 = vunpack.c.l.bf16 %v460
      %v477 = vunpack.c.l.bf16 %v461
      %v478 = vunpack.c.l.bf16 %v462
      %v479 = vunpack.c.l.bf16 %v463
      %v480 = vunpack.c.l.bf16 %v464
      %v481 = vunpack.c.l.bf16 %v465
      %v482 = vunpack.c.l.bf16 %v466
      %v483 = vunpack.c.l.bf16 %v467
      %v484 = vunpack.c.l.bf16 %v468
      %v485 = vunpack.c.l.bf16 %v469
      %v486 = vadd.f32 %v470, %v448
      %v487 = vadd.f32 %v471, %v448
      %v488 = vadd.f32 %v472, %v448
      %v489 = vadd.f32 %v473, %v448
      %v490 = vadd.f32 %v474, %v448
      %v491 = vadd.f32 %v475, %v448
      %v492 = vadd.f32 %v476, %v448
      %v493 = vadd.f32 %v477, %v448
      %v494 = vadd.f32 %v478, %v448
      %v495 = vadd.f32 %v479, %v448
      %v496 = vadd.f32 %v480, %v448
      %v497 = vadd.f32 %v481, %v448
      %v498 = vadd.f32 %v482, %v448
      %v499 = vadd.f32 %v483, %v448
      %v500 = vadd.f32 %v484, %v448
      %v501 = vadd.f32 %v485, %v448
      %v502 = vmax.f32 %v486, 0.0
      %v503 = vmax.f32 %v487, 0.0
      %v504 = vmax.f32 %v488, 0.0
      %v505 = vmax.f32 %v489, 0.0
      %v506 = vmax.f32 %v490, 0.0
      %v507 = vmax.f32 %v491, 0.0
      %v508 = vmax.f32 %v492, 0.0
      %v509 = vmax.f32 %v493, 0.0
      %v510 = vmax.f32 %v494, 0.0
      %v511 = vmax.f32 %v495, 0.0
      %v512 = vmax.f32 %v496, 0.0
      %v513 = vmax.f32 %v497, 0.0
      %v514 = vmax.f32 %v498, 0.0
      %v515 = vmax.f32 %v499, 0.0
      %v516 = vmax.f32 %v500, 0.0
      %v517 = vmax.f32 %v501, 0.0
      %v518 = vld [vmem:[%s417] sm:$0xf]
      %v519 = vld [vmem:[%s417 + $0x4] sm:$0xf]
      %v520 = vunpack.c.l.bf16 %v518
      %v521 = vunpack.c.l.bf16 %v519
      %v522 = vadd.f32 %v520, %v448
      %v523 = vadd.f32 %v521, %v448
      %v524 = vmax.f32 %v522, 0.0
      %v525 = vmax.f32 %v523, 0.0
      %p526 = scmp.gt.s32.totalorder %s23, 0
      %s527 = scalar_select %p526, 1, 0
      %v528 = vstv %s527
      %vm529 = vcmp.eq.s32.totalorder %v528, 1
      %v530 = vsel %vm529, %v452, 0.0
      %v531 = vsel %vm529, %v453, 0.0
      %p532 = scmp.lt.s32.totalorder %s23, 1
      %s533 = scalar_select %p532, 1, 0
      %v534 = vstv %s533
      %vm535 = vcmp.eq.s32.totalorder %v534, 1
      %v536 = vsel %vm535, %v524, 0.0
      %v537 = vsel %vm535, %v525, 0.0
      %v538 = vlaneseq
      %v539 = vshrl.u32 %v538, 7
      %v540 = vadd.s32 %v539, 8
      %vm541 = vcmp.gt.s32.totalorder %v539, 0
      %vm542 = vcmp.gt.s32.totalorder %v540, 0
      %v543 = vrot.slane %v530, 7
      %v544 = vrot.slane %v502, 7
      %v545 = vrot.slane %v504, 7
      %v546 = vrot.slane %v506, 7
      %v547 = vrot.slane %v508, 7
      %v548 = vrot.slane %v510, 7
      %v549 = vrot.slane %v512, 7
      %v550 = vrot.slane %v514, 7
      %v551 = vrot.slane %v516, 7
      %v552 = vrot.slane %v536, 7
      %v553 = vrot.slane %v531, 7
      %v554 = vrot.slane %v503, 7
      %v555 = vrot.slane %v505, 7
      %v556 = vrot.slane %v507, 7
      %v557 = vrot.slane %v509, 7
      %v558 = vrot.slane %v511, 7
      %v559 = vrot.slane %v513, 7
      %v560 = vrot.slane %v515, 7
      %v561 = vrot.slane %v517, 7
      %v562 = vrot.slane %v537, 7
      %vm563 = vcmp.lt.s32.totalorder %v539, 1
      %v564 = vsel %vm563, %v543, %v553
      %v565 = vsel %vm563, %v544, %v554
      %v566 = vsel %vm563, %v545, %v555
      %v567 = vsel %vm563, %v546, %v556
      %v568 = vsel %vm563, %v547, %v557
      %v569 = vsel %vm563, %v548, %v558
      %v570 = vsel %vm563, %v549, %v559
      %v571 = vsel %vm563, %v550, %v560
      %v572 = vsel %vm563, %v551, %v561
      %v573 = vsel %vm563, %v552, %v562
      %v574 = vsel %vm563, %v553, %v543
      %v575 = vsel %vm563, %v554, %v544
      %v576 = vsel %vm563, %v555, %v545
      %v577 = vsel %vm563, %v556, %v546
      %v578 = vsel %vm563, %v557, %v547
      %v579 = vsel %vm563, %v558, %v548
      %v580 = vsel %vm563, %v559, %v549
      %v581 = vsel %vm563, %v560, %v550
      %v582 = vsel %vm563, %v561, %v551
      %v583 = vsel %vm563, %v562, %v552
      %v584 = vsel %vm541, 1, 0
      %v585 = vsel %vm542, 1, 0
      %vm586 = vcmp.eq.s32.totalorder %v584, 1
      %vm587 = vcmp.eq.s32.totalorder %v585, 1
      %v588 = vsel %vm586, %v574, 0.0
      %v589 = vsel %vm587, %v564, 0.0
      %v590 = vsel %vm586, %v575, 0.0
      %v591 = vsel %vm587, %v565, 0.0
      %v592 = vsel %vm586, %v576, 0.0
      %v593 = vsel %vm587, %v566, 0.0
      %v594 = vsel %vm586, %v577, 0.0
      %v595 = vsel %vm587, %v567, 0.0
      %v596 = vsel %vm586, %v578, 0.0
      %v597 = vsel %vm587, %v568, 0.0
      %v598 = vsel %vm586, %v579, 0.0
      %v599 = vsel %vm587, %v569, 0.0
      %v600 = vsel %vm586, %v580, 0.0
      %v601 = vsel %vm587, %v570, 0.0
      %v602 = vsel %vm586, %v581, 0.0
      %v603 = vsel %vm587, %v571, 0.0
      %v604 = vsel %vm586, %v582, 0.0
      %v605 = vsel %vm587, %v572, 0.0
      %v606 = vsel %vm586, %v583, 0.0
      %v607 = vsel %vm587, %v573, 0.0
      %vm608 = vcmp.lt.s32.totalorder %v539, 15
      %vm609 = vcmp.lt.s32.totalorder %v540, 15
      %v610 = vrot.slane %v530, 1
      %v611 = vrot.slane %v502, 1
      %v612 = vrot.slane %v504, 1
      %v613 = vrot.slane %v506, 1
      %v614 = vrot.slane %v508, 1
      %v615 = vrot.slane %v510, 1
      %v616 = vrot.slane %v512, 1
      %v617 = vrot.slane %v514, 1
      %v618 = vrot.slane %v516, 1
      %v619 = vrot.slane %v536, 1
      %v620 = vrot.slane %v531, 1
      %v621 = vrot.slane %v503, 1
      %v622 = vrot.slane %v505, 1
      %v623 = vrot.slane %v507, 1
      %v624 = vrot.slane %v509, 1
      %v625 = vrot.slane %v511, 1
      %v626 = vrot.slane %v513, 1
      %v627 = vrot.slane %v515, 1
      %v628 = vrot.slane %v517, 1
      %v629 = vrot.slane %v537, 1
      %vm630 = vcmp.lt.s32.totalorder %v539, 7
      %v631 = vsel %vm630, %v610, %v620
      %v632 = vsel %vm630, %v611, %v621
      %v633 = vsel %vm630, %v612, %v622
      %v634 = vsel %vm630, %v613, %v623
      %v635 = vsel %vm630, %v614, %v624
      %v636 = vsel %vm630, %v615, %v625
      %v637 = vsel %vm630, %v616, %v626
      %v638 = vsel %vm630, %v617, %v627
      %v639 = vsel %vm630, %v618, %v628
      %v640 = vsel %vm630, %v619, %v629
      %v641 = vsel %vm630, %v620, %v610
      %v642 = vsel %vm630, %v621, %v611
      %v643 = vsel %vm630, %v622, %v612
      %v644 = vsel %vm630, %v623, %v613
      %v645 = vsel %vm630, %v624, %v614
      %v646 = vsel %vm630, %v625, %v615
      %v647 = vsel %vm630, %v626, %v616
      %v648 = vsel %vm630, %v627, %v617
      %v649 = vsel %vm630, %v628, %v618
      %v650 = vsel %vm630, %v629, %v619
      %v651 = vsel %vm608, 1, 0
      %v652 = vsel %vm609, 1, 0
      %vm653 = vcmp.eq.s32.totalorder %v651, 1
      %vm654 = vcmp.eq.s32.totalorder %v652, 1
      %v655 = vsel %vm653, %v631, 0.0
      %v656 = vsel %vm654, %v641, 0.0
      %v657 = vsel %vm653, %v632, 0.0
      %v658 = vsel %vm654, %v642, 0.0
      %v659 = vsel %vm653, %v633, 0.0
      %v660 = vsel %vm654, %v643, 0.0
      %v661 = vsel %vm653, %v634, 0.0
      %v662 = vsel %vm654, %v644, 0.0
      %v663 = vsel %vm653, %v635, 0.0
      %v664 = vsel %vm654, %v645, 0.0
      %v665 = vsel %vm653, %v636, 0.0
      %v666 = vsel %vm654, %v646, 0.0
      %v667 = vsel %vm653, %v637, 0.0
      %v668 = vsel %vm654, %v647, 0.0
      %v669 = vsel %vm653, %v638, 0.0
      %v670 = vsel %vm654, %v648, 0.0
      %v671 = vsel %vm653, %v639, 0.0
      %v672 = vsel %vm654, %v649, 0.0
      %v673 = vsel %vm653, %v640, 0.0
      %v674 = vsel %vm654, %v650, 0.0
      %v675 = vpack.c.bf16 %v588, %v588
      %v676 = vpack.c.bf16 %v589, %v589
      %v677 = vpack.c.bf16 %v590, %v590
      %v678 = vpack.c.bf16 %v591, %v591
      %v679 = vpack.c.bf16 %v592, %v592
      %v680 = vpack.c.bf16 %v593, %v593
      %v681 = vpack.c.bf16 %v594, %v594
      %v682 = vpack.c.bf16 %v595, %v595
      %v683 = vpack.c.bf16 %v596, %v596
      %v684 = vpack.c.bf16 %v597, %v597
      %v685 = vpack.c.bf16 %v598, %v598
      %v686 = vpack.c.bf16 %v599, %v599
      %v687 = vpack.c.bf16 %v600, %v600
      %v688 = vpack.c.bf16 %v601, %v601
      %v689 = vpack.c.bf16 %v602, %v602
      %v690 = vpack.c.bf16 %v603, %v603
      %v691 = vpack.c.bf16 %v604, %v604
      %v692 = vpack.c.bf16 %v605, %v605
      %v693 = vpack.c.bf16 %v606, %v606
      %v694 = vpack.c.bf16 %v607, %v607
      %v695 = vpack.c.bf16 %v530, %v530
      %v696 = vpack.c.bf16 %v531, %v531
      %v697 = vpack.c.bf16 %v502, %v502
      %v698 = vpack.c.bf16 %v503, %v503
      %v699 = vpack.c.bf16 %v504, %v504
      %v700 = vpack.c.bf16 %v505, %v505
      %v701 = vpack.c.bf16 %v506, %v506
      %v702 = vpack.c.bf16 %v507, %v507
      %v703 = vpack.c.bf16 %v508, %v508
      %v704 = vpack.c.bf16 %v509, %v509
      %v705 = vpack.c.bf16 %v510, %v510
      %v706 = vpack.c.bf16 %v511, %v511
      %v707 = vpack.c.bf16 %v512, %v512
      %v708 = vpack.c.bf16 %v513, %v513
      %v709 = vpack.c.bf16 %v514, %v514
      %v710 = vpack.c.bf16 %v515, %v515
      %v711 = vpack.c.bf16 %v516, %v516
      %v712 = vpack.c.bf16 %v517, %v517
      %v713 = vpack.c.bf16 %v536, %v536
      %v714 = vpack.c.bf16 %v537, %v537
      %v715 = vpack.c.bf16 %v655, %v655
      %v716 = vpack.c.bf16 %v656, %v656
      %v717 = vpack.c.bf16 %v657, %v657
      %v718 = vpack.c.bf16 %v658, %v658
      %v719 = vpack.c.bf16 %v659, %v659
      %v720 = vpack.c.bf16 %v660, %v660
      %v721 = vpack.c.bf16 %v661, %v661
      %v722 = vpack.c.bf16 %v662, %v662
      %v723 = vpack.c.bf16 %v663, %v663
      %v724 = vpack.c.bf16 %v664, %v664
      %v725 = vpack.c.bf16 %v665, %v665
      %v726 = vpack.c.bf16 %v666, %v666
      %v727 = vpack.c.bf16 %v667, %v667
      %v728 = vpack.c.bf16 %v668, %v668
      %v729 = vpack.c.bf16 %v669, %v669
      %v730 = vpack.c.bf16 %v670, %v670
      %v731 = vpack.c.bf16 %v671, %v671
      %v732 = vpack.c.bf16 %v672, %v672
      %v733 = vpack.c.bf16 %v673, %v673
      %v734 = vpack.c.bf16 %v674, %v674
      %v755 = vunpack.c.l.b16 %v675
      %v756 = vunpack.c.l.b16 %v676
      %v757 = vunpack.c.l.b16 %v677
      %v758 = vunpack.c.l.b16 %v678
      %v759 = vunpack.c.l.b16 %v679
      %v760 = vunpack.c.l.b16 %v680
      %v761 = vunpack.c.l.b16 %v681
      %v762 = vunpack.c.l.b16 %v682
      %v763 = vunpack.c.l.b16 %v683
      %v764 = vunpack.c.l.b16 %v684
      %v765 = vunpack.c.l.b16 %v685
      %v766 = vunpack.c.l.b16 %v686
      %v767 = vunpack.c.l.b16 %v687
      %v768 = vunpack.c.l.b16 %v688
      %v769 = vunpack.c.l.b16 %v689
      %v770 = vunpack.c.l.b16 %v690
      %v771 = vunpack.c.l.b16 %v691
      %v772 = vunpack.c.l.b16 %v692
      %v773 = vunpack.c.l.b16 %v693
      %v774 = vunpack.c.l.b16 %v694
      %v775 = vpack.c.b16 %v756, %v755
      %v776 = vpack.c.b16 %v758, %v757
      %v777 = vpack.c.b16 %v760, %v759
      %v778 = vpack.c.b16 %v762, %v761
      %v779 = vpack.c.b16 %v764, %v763
      %v780 = vpack.c.b16 %v766, %v765
      %v781 = vpack.c.b16 %v768, %v767
      %v782 = vpack.c.b16 %v770, %v769
      %v783 = vpack.c.b16 %v772, %v771
      %v784 = vpack.c.b16 %v774, %v773
      %v805 = vunpack.c.l.b16 %v695
      %v806 = vunpack.c.l.b16 %v696
      %v807 = vunpack.c.l.b16 %v697
      %v808 = vunpack.c.l.b16 %v698
      %v809 = vunpack.c.l.b16 %v699
      %v810 = vunpack.c.l.b16 %v700
      %v811 = vunpack.c.l.b16 %v701
      %v812 = vunpack.c.l.b16 %v702
      %v813 = vunpack.c.l.b16 %v703
      %v814 = vunpack.c.l.b16 %v704
      %v815 = vunpack.c.l.b16 %v705
      %v816 = vunpack.c.l.b16 %v706
      %v817 = vunpack.c.l.b16 %v707
      %v818 = vunpack.c.l.b16 %v708
      %v819 = vunpack.c.l.b16 %v709
      %v820 = vunpack.c.l.b16 %v710
      %v821 = vunpack.c.l.b16 %v711
      %v822 = vunpack.c.l.b16 %v712
      %v823 = vunpack.c.l.b16 %v713
      %v824 = vunpack.c.l.b16 %v714
      %v825 = vpack.c.b16 %v806, %v805
      %v826 = vpack.c.b16 %v808, %v807
      %v827 = vpack.c.b16 %v810, %v809
      %v828 = vpack.c.b16 %v812, %v811
      %v829 = vpack.c.b16 %v814, %v813
      %v830 = vpack.c.b16 %v816, %v815
      %v831 = vpack.c.b16 %v818, %v817
      %v832 = vpack.c.b16 %v820, %v819
      %v833 = vpack.c.b16 %v822, %v821
      %v834 = vpack.c.b16 %v824, %v823
      %835 = vrot.lane.b32.xlu0 %v825, 8
      %v836 = vpop.permute.xlu0 %835
      %837 = vrot.lane.b32.xlu0 %v826, 8
      %v838 = vpop.permute.xlu0 %837
      %839 = vrot.lane.b32.xlu0 %v827, 8
      %v840 = vpop.permute.xlu0 %839
      %841 = vrot.lane.b32.xlu0 %v828, 8
      %v842 = vpop.permute.xlu0 %841
      %843 = vrot.lane.b32.xlu0 %v829, 8
      %v844 = vpop.permute.xlu0 %843
      %845 = vrot.lane.b32.xlu0 %v830, 8
      %v846 = vpop.permute.xlu0 %845
      %847 = vrot.lane.b32.xlu0 %v831, 8
      %v848 = vpop.permute.xlu0 %847
      %849 = vrot.lane.b32.xlu0 %v832, 8
      %v850 = vpop.permute.xlu0 %849
      %851 = vrot.lane.b32.xlu0 %v833, 8
      %v852 = vpop.permute.xlu0 %851
      %853 = vrot.lane.b32.xlu0 %v834, 8
      %v854 = vpop.permute.xlu0 %853
      %v875 = vunpack.c.l.b16 %v715
      %v876 = vunpack.c.l.b16 %v716
      %v877 = vunpack.c.l.b16 %v717
      %v878 = vunpack.c.l.b16 %v718
      %v879 = vunpack.c.l.b16 %v719
      %v880 = vunpack.c.l.b16 %v720
      %v881 = vunpack.c.l.b16 %v721
      %v882 = vunpack.c.l.b16 %v722
      %v883 = vunpack.c.l.b16 %v723
      %v884 = vunpack.c.l.b16 %v724
      %v885 = vunpack.c.l.b16 %v725
      %v886 = vunpack.c.l.b16 %v726
      %v887 = vunpack.c.l.b16 %v727
      %v888 = vunpack.c.l.b16 %v728
      %v889 = vunpack.c.l.b16 %v729
      %v890 = vunpack.c.l.b16 %v730
      %v891 = vunpack.c.l.b16 %v731
      %v892 = vunpack.c.l.b16 %v732
      %v893 = vunpack.c.l.b16 %v733
      %v894 = vunpack.c.l.b16 %v734
      %v895 = vpack.c.b16 %v876, %v875
      %v896 = vpack.c.b16 %v878, %v877
      %v897 = vpack.c.b16 %v880, %v879
      %v898 = vpack.c.b16 %v882, %v881
      %v899 = vpack.c.b16 %v884, %v883
      %v900 = vpack.c.b16 %v886, %v885
      %v901 = vpack.c.b16 %v888, %v887
      %v902 = vpack.c.b16 %v890, %v889
      %v903 = vpack.c.b16 %v892, %v891
      %v904 = vpack.c.b16 %v894, %v893
      %905 = vrot.lane.b32.xlu0 %v895, 16
      %v906 = vpop.permute.xlu0 %905
      %907 = vrot.lane.b32.xlu0 %v896, 16
      %v908 = vpop.permute.xlu0 %907
      %909 = vrot.lane.b32.xlu0 %v897, 16
      %v910 = vpop.permute.xlu0 %909
      %911 = vrot.lane.b32.xlu0 %v898, 16
      %v912 = vpop.permute.xlu0 %911
      %913 = vrot.lane.b32.xlu0 %v899, 16
      %v914 = vpop.permute.xlu0 %913
      %915 = vrot.lane.b32.xlu0 %v900, 16
      %v916 = vpop.permute.xlu0 %915
      %917 = vrot.lane.b32.xlu0 %v901, 16
      %v918 = vpop.permute.xlu0 %917
      %919 = vrot.lane.b32.xlu0 %v902, 16
      %v920 = vpop.permute.xlu0 %919
      %921 = vrot.lane.b32.xlu0 %v903, 16
      %v922 = vpop.permute.xlu0 %921
      %923 = vrot.lane.b32.xlu0 %v904, 16
      %v924 = vpop.permute.xlu0 %923
      %vm925 = vcmask 64512
      %v928 = vsel %vm925, %v775, %v836
      %v931 = vsel %vm925, %v776, %v838
      %v934 = vsel %vm925, %v777, %v840
      %v937 = vsel %vm925, %v778, %v842
      %v940 = vsel %vm925, %v779, %v844
      %v943 = vsel %vm925, %v780, %v846
      %v946 = vsel %vm925, %v781, %v848
      %v949 = vsel %vm925, %v782, %v850
      %v952 = vsel %vm925, %v783, %v852
      %v955 = vsel %vm925, %v784, %v854
      %vm956 = vcmask 130048
      %v958 = vsel %vm956, %v928, %v906
      %v960 = vsel %vm956, %v931, %v908
      %v962 = vsel %vm956, %v934, %v910
      %v964 = vsel %vm956, %v937, %v912
      %v966 = vsel %vm956, %v940, %v914
      %v968 = vsel %vm956, %v943, %v916
      %v970 = vsel %vm956, %v946, %v918
      %v972 = vsel %vm956, %v949, %v920
      %v974 = vsel %vm956, %v952, %v922
      %v976 = vsel %vm956, %v955, %v924
      %v977 = vld [vmem:[%s4] sm:$0xf]
      %v978 = vld [vmem:[%s4 + $0x4] sm:$0xf]
      %v979 = vld [vmem:[%s4 + $0x8] sm:$0xf]
      %s980 = scalar_lea.vmem %s4, 12
      %v981 = vld [vmem:[%s980] sm:$0xf]
      %v982 = vld [vmem:[%s980 + $0x4] sm:$0xf]
      %v983 = vld [vmem:[%s980 + $0x8] sm:$0xf]
      %v987 = vunpack.c.l.b16 %v981
      %v988 = vunpack.c.l.b16 %v982
      %v989 = vunpack.c.l.b16 %v983
      %v990 = vpack.c.b16 %v988, %v987
      %v991 = vpack.c.b16 %v989, %v989
      %vm993 = vcmask 195584
      %v994 = vsel %vm993, %v960, 0
      %v996 = vsel %vm993, %v962, 0
      %v998 = vsel %vm993, %v964, 0
      %v1000 = vsel %vm993, %v966, 0
      %v1002 = vsel %vm993, %v968, 0
      %v1004 = vsel %vm993, %v970, 0
      %v1006 = vsel %vm993, %v972, 0
      %v1008 = vsel %vm993, %v974, 0
      %vm1010 = vcmask 1043456
      %v1012 = vsel %vm1010, %v991, 0
      %1014 = vmatpush.bf16.msra.mxu0 0
      %1015 = vmatpush.bf16.msra.mxu0 0
      %1016 = vmatpush.bf16.msra.mxu0 0
      %1017 = vmatpush.bf16.msra.mxu0 0
      %1018 = vmatpush.bf16.msra.mxu0 0
      %1019 = vmatpush.bf16.msra.mxu0 0
      %1020 = vmatpush.bf16.msra.mxu0 %v1012
      %1021 = vmatpush.bf16.msra.mxu0 %v990
      %1022 = vmatmul.bf16.gmra.mxu0 %v994
      %v1023 = vpop.f32.mrf.mxu0
      %v1024 = vadd.f32 0.0, %v1023
      %v1025 = vpop.f32.mrf.mxu0
      %v1026 = vadd.f32 0.0, %v1025
      %1027 = vmatmul.bf16.gmra.mxu0 %v996
      %v1028 = vpop.f32.mrf.mxu0
      %v1029 = vadd.f32 0.0, %v1028
      %v1030 = vpop.f32.mrf.mxu0
      %v1031 = vadd.f32 0.0, %v1030
      %1032 = vmatmul.bf16.gmra.mxu0 %v998
      %v1033 = vpop.f32.mrf.mxu0
      %v1034 = vadd.f32 0.0, %v1033
      %v1035 = vpop.f32.mrf.mxu0
      %v1036 = vadd.f32 0.0, %v1035
      %1037 = vmatmul.bf16.gmra.mxu0 %v1000
      %v1038 = vpop.f32.mrf.mxu0
      %v1039 = vadd.f32 0.0, %v1038
      %v1040 = vpop.f32.mrf.mxu0
      %v1041 = vadd.f32 0.0, %v1040
      %1042 = vmatmul.bf16.gmra.mxu0 %v1002
      %v1043 = vpop.f32.mrf.mxu0
      %v1044 = vadd.f32 0.0, %v1043
      %v1045 = vpop.f32.mrf.mxu0
      %v1046 = vadd.f32 0.0, %v1045
      %1047 = vmatmul.bf16.gmra.mxu0 %v1004
      %v1048 = vpop.f32.mrf.mxu0
      %v1049 = vadd.f32 0.0, %v1048
      %v1050 = vpop.f32.mrf.mxu0
      %v1051 = vadd.f32 0.0, %v1050
      %1052 = vmatmul.bf16.gmra.mxu0 %v1006
      %v1053 = vpop.f32.mrf.mxu0
      %v1054 = vadd.f32 0.0, %v1053
      %v1055 = vpop.f32.mrf.mxu0
      %v1056 = vadd.f32 0.0, %v1055
      %1057 = vmatmul.bf16.gmra.mxu0 %v1008
      %v1058 = vpop.f32.mrf.mxu0
      %v1059 = vadd.f32 0.0, %v1058
      %v1060 = vpop.f32.mrf.mxu0
      %v1061 = vadd.f32 0.0, %v1060
      %1062 = vdwg.mxu0
      %v1066 = vunpack.c.l.b16 %v977
      %v1067 = vunpack.c.l.b16 %v978
      %v1068 = vunpack.c.l.b16 %v979
      %v1069 = vpack.c.b16 %v1067, %v1066
      %v1070 = vpack.c.b16 %v1068, %v1068
      %v1072 = vsel %vm993, %v958, 0
      %v1075 = vsel %vm1010, %v1070, 0
      %1077 = vmatpush.bf16.msra.mxu0 0
      %1078 = vmatpush.bf16.msra.mxu0 0
      %1079 = vmatpush.bf16.msra.mxu0 0
      %1080 = vmatpush.bf16.msra.mxu0 0
      %1081 = vmatpush.bf16.msra.mxu0 0
      %1082 = vmatpush.bf16.msra.mxu0 0
      %1083 = vmatpush.bf16.msra.mxu0 %v1075
      %1084 = vmatpush.bf16.msra.mxu0 %v1069
      %1085 = vmatmul.bf16.gmra.mxu0 %v1072
      %v1086 = vpop.f32.mrf.mxu0
      %v1087 = vadd.f32 %v1024, %v1086
      %v1088 = vpop.f32.mrf.mxu0
      %v1089 = vadd.f32 %v1026, %v1088
      %1090 = vmatmul.bf16.gmra.mxu0 %v994
      %v1091 = vpop.f32.mrf.mxu0
      %v1092 = vadd.f32 %v1029, %v1091
      %v1093 = vpop.f32.mrf.mxu0
      %v1094 = vadd.f32 %v1031, %v1093
      %1095 = vmatmul.bf16.gmra.mxu0 %v996
      %v1096 = vpop.f32.mrf.mxu0
      %v1097 = vadd.f32 %v1034, %v1096
      %v1098 = vpop.f32.mrf.mxu0
      %v1099 = vadd.f32 %v1036, %v1098
      %1100 = vmatmul.bf16.gmra.mxu0 %v998
      %v1101 = vpop.f32.mrf.mxu0
      %v1102 = vadd.f32 %v1039, %v1101
      %v1103 = vpop.f32.mrf.mxu0
      %v1104 = vadd.f32 %v1041, %v1103
      %1105 = vmatmul.bf16.gmra.mxu0 %v1000
      %v1106 = vpop.f32.mrf.mxu0
      %v1107 = vadd.f32 %v1044, %v1106
      %v1108 = vpop.f32.mrf.mxu0
      %v1109 = vadd.f32 %v1046, %v1108
      %1110 = vmatmul.bf16.gmra.mxu0 %v1002
      %v1111 = vpop.f32.mrf.mxu0
      %v1112 = vadd.f32 %v1049, %v1111
      %v1113 = vpop.f32.mrf.mxu0
      %v1114 = vadd.f32 %v1051, %v1113
      %1115 = vmatmul.bf16.gmra.mxu0 %v1004
      %v1116 = vpop.f32.mrf.mxu0
      %v1117 = vadd.f32 %v1054, %v1116
      %v1118 = vpop.f32.mrf.mxu0
      %v1119 = vadd.f32 %v1056, %v1118
      %1120 = vmatmul.bf16.gmra.mxu0 %v1006
      %v1121 = vpop.f32.mrf.mxu0
      %v1122 = vadd.f32 %v1059, %v1121
      %v1123 = vpop.f32.mrf.mxu0
      %v1124 = vadd.f32 %v1061, %v1123
      %1125 = vdwg.mxu0
      %s1126 = scalar_lea.vmem %s4, 24
      %v1127 = vld [vmem:[%s1126] sm:$0xf]
      %v1128 = vld [vmem:[%s1126 + $0x4] sm:$0xf]
      %v1129 = vld [vmem:[%s1126 + $0x8] sm:$0xf]
      %v1133 = vunpack.c.l.b16 %v1127
      %v1134 = vunpack.c.l.b16 %v1128
      %v1135 = vunpack.c.l.b16 %v1129
      %v1136 = vpack.c.b16 %v1134, %v1133
      %v1137 = vpack.c.b16 %v1135, %v1135
      %v1139 = vsel %vm993, %v976, 0
      %v1142 = vsel %vm1010, %v1137, 0
      %1144 = vmatpush.bf16.msra.mxu0 0
      %1145 = vmatpush.bf16.msra.mxu0 0
      %1146 = vmatpush.bf16.msra.mxu0 0
      %1147 = vmatpush.bf16.msra.mxu0 0
      %1148 = vmatpush.bf16.msra.mxu0 0
      %1149 = vmatpush.bf16.msra.mxu0 0
      %1150 = vmatpush.bf16.msra.mxu0 %v1142
      %1151 = vmatpush.bf16.msra.mxu0 %v1136
      %1152 = vmatmul.bf16.gmra.mxu0 %v996
      %v1153 = vpop.f32.mrf.mxu0
      %v1154 = vadd.f32 0.0, %v1153
      %v1155 = vpop.f32.mrf.mxu0
      %v1156 = vadd.f32 0.0, %v1155
      %1157 = vmatmul.bf16.gmra.mxu0 %v998
      %v1158 = vpop.f32.mrf.mxu0
      %v1159 = vadd.f32 0.0, %v1158
      %v1160 = vpop.f32.mrf.mxu0
      %v1161 = vadd.f32 0.0, %v1160
      %1162 = vmatmul.bf16.gmra.mxu0 %v1000
      %v1163 = vpop.f32.mrf.mxu0
      %v1164 = vadd.f32 0.0, %v1163
      %v1165 = vpop.f32.mrf.mxu0
      %v1166 = vadd.f32 0.0, %v1165
      %1167 = vmatmul.bf16.gmra.mxu0 %v1002
      %v1168 = vpop.f32.mrf.mxu0
      %v1169 = vadd.f32 0.0, %v1168
      %v1170 = vpop.f32.mrf.mxu0
      %v1171 = vadd.f32 0.0, %v1170
      %1172 = vmatmul.bf16.gmra.mxu0 %v1004
      %v1173 = vpop.f32.mrf.mxu0
      %v1174 = vadd.f32 0.0, %v1173
      %v1175 = vpop.f32.mrf.mxu0
      %v1176 = vadd.f32 0.0, %v1175
      %1177 = vmatmul.bf16.gmra.mxu0 %v1006
      %v1178 = vpop.f32.mrf.mxu0
      %v1179 = vadd.f32 0.0, %v1178
      %v1180 = vpop.f32.mrf.mxu0
      %v1181 = vadd.f32 0.0, %v1180
      %1182 = vmatmul.bf16.gmra.mxu0 %v1008
      %v1183 = vpop.f32.mrf.mxu0
      %v1184 = vadd.f32 0.0, %v1183
      %v1185 = vpop.f32.mrf.mxu0
      %v1186 = vadd.f32 0.0, %v1185
      %1187 = vmatmul.bf16.gmra.mxu0 %v1139
      %v1188 = vpop.f32.mrf.mxu0
      %v1189 = vadd.f32 0.0, %v1188
      %v1190 = vpop.f32.mrf.mxu0
      %v1191 = vadd.f32 0.0, %v1190
      %1192 = vdwg.mxu0
      %v1193 = vadd.f32 %v1087, %v1154
      %v1194 = vadd.f32 %v1089, %v1156
      %v1195 = vadd.f32 %v1092, %v1159
      %v1196 = vadd.f32 %v1094, %v1161
      %v1197 = vadd.f32 %v1097, %v1164
      %v1198 = vadd.f32 %v1099, %v1166
      %v1199 = vadd.f32 %v1102, %v1169
      %v1200 = vadd.f32 %v1104, %v1171
      %v1201 = vadd.f32 %v1107, %v1174
      %v1202 = vadd.f32 %v1109, %v1176
      %v1203 = vadd.f32 %v1112, %v1179
      %v1204 = vadd.f32 %v1114, %v1181
      %v1205 = vadd.f32 %v1117, %v1184
      %v1206 = vadd.f32 %v1119, %v1186
      %v1207 = vadd.f32 %v1122, %v1189
      %v1208 = vadd.f32 %v1124, %v1191
      %v1209 = vpack.c.bf16 %v1193, %v1193
      %v1210 = vpack.c.bf16 %v1194, %v1194
      %v1211 = vpack.c.bf16 %v1195, %v1195
      %v1212 = vpack.c.bf16 %v1196, %v1196
      %v1213 = vpack.c.bf16 %v1197, %v1197
      %v1214 = vpack.c.bf16 %v1198, %v1198
      %v1215 = vpack.c.bf16 %v1199, %v1199
      %v1216 = vpack.c.bf16 %v1200, %v1200
      %v1217 = vpack.c.bf16 %v1201, %v1201
      %v1218 = vpack.c.bf16 %v1202, %v1202
      %v1219 = vpack.c.bf16 %v1203, %v1203
      %v1220 = vpack.c.bf16 %v1204, %v1204
      %v1221 = vpack.c.bf16 %v1205, %v1205
      %v1222 = vpack.c.bf16 %v1206, %v1206
      %v1223 = vpack.c.bf16 %v1207, %v1207
      %v1224 = vpack.c.bf16 %v1208, %v1208
      %vm1225 = vcmask 60416
      %1226 = vst.msk [vmem:[%s431] sm:$0xf] %vm1225, %v1209
      %1227 = vst.msk [vmem:[%s431 + $0x4] sm:$0xf] %vm1225, %v1210
      %1228 = vst.msk [vmem:[%s431 + $0x8] sm:$0xf] %vm1225, %v1211
      %1229 = vst.msk [vmem:[%s431 + $0xc] sm:$0xf] %vm1225, %v1212
      %1230 = vst.msk [vmem:[%s431 + $0x10] sm:$0xf] %vm1225, %v1213
      %1231 = vst.msk [vmem:[%s431 + $0x14] sm:$0xf] %vm1225, %v1214
      %1232 = vst.msk [vmem:[%s431 + $0x18] sm:$0xf] %vm1225, %v1215
      %1233 = vst.msk [vmem:[%s431 + $0x1c] sm:$0xf] %vm1225, %v1216
      %1234 = vst.msk [vmem:[%s431 + $0x20] sm:$0xf] %vm1225, %v1217
      %1235 = vst.msk [vmem:[%s431 + $0x24] sm:$0xf] %vm1225, %v1218
      %1236 = vst.msk [vmem:[%s431 + $0x28] sm:$0xf] %vm1225, %v1219
      %1237 = vst.msk [vmem:[%s431 + $0x2c] sm:$0xf] %vm1225, %v1220
      %1238 = vst.msk [vmem:[%s431 + $0x30] sm:$0xf] %vm1225, %v1221
      %1239 = vst.msk [vmem:[%s431 + $0x34] sm:$0xf] %vm1225, %v1222
      %1240 = vst.msk [vmem:[%s431 + $0x38] sm:$0xf] %vm1225, %v1223
      %1241 = vst.msk [vmem:[%s431 + $0x3c] sm:$0xf] %vm1225, %v1224
      %v1242 = vsel %vm925, %v1193, 0.0
      %v1243 = vsel %vm925, %v1194, 0.0
      %v1244 = vadd.f32 %v1242, %v1243
      %v1245 = vsel %vm925, %v1195, 0.0
      %v1246 = vadd.f32 %v1244, %v1245
      %v1247 = vsel %vm925, %v1196, 0.0
      %v1248 = vadd.f32 %v1246, %v1247
      %v1249 = vsel %vm925, %v1197, 0.0
      %v1250 = vadd.f32 %v1248, %v1249
      %v1251 = vsel %vm925, %v1198, 0.0
      %v1252 = vadd.f32 %v1250, %v1251
      %v1253 = vsel %vm925, %v1199, 0.0
      %v1254 = vadd.f32 %v1252, %v1253
      %v1255 = vsel %vm925, %v1200, 0.0
      %v1256 = vadd.f32 %v1254, %v1255
      %v1257 = vsel %vm925, %v1201, 0.0
      %v1258 = vadd.f32 %v1256, %v1257
      %v1259 = vsel %vm925, %v1202, 0.0
      %v1260 = vadd.f32 %v1258, %v1259
      %v1261 = vsel %vm925, %v1203, 0.0
      %v1262 = vadd.f32 %v1260, %v1261
      %v1263 = vsel %vm925, %v1204, 0.0
      %v1264 = vadd.f32 %v1262, %v1263
      %v1265 = vsel %vm925, %v1205, 0.0
      %v1266 = vadd.f32 %v1264, %v1265
      %v1267 = vsel %vm925, %v1206, 0.0
      %v1268 = vadd.f32 %v1266, %v1267
      %v1269 = vsel %vm925, %v1207, 0.0
      %v1270 = vadd.f32 %v1268, %v1269
      %v1271 = vsel %vm925, %v1208, 0.0
      %v1272 = vadd.f32 %v1270, %v1271
      %v1273 = vrot.slane %v1272, 4
      %v1274 = vadd.f32 %v1272, %v1273
      %v1275 = vrot.slane %v1274, 2
      %v1276 = vadd.f32 %v1274, %v1275
      %v1277 = vrot.slane %v1276, 1
      %v1278 = vadd.f32 %v1276, %v1277
      %v1279 = vmul.f32 %v1193, %v1193
      %v1280 = vmul.f32 %v1194, %v1194
      %v1281 = vmul.f32 %v1195, %v1195
      %v1282 = vmul.f32 %v1196, %v1196
      %v1283 = vmul.f32 %v1197, %v1197
      %v1284 = vmul.f32 %v1198, %v1198
      %v1285 = vmul.f32 %v1199, %v1199
      %v1286 = vmul.f32 %v1200, %v1200
      %v1287 = vmul.f32 %v1201, %v1201
      %v1288 = vmul.f32 %v1202, %v1202
      %v1289 = vmul.f32 %v1203, %v1203
      %v1290 = vmul.f32 %v1204, %v1204
      %v1291 = vmul.f32 %v1205, %v1205
      %v1292 = vmul.f32 %v1206, %v1206
      %v1293 = vmul.f32 %v1207, %v1207
      %v1294 = vmul.f32 %v1208, %v1208
      %v1295 = vsel %vm925, %v1279, 0.0
      %v1296 = vsel %vm925, %v1280, 0.0
      %v1297 = vadd.f32 %v1295, %v1296
      %v1298 = vsel %vm925, %v1281, 0.0
      %v1299 = vadd.f32 %v1297, %v1298
      %v1300 = vsel %vm925, %v1282, 0.0
      %v1301 = vadd.f32 %v1299, %v1300
      %v1302 = vsel %vm925, %v1283, 0.0
      %v1303 = vadd.f32 %v1301, %v1302
      %v1304 = vsel %vm925, %v1284, 0.0
      %v1305 = vadd.f32 %v1303, %v1304
      %v1306 = vsel %vm925, %v1285, 0.0
      %v1307 = vadd.f32 %v1305, %v1306
      %v1308 = vsel %vm925, %v1286, 0.0
      %v1309 = vadd.f32 %v1307, %v1308
      %v1310 = vsel %vm925, %v1287, 0.0
      %v1311 = vadd.f32 %v1309, %v1310
      %v1312 = vsel %vm925, %v1288, 0.0
      %v1313 = vadd.f32 %v1311, %v1312
      %v1314 = vsel %vm925, %v1289, 0.0
      %v1315 = vadd.f32 %v1313, %v1314
      %v1316 = vsel %vm925, %v1290, 0.0
      %v1317 = vadd.f32 %v1315, %v1316
      %v1318 = vsel %vm925, %v1291, 0.0
      %v1319 = vadd.f32 %v1317, %v1318
      %v1320 = vsel %vm925, %v1292, 0.0
      %v1321 = vadd.f32 %v1319, %v1320
      %v1322 = vsel %vm925, %v1293, 0.0
      %v1323 = vadd.f32 %v1321, %v1322
      %v1324 = vsel %vm925, %v1294, 0.0
      %v1325 = vadd.f32 %v1323, %v1324
      %v1326 = vrot.slane %v1325, 4
      %v1327 = vadd.f32 %v1325, %v1326
      %v1328 = vrot.slane %v1327, 2
      %v1329 = vadd.f32 %v1327, %v1328
      %v1330 = vrot.slane %v1329, 1
      %v1331 = vadd.f32 %v1329, %v1330
      %vm1332 = vcmask 1040384
      %v1333 = vsel %vm1332, %v1278, %v1331
      %vm1334 = vcmask 58368
      %1335 = vst.msk [vmem:[%s440] sm:$0x3] %vm1334, %v1333
      %s1336 = smul.u32 8, %s23
      %p1337 = scmp.lt.s32.totalorder %s22, 1
      %s1338 = scalar_select %p1337, %s22, 1
      %p1339 = scmp.lt.s32.totalorder %s1336, 15
      %s1340 = scalar_select %p1339, %s1336, 15
      %s1341 = smul.addr %s1340, 2
      %s1342 = smul.addr %s1338, 32
      %s1343 = sadd.s32 %s1341, %s1342
      %s1344 = smul.addr %s1343, 4
      %s1345 = scalar_lea.vmem %s5, %s1344
      %p1346 = scmp.lt.s32.totalorder %s22, 1
      %s1347 = scalar_select %p1346, %s22, 1
      %p1348 = scmp.lt.s32.totalorder %s23, 1
      %s1349 = scalar_select %p1348, %s23, 1
      %s1350 = smul.addr %s1347, 2
      %s1351 = sadd.s32 %s1349, %s1350
      %s1352 = smul.addr %s1351, 2
      %s1353 = scalar_lea.vmem %s6, %s1352
      // Predicated region
      $region41: #{conv_block_forward.4} parent=39 // pred_check
        %p1354 = pneg %p192
      $region42: #{conv_block_forward.4} parent=39 // pred_check_branch
        %1356 = sbr.rel (%p1354) target = $region44
      $region43: #{conv_block_forward.4} parent=39 // pred_region
        %s1357 = smul.u32 8, %s23
      $region44: #{conv_block_forward.4} parent=39 // pred_fallthru
        _
      // Predicated region
      $region45: #{conv_block_forward.4} parent=39 // pred_check
        %p1358 = pneg %p220
      $region46: #{conv_block_forward.4} parent=39 // pred_check_branch
        %1360 = sbr.rel (%p1358) target = $region48
      $region47: #{conv_block_forward.4} parent=39 // pred_region
        _
      $region48: #{conv_block_forward.4} parent=39 // pred_fallthru
        _
    $region40: #{conv_block_forward.4} parent=5 // pred_fallthru
      _
    %p1361 = scmp.le.s32.totalorder 2, %s13
    // Predicated region
    $region49: #{conv_block_forward.4} parent=5 // pred_check
      %p1362 = pneg %p1361
    $region50: #{conv_block_forward.4} parent=5 // pred_check_branch
      %1364 = sbr.rel (%p1362) target = $region52
    $region51: #{conv_block_forward.4} parent=5 // pred_region
      %s1365 = ssub.s32 %s13, 2
      // Predicated region
      $region53: #{conv_block_forward.4} parent=51 // pred_check
        %p1366 = pneg %p198
      $region54: #{conv_block_forward.4} parent=51 // pred_check_branch
        %1368 = sbr.rel (%p1366) target = $region56
      $region55: #{conv_block_forward.4} parent=51 // pred_region
        %s1369 = smul.u32 8, %s25
        %p1370 = scmp.lt.s32.totalorder %s24, 1
        %s1371 = scalar_select %p1370, %s24, 1
        %p1372 = scmp.lt.s32.totalorder %s1369, 15
        %s1373 = scalar_select %p1372, %s1369, 15
        %s1374 = smul.addr %s1373, 2
        %s1375 = smul.addr %s1371, 32
        %s1376 = sadd.s32 %s1374, %s1375
        %s1377 = smul.addr %s1376, 4
        %s1378 = scalar_lea.vmem %s5, %s1377
      $region56: #{conv_block_forward.4} parent=51 // pred_fallthru
        _
      // Predicated region
      $region57: #{conv_block_forward.4} parent=51 // pred_check
        %p1379 = pneg %p226
      $region58: #{conv_block_forward.4} parent=51 // pred_check_branch
        %1381 = sbr.rel (%p1379) target = $region60
      $region59: #{conv_block_forward.4} parent=51 // pred_region
        %p1382 = scmp.lt.s32.totalorder %s24, 1
        %s1383 = scalar_select %p1382, %s24, 1
        %p1384 = scmp.lt.s32.totalorder %s25, 1
        %s1385 = scalar_select %p1384, %s25, 1
        %s1386 = smul.addr %s1383, 2
        %s1387 = sadd.s32 %s1385, %s1386
        %s1388 = smul.addr %s1387, 2
        %s1389 = scalar_lea.vmem %s6, %s1388
      $region60: #{conv_block_forward.4} parent=51 // pred_fallthru
        _
    $region52: #{conv_block_forward.4} parent=5 // pred_fallthru
      _
  $region6: #{conv_block_forward.4} parent=0 // loop_footer
    %s17 = sadd.s32 1, %s13
  $region7: #{conv_block_forward.4} parent=0 // loop_footer_branch
    %12 = sbr.rel target = $region3
  $region8: #{conv_block_forward.4} parent=0 // loop_exit
    _

</llo_original>
